<compile_context>
chip_gen: v7x
topology: tpu7x:2x2x1
jax: 0.10.0
libtpu: 0.0.40
codegen_flags: <defaults>
</compile_context>

<pallas_src>
import functools

import jax
import jax.numpy as jnp
from jax import lax
from jax.experimental import pallas as pl
from jax.experimental.pallas import tpu as pltpu


def _vmem_limit_bytes():
    cap = 64 * 1024 * 1024
    try:
        info = pltpu.get_tpu_info()
        cap = int(getattr(info, "vmem_capacity_bytes", cap))
    except Exception:
        pass
    # ~3/4 of physical VMEM, capped: ~48 MiB on v7x (64 MiB), ~96 MiB on v5e/v6e (128 MiB)
    return int(min(cap * 3 // 4, 100 * 1024 * 1024))


_VMEM_LIMIT = _vmem_limit_bytes()


def _cparams(*sem):
    return pltpu.CompilerParams(dimension_semantics=sem,
                                vmem_limit_bytes=_VMEM_LIMIT)


def _pixel_tile(hw, cf):
    # keep the (cf, tp) f32 FF intermediate modest on 64 MiB parts
    tmax = 256 if cf >= 512 else 512
    return hw if hw <= tmax else tmax


# ----------------------------- Pallas kernels -------------------------------

def _spectral_kernel(xr_ref, xi_ref, er_ref, ei_ref, w_ref, o_ref):
    """Per-mode complex contraction with in-kernel modulation.

    xr/xi: (1, Md, ta, I) real/imag FFT coeffs; er/ei: (1, Md, 1, I) conditioning
    (constant along lanes); w: (Md, 2I, 2O) real block [[wr, wi], [-wi, wr]].
    Output: (1, Md, ta, 2O) packed [Re | Im].  Everything f32 (spectral precision).
    """
    er = er_ref[0]                                    # (Md, 1, I)
    ei = ei_ref[0]
    xr = xr_ref[0]                                    # (Md, ta, I)
    xi = xi_ref[0]
    xmr = er * xr - ei * xi                           # emb * x  (complex), fused in-kernel
    xmi = er * xi + ei * xr
    x2 = jnp.concatenate([xmr, xmi], axis=-1)         # (Md, ta, 2I)
    o_ref[0] = lax.dot_general(                       # batched over modes, one MXU op
        x2, w_ref[...],
        dimension_numbers=(((2,), (1,)), ((0,), (0,))),
        preferred_element_type=jnp.float32)           # (Md, ta, 2O) = [Re | Im]


def _ff_res_kernel(xf_ref, x_ref, dte_ref, w0t_ref, b0_ref, w1t_ref, b1_ref, ox_ref):
    """Intermediate layer: x_new = x + dte * FF(xf), channels-first pixel tile.

    No backcast writeback (it is dead for all but the last layer)."""
    h = jnp.dot(w0t_ref[...], xf_ref[0].astype(jnp.bfloat16),
                preferred_element_type=jnp.float32)          # (Cf, tp)
    h = jnp.maximum(h + b0_ref[...], 0.0)
    y = jnp.dot(w1t_ref[...], h.astype(jnp.bfloat16),
                preferred_element_type=jnp.float32)          # (C, tp)
    y = (y + b1_ref[...]) * dte_ref[0]                       # dt-embedding scale
    ox_ref[0] = x_ref[0] + y                                 # residual (f32)


def _ff_head_kernel(xf_ref, dte_ref, w0t_ref, b0_ref, w1t_ref, b1_ref,
                    h1t_ref, h1b_ref, h2t_ref, h2b_ref, o_ref):
    """Last layer: FF + dt-scale + 2-layer output head fused; b never hits HBM."""
    h = jnp.dot(w0t_ref[...], xf_ref[0].astype(jnp.bfloat16),
                preferred_element_type=jnp.float32)          # (Cf, tp)
    h = jnp.maximum(h + b0_ref[...], 0.0)
    bb = jnp.dot(w1t_ref[...], h.astype(jnp.bfloat16),
                 preferred_element_type=jnp.float32)         # (C, tp)
    bb = (bb + b1_ref[...]) * dte_ref[0]
    # output head in f32 (precision): WNLinear(C,128) -> WNLinear(128,Od)
    g = jnp.dot(h1t_ref[...], bb, preferred_element_type=jnp.float32) + h1b_ref[...]
    o_ref[0] = jnp.dot(h2t_ref[...], g, preferred_element_type=jnp.float32) + h2b_ref[...]


# ------------------------------ Pallas wrappers ------------------------------

def pallas_spectral_contract(x_ft_m, er, ei, wblk):
    """out[b,o,a,m] = sum_i (er+i*ei)[b,m] * x_ft_m[b,i,a,m] * W[i,o,m]   (complex).

    x_ft_m: (B, I, A, Md) complex64; er/ei: (B, Md) f32; wblk: (Md, 2I, 2O) f32.
    Returns (B, O, A, Md) complex64.
    """
    B, I, A, Md = x_ft_m.shape
    O2 = wblk.shape[-1]
    O = O2 // 2
    xt = jnp.transpose(x_ft_m, (0, 3, 2, 1))          # (B, Md, A, I)
    xr = jnp.real(xt)
    xi = jnp.imag(xt)
    er_b = jnp.broadcast_to(er[:, :, None, None], (B, Md, 1, I)).astype(jnp.float32)
    ei_b = jnp.broadcast_to(ei[:, :, None, None], (B, Md, 1, I)).astype(jnp.float32)
    ta = A if A <= 256 else 256
    out = pl.pallas_call(
        _spectral_kernel,
        out_shape=jax.ShapeDtypeStruct((B, Md, A, O2), jnp.float32),
        grid=(B, pl.cdiv(A, ta)),
        in_specs=[
            pl.BlockSpec((1, Md, ta, I), lambda b, a: (b, 0, a, 0)),
            pl.BlockSpec((1, Md, ta, I), lambda b, a: (b, 0, a, 0)),
            pl.BlockSpec((1, Md, 1, I), lambda b, a: (b, 0, 0, 0)),
            pl.BlockSpec((1, Md, 1, I), lambda b, a: (b, 0, 0, 0)),
            pl.BlockSpec((Md, 2 * I, O2), lambda b, a: (0, 0, 0)),
        ],
        out_specs=pl.BlockSpec((1, Md, ta, O2), lambda b, a: (b, 0, a, 0)),
        compiler_params=_cparams("parallel", "parallel"),
    )(xr, xi, er_b, ei_b, wblk)
    o_c = out[..., :O] + 1j * out[..., O:]            # (B, Md, A, O) complex64
    return jnp.transpose(o_c, (0, 3, 2, 1))           # (B, O, A, Md)


def pallas_ff_residual(xf, x, dte, p):
    """x_new = x + dte * FF(xf).  All tensors channels-first (B, C, H, W)."""
    B, C, H, W = xf.shape
    HW = H * W
    Cf = p["ff0_wt"].shape[0]
    tp = _pixel_tile(HW, Cf)
    out = pl.pallas_call(
        _ff_res_kernel,
        out_shape=jax.ShapeDtypeStruct((B, C, HW), jnp.float32),
        grid=(B, pl.cdiv(HW, tp)),
        in_specs=[
            pl.BlockSpec((1, C, tp), lambda b, i: (b, 0, i)),
            pl.BlockSpec((1, C, tp), lambda b, i: (b, 0, i)),
            pl.BlockSpec((1, C, 1), lambda b, i: (b, 0, 0)),
            pl.BlockSpec((Cf, C), lambda b, i: (0, 0)),
            pl.BlockSpec((Cf, 1), lambda b, i: (0, 0)),
            pl.BlockSpec((C, Cf), lambda b, i: (0, 0)),
            pl.BlockSpec((C, 1), lambda b, i: (0, 0)),
        ],
        out_specs=pl.BlockSpec((1, C, tp), lambda b, i: (b, 0, i)),
        compiler_params=_cparams("parallel", "parallel"),
    )(xf.reshape(B, C, HW), x.reshape(B, C, HW), dte,
      p["ff0_wt"], p["ff0_b"], p["ff1_wt"], p["ff1_b"])
    return out.reshape(B, C, H, W)


def pallas_ff_head(xf, dte, p, pp):
    """Last layer + head: out = W2(W1(dte * FF(xf)) + b1) + b2, channels-first."""
    B, C, H, W = xf.shape
    HW = H * W
    Cf = p["ff0_wt"].shape[0]
    Ch = pp["out1_wt"].shape[0]
    Od = pp["out2_wt"].shape[0]
    tp = _pixel_tile(HW, Cf)
    out = pl.pallas_call(
        _ff_head_kernel,
        out_shape=jax.ShapeDtypeStruct((B, Od, HW), jnp.float32),
        grid=(B, pl.cdiv(HW, tp)),
        in_specs=[
            pl.BlockSpec((1, C, tp), lambda b, i: (b, 0, i)),
            pl.BlockSpec((1, C, 1), lambda b, i: (b, 0, 0)),
            pl.BlockSpec((Cf, C), lambda b, i: (0, 0)),
            pl.BlockSpec((Cf, 1), lambda b, i: (0, 0)),
            pl.BlockSpec((C, Cf), lambda b, i: (0, 0)),
            pl.BlockSpec((C, 1), lambda b, i: (0, 0)),
            pl.BlockSpec((Ch, C), lambda b, i: (0, 0)),
            pl.BlockSpec((Ch, 1), lambda b, i: (0, 0)),
            pl.BlockSpec((Od, Ch), lambda b, i: (0, 0)),
            pl.BlockSpec((Od, 1), lambda b, i: (0, 0)),
        ],
        out_specs=pl.BlockSpec((1, Od, tp), lambda b, i: (b, 0, i)),
        compiler_params=_cparams("parallel", "parallel"),
    )(xf.reshape(B, C, HW), dte,
      p["ff0_wt"], p["ff0_b"], p["ff1_wt"], p["ff1_b"],
      pp["out1_wt"], pp["out1_b"], pp["out2_wt"], pp["out2_b"])
    return out.reshape(B, Od, H, W)


# ------------------------------- model glue ---------------------------------

def forward_fourier(x, emb_vec, p, modes):
    """x: (B, I, H, W) channels-first.  Returns (B, O, H, W)."""
    B, I, M, N = x.shape
    # cond_emb: Linear -> GELU(erf) -> FreqLinear.  Tiny (B rows) — plain XLA.
    h = jax.nn.gelu(emb_vec @ p["cond_w"] + p["cond_b"], approximate=False)
    h = (h @ p["freq_w"] + p["freq_b"]).reshape(B, modes, 2, 2)
    ex_r, ex_i = h[:, :, 0, 0], h[:, :, 0, 1]     # modulates H-direction modes (embx)
    ey_r, ey_i = h[:, :, 1, 0], h[:, :, 1, 1]     # modulates W-direction modes (emby)

    # TODO(synk): rfft/irfft have no Pallas primitive; they remain XLA FFT ops.
    # ---- modes along the last axis (W) ----
    x_fty = jnp.fft.rfft(x, axis=-1, norm="ortho")[..., :modes]           # (B,I,M,md)
    oy = pallas_spectral_contract(x_fty, ey_r, ey_i, p["w0blk"])          # (B,O,M,md)
    oy = jnp.pad(oy, ((0, 0), (0, 0), (0, 0), (0, N // 2 + 1 - modes)))
    xy = jnp.fft.irfft(oy, n=N, axis=-1, norm="ortho")                    # (B,O,M,N)

    # ---- modes along the H axis: transpose once so FFT + contraction both run on
    #      the minor-most axis (same mode-last path as above) ----
    xt = jnp.transpose(x, (0, 1, 3, 2))                                   # (B,I,N,M)
    x_ftx = jnp.fft.rfft(xt, axis=-1, norm="ortho")[..., :modes]          # (B,I,N,md)
    ox = pallas_spectral_contract(x_ftx, ex_r, ex_i, p["w1blk"])          # (B,O,N,md)
    ox = jnp.pad(ox, ((0, 0), (0, 0), (0, 0), (0, M // 2 + 1 - modes)))
    xx = jnp.fft.irfft(ox, n=M, axis=-1, norm="ortho")                    # (B,O,N,M)
    xx = jnp.transpose(xx, (0, 1, 3, 2))                                  # (B,O,M,N)
    return xx + xy


def fno_block(pp, feat, dt_col, emb_vec, modes, n_layers):
    """FNOFactorized2DBlock.forward (channels-first)."""
    # in-projection: contraction depth = input_dim (~6) — plain XLA, not worth a kernel.
    x = jnp.einsum("bihw,io->bohw", feat, pp["in_w"]) + pp["in_b"][None, :, None, None]
    for l in range(n_layers - 1):
        p = pp["layers"][l]
        xf = forward_fourier(x, emb_vec, p, modes)
        dte = (dt_col @ p["dt_w"] + p["dt_b"])[:, :, None]                # (B, C, 1)
        x = pallas_ff_residual(xf, x, dte, p)     # x <- x + dte*FF(xf); dead b dropped
    p = pp["layers"][n_layers - 1]
    xf = forward_fourier(x, emb_vec, p, modes)
    dte = (dt_col @ p["dt_w"] + p["dt_b"])[:, :, None]
    # last layer: FF + dt-scale + output head fused (only the last b feeds the head).
    return pallas_ff_head(xf, dte, p, pp)                                 # (B, Od, H, W)


def ffno_forward(pp, x, dt, z, *, modes, n_layers, low=0.0, high=1.0):
    """FFNO.forward.  x: (B, time_history, n_fields, H, W), dt: (B,), z: (B, n_params)."""
    B, T, F, H, W = x.shape
    xc = x.reshape(B, T * F, H, W)                                        # channels-first

    # positional features (non-fourier), normalized with mean / unbiased std
    gy = jnp.linspace(low, high, H)
    gx = jnp.linspace(low, high, W)
    pos = jnp.stack(jnp.meshgrid(gy, gx, indexing="ij"), axis=-1)         # (H, W, 2)
    pf = pos.reshape(-1, 2)
    pos = (pos - pf.mean(axis=0)) / pf.std(axis=0, ddof=1)
    pos_b = jnp.broadcast_to(jnp.transpose(pos, (2, 0, 1))[None], (B, 2, H, W))
    feat = jnp.concatenate([xc, pos_b], axis=1)                           # (B, Cin, H, W)

    # identity embeddings (sinusoidal_embedding=False): emb = cat([dt, z1, z2], dim=1)
    emb_vec = jnp.concatenate([dt[:, None], z], axis=1)                   # (B, 1+n_params)
    dt_col = dt[:, None]                                                  # (B, 1)

    im = fno_block(pp, feat, dt_col, emb_vec, modes, n_layers)            # (B, Od, H, W)
    return im[:, None]                                                    # (B,1,Od,H,W)


# ------------------------- parameter init / preprocessing --------------------

def init_params(key, *, input_dim, width, modes, cond_dim, output_dim,
                n_layers, factor):
    keys = iter(jax.random.split(key, 8 + 16 * n_layers))

    def lin(in_d, out_d):
        lim = 1.0 / float(in_d) ** 0.5
        w = jax.random.uniform(next(keys), (in_d, out_d), jnp.float32, -lim, lim)
        b = jax.random.uniform(next(keys), (out_d,), jnp.float32, -lim, lim)
        return w, b

    params = {}
    params["in_w"], params["in_b"] = lin(input_dim, width)
    layers = []
    for _ in range(n_layers):
        p = {}
        p["cond_w"], p["cond_b"] = lin(cond_dim, 2 * width)
        # FreqLinear: weight = scale * randn, bias = 0
        scale = 1.0 / (2 * width + 4 * modes)
        p["freq_w"] = scale * jax.random.normal(next(keys), (2 * width, 4 * modes), jnp.float32)
        p["freq_b"] = jnp.zeros((4 * modes,), jnp.float32)
        # factorized Fourier weights (in, out, modes, 2), xavier-normal-ish
        std = (1.0 / (width * modes * 2.0)) ** 0.5
        p["fw0"] = std * jax.random.normal(next(keys), (width, width, modes, 2), jnp.float32)
        p["fw1"] = std * jax.random.normal(next(keys), (width, width, modes, 2), jnp.float32)
        p["ff0_w"], p["ff0_b"] = lin(width, width * factor)
        p["ff1_w"], p["ff1_b"] = lin(width * factor, width)
        p["dt_w"], p["dt_b"] = lin(1, width)
        layers.append(p)
    params["layers"] = layers
    params["out1_w"], params["out1_b"] = lin(width, 128)
    params["out2_w"], params["out2_b"] = lin(128, output_dim)
    return params


def _fourier_block(fw):
    """(I, O, modes, 2) -> (modes, 2I, 2O) real block [[wr, wi], [-wi, wr]] (f32)."""
    wr = jnp.transpose(fw[..., 0], (2, 0, 1))
    wi = jnp.transpose(fw[..., 1], (2, 0, 1))
    top = jnp.concatenate([wr, wi], axis=-1)
    bot = jnp.concatenate([-wi, wr], axis=-1)
    return jnp.concatenate([top, bot], axis=-2).astype(jnp.float32)


def prepare_params(params):
    """One-time weight preprocessing (transposes, block-complex form, bf16 casts)."""
    pp = {"in_w": params["in_w"], "in_b": params["in_b"]}
    layers = []
    for p in params["layers"]:
        q = {
            "cond_w": p["cond_w"], "cond_b": p["cond_b"],
            "freq_w": p["freq_w"], "freq_b": p["freq_b"],
            "dt_w": p["dt_w"], "dt_b": p["dt_b"],
            "w0blk": _fourier_block(p["fw0"]),          # f32, spectral precision
            "w1blk": _fourier_block(p["fw1"]),
            "ff0_wt": p["ff0_w"].T.astype(jnp.bfloat16),   # (Cf, C)
            "ff0_b": p["ff0_b"].reshape(-1, 1).astype(jnp.float32),
            "ff1_wt": p["ff1_w"].T.astype(jnp.bfloat16),   # (C, Cf)
            "ff1_b": p["ff1_b"].reshape(-1, 1).astype(jnp.float32),
        }
        layers.append(q)
    pp["layers"] = layers
    pp["out1_wt"] = params["out1_w"].T.astype(jnp.float32)     # (128, C)
    pp["out1_b"] = params["out1_b"].reshape(-1, 1).astype(jnp.float32)
    pp["out2_wt"] = params["out2_w"].T.astype(jnp.float32)     # (Od, 128)
    pp["out2_b"] = params["out2_b"].reshape(-1, 1).astype(jnp.float32)
    return pp


# --------------------------------- main --------------------------------------

if __name__ == "__main__":
    key = jax.random.PRNGKey(0)

    # small but consistent shapes
    B, T, F, H, W = 2, 1, 4, 16, 16           # batch, time_history, n_input_fields, H, W
    modes, width, n_layers = 4, 32, 2
    num_param_conditioning = 2
    input_dim = F * T + 2                     # + 2 positional channels (use_position=True)
    output_dim = F * T                        # n_output_fields * time_future
    cond_dim = 1 + num_param_conditioning     # dt + z params (identity embeds)

    kx, kdt, kz, kp = jax.random.split(key, 4)
    x = jax.random.normal(kx, (B, T, F, H, W), jnp.float32)
    dt = jax.random.uniform(kdt, (B,), jnp.float32, 0.01, 0.1)
    z = jax.random.normal(kz, (B, num_param_conditioning), jnp.float32)

    params = init_params(kp, input_dim=input_dim, width=width, modes=modes,
                         cond_dim=cond_dim, output_dim=output_dim,
                         n_layers=n_layers, factor=2)
    pp = prepare_params(params)               # hoisted weight preprocessing (runs once)

    fwd = jax.jit(functools.partial(ffno_forward, modes=modes, n_layers=n_layers))
    out = fwd(pp, x, dt, z)
    jax.block_until_ready(out)
    assert out.shape == (B, 1, output_dim, H, W), out.shape
    assert out.dtype == jnp.float32
    print("KERNEL_OK")
</pallas_src>

<mosaic_0001>
module attributes {stable_mosaic.version = 11 : i64} {
  func.func @_spectral_kernel(%arg0: i32, %arg1: i32, %arg2: memref<1x4x16x32xf32, #tpu.memory_space<vmem>>, %arg3: memref<1x4x16x32xf32, #tpu.memory_space<vmem>>, %arg4: memref<1x4x1x32xf32, #tpu.memory_space<vmem>>, %arg5: memref<1x4x1x32xf32, #tpu.memory_space<vmem>>, %arg6: memref<4x64x64xf32, #tpu.memory_space<vmem>>, %arg7: memref<1x4x16x64xf32, #tpu.memory_space<vmem>>) attributes {dimension_semantics = [#tpu.dimension_semantics<parallel>, #tpu.dimension_semantics<parallel>], iteration_bounds = array<i64: 2, 1>, scalar_prefetch = 0 : i64, scratch_operands = 0 : i64, tpu.core_type = #tpu.core_type<tc>, window_params = [{transform_indices = @transform_0, window_bounds = array<i64: 1, 4, 16, 32>}, {transform_indices = @transform_1, window_bounds = array<i64: 1, 4, 16, 32>}, {transform_indices = @transform_2, window_bounds = array<i64: 1, 4, 1, 32>}, {transform_indices = @transform_3, window_bounds = array<i64: 1, 4, 1, 32>}, {pipeline_mode = #tpu.pipeline_mode<synchronous>, transform_indices = @transform_4, window_bounds = array<i64: 4, 64, 64>}, {transform_indices = @transform_5, window_bounds = array<i64: 1, 4, 16, 64>}]} {
    %c0 = arith.constant 0 : index
    %c0_0 = arith.constant 0 : index
    %c0_1 = arith.constant 0 : index
    %c0_2 = arith.constant 0 : index
    %0 = vector.load %arg4[%c0, %c0_0, %c0_1, %c0_2] : memref<1x4x1x32xf32, #tpu.memory_space<vmem>>, vector<1x4x1x32xf32>
    %1 = vector.shape_cast %0 : vector<1x4x1x32xf32> to vector<4x1x32xf32>
    %c0_3 = arith.constant 0 : index
    %c0_4 = arith.constant 0 : index
    %c0_5 = arith.constant 0 : index
    %c0_6 = arith.constant 0 : index
    %2 = vector.load %arg5[%c0_3, %c0_4, %c0_5, %c0_6] : memref<1x4x1x32xf32, #tpu.memory_space<vmem>>, vector<1x4x1x32xf32>
    %3 = vector.shape_cast %2 : vector<1x4x1x32xf32> to vector<4x1x32xf32>
    %c0_7 = arith.constant 0 : index
    %c0_8 = arith.constant 0 : index
    %c0_9 = arith.constant 0 : index
    %c0_10 = arith.constant 0 : index
    %4 = vector.load %arg2[%c0_7, %c0_8, %c0_9, %c0_10] : memref<1x4x16x32xf32, #tpu.memory_space<vmem>>, vector<1x4x16x32xf32>
    %5 = vector.shape_cast %4 : vector<1x4x16x32xf32> to vector<4x16x32xf32>
    %c0_11 = arith.constant 0 : index
    %c0_12 = arith.constant 0 : index
    %c0_13 = arith.constant 0 : index
    %c0_14 = arith.constant 0 : index
    %6 = vector.load %arg3[%c0_11, %c0_12, %c0_13, %c0_14] : memref<1x4x16x32xf32, #tpu.memory_space<vmem>>, vector<1x4x16x32xf32>
    %7 = vector.shape_cast %6 : vector<1x4x16x32xf32> to vector<4x16x32xf32>
    %8 = vector.broadcast %1 : vector<4x1x32xf32> to vector<4x16x32xf32>
    %9 = arith.mulf %8, %5 : vector<4x16x32xf32>
    %10 = vector.broadcast %3 : vector<4x1x32xf32> to vector<4x16x32xf32>
    %11 = arith.mulf %10, %7 : vector<4x16x32xf32>
    %12 = arith.subf %9, %11 : vector<4x16x32xf32>
    %13 = vector.broadcast %1 : vector<4x1x32xf32> to vector<4x16x32xf32>
    %14 = arith.mulf %13, %7 : vector<4x16x32xf32>
    %15 = vector.broadcast %3 : vector<4x1x32xf32> to vector<4x16x32xf32>
    %16 = arith.mulf %15, %5 : vector<4x16x32xf32>
    %17 = arith.addf %14, %16 : vector<4x16x32xf32>
    %18 = tpu.concatenate %12, %17 in 2 : vector<4x16x32xf32>, vector<4x16x32xf32> -> vector<4x16x64xf32>
    %c0_15 = arith.constant 0 : index
    %c0_16 = arith.constant 0 : index
    %c0_17 = arith.constant 0 : index
    %19 = vector.load %arg6[%c0_15, %c0_16, %c0_17] : memref<4x64x64xf32, #tpu.memory_space<vmem>>, vector<4x64x64xf32>
    %cst = arith.constant dense<0.000000e+00> : vector<4x16x64xf32>
    %20 = tpu.matmul %18, %19, %cst {dimension_numbers = #tpu.dot_dimension_numbers<[2], [1], [1], [2], [0, 0, 0, 1, 1, 2], [0], [0]>} : vector<4x16x64xf32>, vector<4x64x64xf32>, vector<4x16x64xf32> -> vector<4x16x64xf32>
    %c0_18 = arith.constant 0 : index
    %c0_19 = arith.constant 0 : index
    %c0_20 = arith.constant 0 : index
    %c0_21 = arith.constant 0 : index
    %21 = vector.load %arg7[%c0_18, %c0_19, %c0_20, %c0_21] : memref<1x4x16x64xf32, #tpu.memory_space<vmem>>, vector<1x4x16x64xf32>
    %22 = vector.shape_cast %21 : vector<1x4x16x64xf32> to vector<4x16x64xf32>
    %23 = vector.shape_cast %20 : vector<4x16x64xf32> to vector<1x4x16x64xf32>
    tpu.vector_store %arg7[%c0_18, %c0_19, %c0_20, %c0_21], %23 {strides = array<i32>} : memref<1x4x16x64xf32, #tpu.memory_space<vmem>>, vector<1x4x16x64xf32>,
    return
  }
  func.func @transform_0(%arg0: i32, %arg1: i32) -> (i32, i32, i32, i32) {
    %c0_i32 = arith.constant 0 : i32
    %c0_i32_0 = arith.constant 0 : i32
    %c0_i32_1 = arith.constant 0 : i32
    return %arg0, %c0_i32, %arg1, %c0_i32_0 : i32, i32, i32, i32
  }
  func.func @transform_1(%arg0: i32, %arg1: i32) -> (i32, i32, i32, i32) {
    %c0_i32 = arith.constant 0 : i32
    %c0_i32_0 = arith.constant 0 : i32
    %c0_i32_1 = arith.constant 0 : i32
    return %arg0, %c0_i32, %arg1, %c0_i32_0 : i32, i32, i32, i32
  }
  func.func @transform_2(%arg0: i32, %arg1: i32) -> (i32, i32, i32, i32) {
    %c0_i32 = arith.constant 0 : i32
    %c0_i32_0 = arith.constant 0 : i32
    %c0_i32_1 = arith.constant 0 : i32
    %c0_i32_2 = arith.constant 0 : i32
    return %arg0, %c0_i32, %c0_i32_0, %c0_i32_1 : i32, i32, i32, i32
  }
  func.func @transform_3(%arg0: i32, %arg1: i32) -> (i32, i32, i32, i32) {
    %c0_i32 = arith.constant 0 : i32
    %c0_i32_0 = arith.constant 0 : i32
    %c0_i32_1 = arith.constant 0 : i32
    %c0_i32_2 = arith.constant 0 : i32
    return %arg0, %c0_i32, %c0_i32_0, %c0_i32_1 : i32, i32, i32, i32
  }
  func.func @transform_4(%arg0: i32, %arg1: i32) -> (i32, i32, i32) {
    %c0_i32 = arith.constant 0 : i32
    %c0_i32_0 = arith.constant 0 : i32
    %c0_i32_1 = arith.constant 0 : i32
    %c0_i32_2 = arith.constant 0 : i32
    return %c0_i32, %c0_i32_0, %c0_i32_1 : i32, i32, i32
  }
  func.func @transform_5(%arg0: i32, %arg1: i32) -> (i32, i32, i32, i32) {
    %c0_i32 = arith.constant 0 : i32
    %c0_i32_0 = arith.constant 0 : i32
    %c0_i32_1 = arith.constant 0 : i32
    return %arg0, %c0_i32, %arg1, %c0_i32_0 : i32, i32, i32, i32
  }
}

module attributes {stable_mosaic.version = 11 : i64} {
  func.func @_ff_res_kernel(%arg0: i32, %arg1: i32, %arg2: memref<1x32x256xf32, #tpu.memory_space<vmem>>, %arg3: memref<1x32x256xf32, #tpu.memory_space<vmem>>, %arg4: memref<1x32x1xf32, #tpu.memory_space<vmem>>, %arg5: memref<64x32xbf16, #tpu.memory_space<vmem>>, %arg6: memref<64x1xf32, #tpu.memory_space<vmem>>, %arg7: memref<32x64xbf16, #tpu.memory_space<vmem>>, %arg8: memref<32x1xf32, #tpu.memory_space<vmem>>, %arg9: memref<1x32x256xf32, #tpu.memory_space<vmem>>) attributes {dimension_semantics = [#tpu.dimension_semantics<parallel>, #tpu.dimension_semantics<parallel>], iteration_bounds = array<i64: 2, 1>, scalar_prefetch = 0 : i64, scratch_operands = 0 : i64, tpu.core_type = #tpu.core_type<tc>, window_params = [{transform_indices = @transform_0, window_bounds = array<i64: 1, 32, 256>}, {transform_indices = @transform_1, window_bounds = array<i64: 1, 32, 256>}, {transform_indices = @transform_2, window_bounds = array<i64: 1, 32, 1>}, {pipeline_mode = #tpu.pipeline_mode<synchronous>, transform_indices = @transform_3, window_bounds = array<i64: 64, 32>}, {pipeline_mode = #tpu.pipeline_mode<synchronous>, transform_indices = @transform_4, window_bounds = array<i64: 64, 1>}, {pipeline_mode = #tpu.pipeline_mode<synchronous>, transform_indices = @transform_5, window_bounds = array<i64: 32, 64>}, {pipeline_mode = #tpu.pipeline_mode<synchronous>, transform_indices = @transform_6, window_bounds = array<i64: 32, 1>}, {transform_indices = @transform_7, window_bounds = array<i64: 1, 32, 256>}]} {
    %c0 = arith.constant 0 : index
    %c0_0 = arith.constant 0 : index
    %0 = vector.load %arg5[%c0, %c0_0] : memref<64x32xbf16, #tpu.memory_space<vmem>>, vector<64x32xbf16>
    %c0_1 = arith.constant 0 : index
    %c0_2 = arith.constant 0 : index
    %c0_3 = arith.constant 0 : index
    %1 = vector.load %arg2[%c0_1, %c0_2, %c0_3] : memref<1x32x256xf32, #tpu.memory_space<vmem>>, vector<1x32x256xf32>
    %2 = vector.shape_cast %1 : vector<1x32x256xf32> to vector<32x256xf32>
    %3 = arith.truncf %2 : vector<32x256xf32> to vector<32x256xbf16>
    %cst = arith.constant dense<0.000000e+00> : vector<64x256xf32>
    %4 = tpu.matmul %0, %3, %cst {dimension_numbers = #tpu.dot_dimension_numbers<[1], [0], [0], [1], [0, 0, 1, 1], [], []>} : vector<64x32xbf16>, vector<32x256xbf16>, vector<64x256xf32> -> vector<64x256xf32>
    %c0_4 = arith.constant 0 : index
    %c0_5 = arith.constant 0 : index
    %5 = vector.load %arg6[%c0_4, %c0_5] : memref<64x1xf32, #tpu.memory_space<vmem>>, vector<64x1xf32>
    %6 = vector.broadcast %5 : vector<64x1xf32> to vector<64x256xf32>
    %7 = arith.addf %4, %6 : vector<64x256xf32>
    %cst_6 = arith.constant 0.000000e+00 : f32
    %8 = vector.broadcast %cst_6 : f32 to vector<64x256xf32>
    %9 = arith.maximumf %7, %8 : vector<64x256xf32>
    %c0_7 = arith.constant 0 : index
    %c0_8 = arith.constant 0 : index
    %10 = vector.load %arg7[%c0_7, %c0_8] : memref<32x64xbf16, #tpu.memory_space<vmem>>, vector<32x64xbf16>
    %11 = arith.truncf %9 : vector<64x256xf32> to vector<64x256xbf16>
    %cst_9 = arith.constant dense<0.000000e+00> : vector<32x256xf32>
    %12 = tpu.matmul %10, %11, %cst_9 {dimension_numbers = #tpu.dot_dimension_numbers<[1], [0], [0], [1], [0, 0, 1, 1], [], []>} : vector<32x64xbf16>, vector<64x256xbf16>, vector<32x256xf32> -> vector<32x256xf32>
    %c0_10 = arith.constant 0 : index
    %c0_11 = arith.constant 0 : index
    %13 = vector.load %arg8[%c0_10, %c0_11] : memref<32x1xf32, #tpu.memory_space<vmem>>, vector<32x1xf32>
    %14 = vector.broadcast %13 : vector<32x1xf32> to vector<32x256xf32>
    %15 = arith.addf %12, %14 : vector<32x256xf32>
    %c0_12 = arith.constant 0 : index
    %c0_13 = arith.constant 0 : index
    %c0_14 = arith.constant 0 : index
    %16 = vector.load %arg4[%c0_12, %c0_13, %c0_14] : memref<1x32x1xf32, #tpu.memory_space<vmem>>, vector<1x32x1xf32>
    %17 = vector.shape_cast %16 : vector<1x32x1xf32> to vector<32x1xf32>
    %18 = vector.broadcast %17 : vector<32x1xf32> to vector<32x256xf32>
    %19 = arith.mulf %15, %18 : vector<32x256xf32>
    %c0_15 = arith.constant 0 : index
    %c0_16 = arith.constant 0 : index
    %c0_17 = arith.constant 0 : index
    %20 = vector.load %arg3[%c0_15, %c0_16, %c0_17] : memref<1x32x256xf32, #tpu.memory_space<vmem>>, vector<1x32x256xf32>
    %21 = vector.shape_cast %20 : vector<1x32x256xf32> to vector<32x256xf32>
    %22 = arith.addf %21, %19 : vector<32x256xf32>
    %c0_18 = arith.constant 0 : index
    %c0_19 = arith.constant 0 : index
    %c0_20 = arith.constant 0 : index
    %23 = vector.load %arg9[%c0_18, %c0_19, %c0_20] : memref<1x32x256xf32, #tpu.memory_space<vmem>>, vector<1x32x256xf32>
    %24 = vector.shape_cast %23 : vector<1x32x256xf32> to vector<32x256xf32>
    %25 = vector.shape_cast %22 : vector<32x256xf32> to vector<1x32x256xf32>
    tpu.vector_store %arg9[%c0_18, %c0_19, %c0_20], %25 {strides = array<i32>} : memref<1x32x256xf32, #tpu.memory_space<vmem>>, vector<1x32x256xf32>,
    return
  }
  func.func @transform_0(%arg0: i32, %arg1: i32) -> (i32, i32, i32) {
    %c0_i32 = arith.constant 0 : i32
    %c0_i32_0 = arith.constant 0 : i32
    return %arg0, %c0_i32, %arg1 : i32, i32, i32
  }
  func.func @transform_1(%arg0: i32, %arg1: i32) -> (i32, i32, i32) {
    %c0_i32 = arith.constant 0 : i32
    %c0_i32_0 = arith.constant 0 : i32
    return %arg0, %c0_i32, %arg1 : i32, i32, i32
  }
  func.func @transform_2(%arg0: i32, %arg1: i32) -> (i32, i32, i32) {
    %c0_i32 = arith.constant 0 : i32
    %c0_i32_0 = arith.constant 0 : i32
    %c0_i32_1 = arith.constant 0 : i32
    return %arg0, %c0_i32, %c0_i32_0 : i32, i32, i32
  }
  func.func @transform_3(%arg0: i32, %arg1: i32) -> (i32, i32) {
    %c0_i32 = arith.constant 0 : i32
    %c0_i32_0 = arith.constant 0 : i32
    %c0_i32_1 = arith.constant 0 : i32
    return %c0_i32, %c0_i32_0 : i32, i32
  }
  func.func @transform_4(%arg0: i32, %arg1: i32) -> (i32, i32) {
    %c0_i32 = arith.constant 0 : i32
    %c0_i32_0 = arith.constant 0 : i32
    %c0_i32_1 = arith.constant 0 : i32
    return %c0_i32, %c0_i32_0 : i32, i32
  }
  func.func @transform_5(%arg0: i32, %arg1: i32) -> (i32, i32) {
    %c0_i32 = arith.constant 0 : i32
    %c0_i32_0 = arith.constant 0 : i32
    %c0_i32_1 = arith.constant 0 : i32
    return %c0_i32, %c0_i32_0 : i32, i32
  }
  func.func @transform_6(%arg0: i32, %arg1: i32) -> (i32, i32) {
    %c0_i32 = arith.constant 0 : i32
    %c0_i32_0 = arith.constant 0 : i32
    %c0_i32_1 = arith.constant 0 : i32
    return %c0_i32, %c0_i32_0 : i32, i32
  }
  func.func @transform_7(%arg0: i32, %arg1: i32) -> (i32, i32, i32) {
    %c0_i32 = arith.constant 0 : i32
    %c0_i32_0 = arith.constant 0 : i32
    return %arg0, %c0_i32, %arg1 : i32, i32, i32
  }
}

module attributes {stable_mosaic.version = 11 : i64} {
  func.func @_ff_head_kernel(%arg0: i32, %arg1: i32, %arg2: memref<1x32x256xf32, #tpu.memory_space<vmem>>, %arg3: memref<1x32x1xf32, #tpu.memory_space<vmem>>, %arg4: memref<64x32xbf16, #tpu.memory_space<vmem>>, %arg5: memref<64x1xf32, #tpu.memory_space<vmem>>, %arg6: memref<32x64xbf16, #tpu.memory_space<vmem>>, %arg7: memref<32x1xf32, #tpu.memory_space<vmem>>, %arg8: memref<128x32xf32, #tpu.memory_space<vmem>>, %arg9: memref<128x1xf32, #tpu.memory_space<vmem>>, %arg10: memref<4x128xf32, #tpu.memory_space<vmem>>, %arg11: memref<4x1xf32, #tpu.memory_space<vmem>>, %arg12: memref<1x4x256xf32, #tpu.memory_space<vmem>>) attributes {dimension_semantics = [#tpu.dimension_semantics<parallel>, #tpu.dimension_semantics<parallel>], iteration_bounds = array<i64: 2, 1>, scalar_prefetch = 0 : i64, scratch_operands = 0 : i64, tpu.core_type = #tpu.core_type<tc>, window_params = [{transform_indices = @transform_0, window_bounds = array<i64: 1, 32, 256>}, {transform_indices = @transform_1, window_bounds = array<i64: 1, 32, 1>}, {pipeline_mode = #tpu.pipeline_mode<synchronous>, transform_indices = @transform_2, window_bounds = array<i64: 64, 32>}, {pipeline_mode = #tpu.pipeline_mode<synchronous>, transform_indices = @transform_3, window_bounds = array<i64: 64, 1>}, {pipeline_mode = #tpu.pipeline_mode<synchronous>, transform_indices = @transform_4, window_bounds = array<i64: 32, 64>}, {pipeline_mode = #tpu.pipeline_mode<synchronous>, transform_indices = @transform_5, window_bounds = array<i64: 32, 1>}, {pipeline_mode = #tpu.pipeline_mode<synchronous>, transform_indices = @transform_6, window_bounds = array<i64: 128, 32>}, {pipeline_mode = #tpu.pipeline_mode<synchronous>, transform_indices = @transform_7, window_bounds = array<i64: 128, 1>}, {pipeline_mode = #tpu.pipeline_mode<synchronous>, transform_indices = @transform_8, window_bounds = array<i64: 4, 128>}, {pipeline_mode = #tpu.pipeline_mode<synchronous>, transform_indices = @transform_9, window_bounds = array<i64: 4, 1>}, {transform_indices = @transform_10, window_bounds = array<i64: 1, 4, 256>}]} {
    %c0 = arith.constant 0 : index
    %c0_0 = arith.constant 0 : index
    %0 = vector.load %arg4[%c0, %c0_0] : memref<64x32xbf16, #tpu.memory_space<vmem>>, vector<64x32xbf16>
    %c0_1 = arith.constant 0 : index
    %c0_2 = arith.constant 0 : index
    %c0_3 = arith.constant 0 : index
    %1 = vector.load %arg2[%c0_1, %c0_2, %c0_3] : memref<1x32x256xf32, #tpu.memory_space<vmem>>, vector<1x32x256xf32>
    %2 = vector.shape_cast %1 : vector<1x32x256xf32> to vector<32x256xf32>
    %3 = arith.truncf %2 : vector<32x256xf32> to vector<32x256xbf16>
    %cst = arith.constant dense<0.000000e+00> : vector<64x256xf32>
    %4 = tpu.matmul %0, %3, %cst {dimension_numbers = #tpu.dot_dimension_numbers<[1], [0], [0], [1], [0, 0, 1, 1], [], []>} : vector<64x32xbf16>, vector<32x256xbf16>, vector<64x256xf32> -> vector<64x256xf32>
    %c0_4 = arith.constant 0 : index
    %c0_5 = arith.constant 0 : index
    %5 = vector.load %arg5[%c0_4, %c0_5] : memref<64x1xf32, #tpu.memory_space<vmem>>, vector<64x1xf32>
    %6 = vector.broadcast %5 : vector<64x1xf32> to vector<64x256xf32>
    %7 = arith.addf %4, %6 : vector<64x256xf32>
    %cst_6 = arith.constant 0.000000e+00 : f32
    %8 = vector.broadcast %cst_6 : f32 to vector<64x256xf32>
    %9 = arith.maximumf %7, %8 : vector<64x256xf32>
    %c0_7 = arith.constant 0 : index
    %c0_8 = arith.constant 0 : index
    %10 = vector.load %arg6[%c0_7, %c0_8] : memref<32x64xbf16, #tpu.memory_space<vmem>>, vector<32x64xbf16>
    %11 = arith.truncf %9 : vector<64x256xf32> to vector<64x256xbf16>
    %cst_9 = arith.constant dense<0.000000e+00> : vector<32x256xf32>
    %12 = tpu.matmul %10, %11, %cst_9 {dimension_numbers = #tpu.dot_dimension_numbers<[1], [0], [0], [1], [0, 0, 1, 1], [], []>} : vector<32x64xbf16>, vector<64x256xbf16>, vector<32x256xf32> -> vector<32x256xf32>
    %c0_10 = arith.constant 0 : index
    %c0_11 = arith.constant 0 : index
    %13 = vector.load %arg7[%c0_10, %c0_11] : memref<32x1xf32, #tpu.memory_space<vmem>>, vector<32x1xf32>
    %14 = vector.broadcast %13 : vector<32x1xf32> to vector<32x256xf32>
    %15 = arith.addf %12, %14 : vector<32x256xf32>
    %c0_12 = arith.constant 0 : index
    %c0_13 = arith.constant 0 : index
    %c0_14 = arith.constant 0 : index
    %16 = vector.load %arg3[%c0_12, %c0_13, %c0_14] : memref<1x32x1xf32, #tpu.memory_space<vmem>>, vector<1x32x1xf32>
    %17 = vector.shape_cast %16 : vector<1x32x1xf32> to vector<32x1xf32>
    %18 = vector.broadcast %17 : vector<32x1xf32> to vector<32x256xf32>
    %19 = arith.mulf %15, %18 : vector<32x256xf32>
    %c0_15 = arith.constant 0 : index
    %c0_16 = arith.constant 0 : index
    %20 = vector.load %arg8[%c0_15, %c0_16] : memref<128x32xf32, #tpu.memory_space<vmem>>, vector<128x32xf32>
    %cst_17 = arith.constant dense<0.000000e+00> : vector<128x256xf32>
    %21 = tpu.matmul %20, %19, %cst_17 {dimension_numbers = #tpu.dot_dimension_numbers<[1], [0], [0], [1], [0, 0, 1, 1], [], []>} : vector<128x32xf32>, vector<32x256xf32>, vector<128x256xf32> -> vector<128x256xf32>
    %c0_18 = arith.constant 0 : index
    %c0_19 = arith.constant 0 : index
    %22 = vector.load %arg9[%c0_18, %c0_19] : memref<128x1xf32, #tpu.memory_space<vmem>>, vector<128x1xf32>
    %23 = vector.broadcast %22 : vector<128x1xf32> to vector<128x256xf32>
    %24 = arith.addf %21, %23 : vector<128x256xf32>
    %c0_20 = arith.constant 0 : index
    %c0_21 = arith.constant 0 : index
    %25 = vector.load %arg10[%c0_20, %c0_21] : memref<4x128xf32, #tpu.memory_space<vmem>>, vector<4x128xf32>
    %cst_22 = arith.constant dense<0.000000e+00> : vector<4x256xf32>
    %26 = tpu.matmul %25, %24, %cst_22 {dimension_numbers = #tpu.dot_dimension_numbers<[1], [0], [0], [1], [0, 0, 1, 1], [], []>} : vector<4x128xf32>, vector<128x256xf32>, vector<4x256xf32> -> vector<4x256xf32>
    %c0_23 = arith.constant 0 : index
    %c0_24 = arith.constant 0 : index
    %27 = vector.load %arg11[%c0_23, %c0_24] : memref<4x1xf32, #tpu.memory_space<vmem>>, vector<4x1xf32>
    %28 = vector.broadcast %27 : vector<4x1xf32> to vector<4x256xf32>
    %29 = arith.addf %26, %28 : vector<4x256xf32>
    %c0_25 = arith.constant 0 : index
    %c0_26 = arith.constant 0 : index
    %c0_27 = arith.constant 0 : index
    %30 = vector.load %arg12[%c0_25, %c0_26, %c0_27] : memref<1x4x256xf32, #tpu.memory_space<vmem>>, vector<1x4x256xf32>
    %31 = vector.shape_cast %30 : vector<1x4x256xf32> to vector<4x256xf32>
    %32 = vector.shape_cast %29 : vector<4x256xf32> to vector<1x4x256xf32>
    tpu.vector_store %arg12[%c0_25, %c0_26, %c0_27], %32 {strides = array<i32>} : memref<1x4x256xf32, #tpu.memory_space<vmem>>, vector<1x4x256xf32>,
    return
  }
  func.func @transform_0(%arg0: i32, %arg1: i32) -> (i32, i32, i32) {
    %c0_i32 = arith.constant 0 : i32
    %c0_i32_0 = arith.constant 0 : i32
    return %arg0, %c0_i32, %arg1 : i32, i32, i32
  }
  func.func @transform_1(%arg0: i32, %arg1: i32) -> (i32, i32, i32) {
    %c0_i32 = arith.constant 0 : i32
    %c0_i32_0 = arith.constant 0 : i32
    %c0_i32_1 = arith.constant 0 : i32
    return %arg0, %c0_i32, %c0_i32_0 : i32, i32, i32
  }
  func.func @transform_2(%arg0: i32, %arg1: i32) -> (i32, i32) {
    %c0_i32 = arith.constant 0 : i32
    %c0_i32_0 = arith.constant 0 : i32
    %c0_i32_1 = arith.constant 0 : i32
    return %c0_i32, %c0_i32_0 : i32, i32
  }
  func.func @transform_3(%arg0: i32, %arg1: i32) -> (i32, i32) {
    %c0_i32 = arith.constant 0 : i32
    %c0_i32_0 = arith.constant 0 : i32
    %c0_i32_1 = arith.constant 0 : i32
    return %c0_i32, %c0_i32_0 : i32, i32
  }
  func.func @transform_4(%arg0: i32, %arg1: i32) -> (i32, i32) {
    %c0_i32 = arith.constant 0 : i32
    %c0_i32_0 = arith.constant 0 : i32
    %c0_i32_1 = arith.constant 0 : i32
    return %c0_i32, %c0_i32_0 : i32, i32
  }
  func.func @transform_5(%arg0: i32, %arg1: i32) -> (i32, i32) {
    %c0_i32 = arith.constant 0 : i32
    %c0_i32_0 = arith.constant 0 : i32
    %c0_i32_1 = arith.constant 0 : i32
    return %c0_i32, %c0_i32_0 : i32, i32
  }
  func.func @transform_6(%arg0: i32, %arg1: i32) -> (i32, i32) {
    %c0_i32 = arith.constant 0 : i32
    %c0_i32_0 = arith.constant 0 : i32
    %c0_i32_1 = arith.constant 0 : i32
    return %c0_i32, %c0_i32_0 : i32, i32
  }
  func.func @transform_7(%arg0: i32, %arg1: i32) -> (i32, i32) {
    %c0_i32 = arith.constant 0 : i32
    %c0_i32_0 = arith.constant 0 : i32
    %c0_i32_1 = arith.constant 0 : i32
    return %c0_i32, %c0_i32_0 : i32, i32
  }
  func.func @transform_8(%arg0: i32, %arg1: i32) -> (i32, i32) {
    %c0_i32 = arith.constant 0 : i32
    %c0_i32_0 = arith.constant 0 : i32
    %c0_i32_1 = arith.constant 0 : i32
    return %c0_i32, %c0_i32_0 : i32, i32
  }
  func.func @transform_9(%arg0: i32, %arg1: i32) -> (i32, i32) {
    %c0_i32 = arith.constant 0 : i32
    %c0_i32_0 = arith.constant 0 : i32
    %c0_i32_1 = arith.constant 0 : i32
    return %c0_i32, %c0_i32_0 : i32, i32
  }
  func.func @transform_10(%arg0: i32, %arg1: i32) -> (i32, i32, i32) {
    %c0_i32 = arith.constant 0 : i32
    %c0_i32_0 = arith.constant 0 : i32
    return %arg0, %c0_i32, %arg1 : i32, i32, i32
  }
}

</mosaic_0001>

<llo_original>
// kernel: reverse.10
$region0: #{reverse.10}
  #allocation0 [shape = 's32[1]{0}', space=sflag, size = 0x4, scoped, tag = 'scoped memory for reverse.10']
  %s0 = inlined_call_operand.vmem [shape: f32[2,32,16,7], index: 0, kind: input, shape index: {}]
  %s1 = inlined_call_operand.vmem [shape: f32[2,32,16,7], index: 1, kind: output, shape index: {}]
  %s2 = scalar_lea.vmem %s0, 96
  %v3 = vld [vmem:[%s2] sm:$0xff]
  %4 = vst [vmem:[%s1] sm:$0xff] %v3
  %s5 = scalar_lea.vmem %s0, 208
  %v6 = vld [vmem:[%s5] sm:$0xff]
  %s7 = scalar_lea.vmem %s1, 112
  %8 = vst [vmem:[%s7] sm:$0xff] %v6
  %s9 = scalar_lea.vmem %s0, 80
  %v10 = vld [vmem:[%s9] sm:$0xff]
  %s11 = scalar_lea.vmem %s1, 16
  %12 = vst [vmem:[%s11] sm:$0xff] %v10
  %s13 = scalar_lea.vmem %s0, 192
  %v14 = vld [vmem:[%s13] sm:$0xff]
  %s15 = scalar_lea.vmem %s1, 128
  %16 = vst [vmem:[%s15] sm:$0xff] %v14
  %s17 = scalar_lea.vmem %s0, 64
  %v18 = vld [vmem:[%s17] sm:$0xff]
  %s19 = scalar_lea.vmem %s1, 32
  %20 = vst [vmem:[%s19] sm:$0xff] %v18
  %s21 = scalar_lea.vmem %s0, 176
  %v22 = vld [vmem:[%s21] sm:$0xff]
  %s23 = scalar_lea.vmem %s1, 144
  %24 = vst [vmem:[%s23] sm:$0xff] %v22
  %s25 = scalar_lea.vmem %s0, 48
  %v26 = vld [vmem:[%s25] sm:$0xff]
  %s27 = scalar_lea.vmem %s1, 48
  %28 = vst [vmem:[%s27] sm:$0xff] %v26
  %s29 = scalar_lea.vmem %s0, 160
  %v30 = vld [vmem:[%s29] sm:$0xff]
  %s31 = scalar_lea.vmem %s1, 160
  %32 = vst [vmem:[%s31] sm:$0xff] %v30
  %s33 = scalar_lea.vmem %s0, 32
  %v34 = vld [vmem:[%s33] sm:$0xff]
  %s35 = scalar_lea.vmem %s1, 64
  %36 = vst [vmem:[%s35] sm:$0xff] %v34
  %s37 = scalar_lea.vmem %s0, 144
  %v38 = vld [vmem:[%s37] sm:$0xff]
  %s39 = scalar_lea.vmem %s1, 176
  %40 = vst [vmem:[%s39] sm:$0xff] %v38
  %s41 = scalar_lea.vmem %s0, 16
  %v42 = vld [vmem:[%s41] sm:$0xff]
  %s43 = scalar_lea.vmem %s1, 80
  %44 = vst [vmem:[%s43] sm:$0xff] %v42
  %s45 = scalar_lea.vmem %s0, 128
  %v46 = vld [vmem:[%s45] sm:$0xff]
  %s47 = scalar_lea.vmem %s1, 192
  %48 = vst [vmem:[%s47] sm:$0xff] %v46
  %v49 = vld [vmem:[%s0] sm:$0xff]
  %s50 = scalar_lea.vmem %s1, 96
  %51 = vst [vmem:[%s50] sm:$0xff] %v49
  %s52 = scalar_lea.vmem %s0, 112
  %v53 = vld [vmem:[%s52] sm:$0xff]
  %s54 = scalar_lea.vmem %s1, 208
  %55 = vst [vmem:[%s54] sm:$0xff] %v53
  %s56 = scalar_lea.vmem %s0, 104
  %v57 = vld [vmem:[%s56] sm:$0xff]
  %s58 = scalar_lea.vmem %s1, 8
  %59 = vst [vmem:[%s58] sm:$0xff] %v57
  %s60 = scalar_lea.vmem %s0, 216
  %v61 = vld [vmem:[%s60] sm:$0xff]
  %s62 = scalar_lea.vmem %s1, 120
  %63 = vst [vmem:[%s62] sm:$0xff] %v61
  %s64 = scalar_lea.vmem %s0, 88
  %v65 = vld [vmem:[%s64] sm:$0xff]
  %s66 = scalar_lea.vmem %s1, 24
  %67 = vst [vmem:[%s66] sm:$0xff] %v65
  %s68 = scalar_lea.vmem %s0, 200
  %v69 = vld [vmem:[%s68] sm:$0xff]
  %s70 = scalar_lea.vmem %s1, 136
  %71 = vst [vmem:[%s70] sm:$0xff] %v69
  %s72 = scalar_lea.vmem %s0, 72
  %v73 = vld [vmem:[%s72] sm:$0xff]
  %s74 = scalar_lea.vmem %s1, 40
  %75 = vst [vmem:[%s74] sm:$0xff] %v73
  %s76 = scalar_lea.vmem %s0, 184
  %v77 = vld [vmem:[%s76] sm:$0xff]
  %s78 = scalar_lea.vmem %s1, 152
  %79 = vst [vmem:[%s78] sm:$0xff] %v77
  %s80 = scalar_lea.vmem %s0, 56
  %v81 = vld [vmem:[%s80] sm:$0xff]
  %s82 = scalar_lea.vmem %s1, 56
  %83 = vst [vmem:[%s82] sm:$0xff] %v81
  %s84 = scalar_lea.vmem %s0, 168
  %v85 = vld [vmem:[%s84] sm:$0xff]
  %s86 = scalar_lea.vmem %s1, 168
  %87 = vst [vmem:[%s86] sm:$0xff] %v85
  %s88 = scalar_lea.vmem %s0, 40
  %v89 = vld [vmem:[%s88] sm:$0xff]
  %s90 = scalar_lea.vmem %s1, 72
  %91 = vst [vmem:[%s90] sm:$0xff] %v89
  %s92 = scalar_lea.vmem %s0, 152
  %v93 = vld [vmem:[%s92] sm:$0xff]
  %s94 = scalar_lea.vmem %s1, 184
  %95 = vst [vmem:[%s94] sm:$0xff] %v93
  %s96 = scalar_lea.vmem %s0, 24
  %v97 = vld [vmem:[%s96] sm:$0xff]
  %s98 = scalar_lea.vmem %s1, 88
  %99 = vst [vmem:[%s98] sm:$0xff] %v97
  %s100 = scalar_lea.vmem %s0, 136
  %v101 = vld [vmem:[%s100] sm:$0xff]
  %s102 = scalar_lea.vmem %s1, 200
  %103 = vst [vmem:[%s102] sm:$0xff] %v101
  %s104 = scalar_lea.vmem %s0, 8
  %v105 = vld [vmem:[%s104] sm:$0xff]
  %s106 = scalar_lea.vmem %s1, 104
  %107 = vst [vmem:[%s106] sm:$0xff] %v105
  %s108 = scalar_lea.vmem %s0, 120
  %v109 = vld [vmem:[%s108] sm:$0xff]
  %s110 = scalar_lea.vmem %s1, 216
  %111 = vst [vmem:[%s110] sm:$0xff] %v109

// kernel: ffno_forward.7
$region0: #{ffno_forward.7}
  #allocation0 [shape = 'u32[]', space=smem, size = 0x4, offset = 0x4, fixed_abs, tag = 'smem constant byte address 0x4 - core index']
  #allocation1 [shape = 'u32[144,128]{1,0:T(1,128)}', space=vmem, size = 0x12000, scoped, tag = 'internal scratch']
  %s0 = inlined_call_operand.vmem [shape: f32[2,4,16,32], index: 0, kind: input, shape index: {}]
  %s1 = inlined_call_operand.vmem [shape: f32[2,4,16,32], index: 1, kind: input, shape index: {}]
  %s2 = inlined_call_operand.vmem [shape: f32[2,4,1,32], index: 2, kind: input, shape index: {}]
  %s3 = inlined_call_operand.vmem [shape: f32[2,4,1,32], index: 3, kind: input, shape index: {}]
  %s4 = inlined_call_operand.vmem [shape: f32[4,64,64], index: 4, kind: input, shape index: {}]
  %s5 = inlined_call_operand.vmem [shape: f32[2,4,16,64], index: 5, kind: output, shape index: {}]
  %s6 = sld [smem:[#allocation0]]
  $region53: #{ffno_forward.7} parent=0
    _
  %s8 = ssub.s32 1, %s6
  %s9 = scalar_select 0, %s8, %s6
  loop: start=0, step=1, limit=4
  $region2: #{ffno_forward.7} parent=0 // loop_pre_header
    _
  $region3: #{ffno_forward.7} parent=0 // loop_header
    %s11 = sphi 0, %s15
    %p12 = scmp.ge.s32.totalorder %s11, 4
    %s18 = sphi 0, %s30
    %s19 = sphi 0, %s26
    %s20 = sphi 0, %s18
    %s21 = sphi 0, %s19
    %s22 = sphi 0, %s20
    %s23 = sphi 0, %s21
    %s35 = sphi 0, %s37
    %s38 = sphi 0, %s35
    %s39 = sphi 0, %s38
    %s55 = sphi 0, %s39
    %s63 = sphi 0, %s65
    %s66 = sphi 0, %s63
    %s67 = sphi 0, %s66
    %s83 = sphi 0, %s67
    %s89 = sphi 0, %s91
    %s92 = sphi 0, %s89
    %s93 = sphi 0, %s92
    %s109 = sphi 0, %s93
    %s115 = sphi 0, %s117
    %s118 = sphi 0, %s115
    %s119 = sphi 0, %s118
    %s135 = sphi 0, %s119
    %s139 = sphi 0, %s139
    %s141 = sphi 0, %s139
    %s142 = sphi 0, %s141
    %s156 = sphi 0, %s142
    %s164 = sphi 0, %s166
    %s167 = sphi 0, %s164
    %s168 = sphi 0, %s167
    %s184 = sphi 0, %s168
  $region4: #{ffno_forward.7} parent=0 // loop_header_branch
    %14 = sbr.rel (%p12) target = $region8
  $region5: #{ffno_forward.7} parent=0 // loop_body
    %s16 = ssub.s32 %s11, 1
    %s17 = ssub.s32 %s11, 2
    %s24 = sadd.s32 1, %s19
    %p25 = scmp.ge.s32.totalorder %s24, 1
    %s26 = scalar_select %p25, 0, %s24
    %s27 = sadd.s32 1, %s18
    %s28 = scalar_select %p25, %s27, %s18
    %p29 = scmp.ge.s32.totalorder %s28, 2
    %s30 = scalar_select %p29, 0, %s28
    %s31 = ssub.s32 %s18, %s30
    %s32 = ssub.s32 %s19, %s26
    %s33 = sor.u32 %s31, %s32
    %p34 = scmp.eq.s32.totalorder %s33, 0
    %s36 = sadd.s32 %s35, 1
    %s37 = scalar_select %p34, %s35, %s36
    %p40 = pneg %p34
    %p41 = scmp.eq.s32.totalorder %s11, 1
    %p42 = por %p40, %p41
    %p43 = scmp.ne.s32.totalorder %s35, %s38
    %p44 = scmp.eq.s32.totalorder %s11, 0
    %p45 = por %p43, %p44
    %p46 = scmp.ne.s32.totalorder %s35, %s38
    %p47 = scmp.eq.s32.totalorder %s16, 1
    %p48 = por %p46, %p47
    %p49 = scmp.ne.s32.totalorder %s38, %s39
    %p50 = scmp.eq.s32.totalorder %s16, 0
    %p51 = por %p49, %p50
    %p52 = scmp.ne.s32.totalorder %s38, %s39
    %p53 = scmp.eq.s32.totalorder %s17, 1
    %p54 = por %p52, %p53
    %p56 = scmp.ne.s32.totalorder %s39, %s55
    %p57 = scmp.eq.s32.totalorder %s17, 0
    %p58 = por %p56, %p57
    %s59 = ssub.s32 %s18, %s30
    %s60 = ssub.s32 %s19, %s26
    %s61 = sor.u32 %s59, %s60
    %p62 = scmp.eq.s32.totalorder %s61, 0
    %s64 = sadd.s32 %s63, 1
    %s65 = scalar_select %p62, %s63, %s64
    %p68 = pneg %p62
    %p69 = scmp.eq.s32.totalorder %s11, 1
    %p70 = por %p68, %p69
    %p71 = scmp.ne.s32.totalorder %s63, %s66
    %p72 = scmp.eq.s32.totalorder %s11, 0
    %p73 = por %p71, %p72
    %p74 = scmp.ne.s32.totalorder %s63, %s66
    %p75 = scmp.eq.s32.totalorder %s16, 1
    %p76 = por %p74, %p75
    %p77 = scmp.ne.s32.totalorder %s66, %s67
    %p78 = scmp.eq.s32.totalorder %s16, 0
    %p79 = por %p77, %p78
    %p80 = scmp.ne.s32.totalorder %s66, %s67
    %p81 = scmp.eq.s32.totalorder %s17, 1
    %p82 = por %p80, %p81
    %p84 = scmp.ne.s32.totalorder %s67, %s83
    %p85 = scmp.eq.s32.totalorder %s17, 0
    %p86 = por %p84, %p85
    %s87 = ssub.s32 %s18, %s30
    %p88 = scmp.eq.s32.totalorder %s87, 0
    %s90 = sadd.s32 %s89, 1
    %s91 = scalar_select %p88, %s89, %s90
    %p94 = pneg %p88
    %p95 = scmp.eq.s32.totalorder %s11, 1
    %p96 = por %p94, %p95
    %p97 = scmp.ne.s32.totalorder %s89, %s92
    %p98 = scmp.eq.s32.totalorder %s11, 0
    %p99 = por %p97, %p98
    %p100 = scmp.ne.s32.totalorder %s89, %s92
    %p101 = scmp.eq.s32.totalorder %s16, 1
    %p102 = por %p100, %p101
    %p103 = scmp.ne.s32.totalorder %s92, %s93
    %p104 = scmp.eq.s32.totalorder %s16, 0
    %p105 = por %p103, %p104
    %p106 = scmp.ne.s32.totalorder %s92, %s93
    %p107 = scmp.eq.s32.totalorder %s17, 1
    %p108 = por %p106, %p107
    %p110 = scmp.ne.s32.totalorder %s93, %s109
    %p111 = scmp.eq.s32.totalorder %s17, 0
    %p112 = por %p110, %p111
    %s113 = ssub.s32 %s18, %s30
    %p114 = scmp.eq.s32.totalorder %s113, 0
    %s116 = sadd.s32 %s115, 1
    %s117 = scalar_select %p114, %s115, %s116
    %p120 = pneg %p114
    %p121 = scmp.eq.s32.totalorder %s11, 1
    %p122 = por %p120, %p121
    %p123 = scmp.ne.s32.totalorder %s115, %s118
    %p124 = scmp.eq.s32.totalorder %s11, 0
    %p125 = por %p123, %p124
    %p126 = scmp.ne.s32.totalorder %s115, %s118
    %p127 = scmp.eq.s32.totalorder %s16, 1
    %p128 = por %p126, %p127
    %p129 = scmp.ne.s32.totalorder %s118, %s119
    %p130 = scmp.eq.s32.totalorder %s16, 0
    %p131 = por %p129, %p130
    %p132 = scmp.ne.s32.totalorder %s118, %s119
    %p133 = scmp.eq.s32.totalorder %s17, 1
    %p134 = por %p132, %p133
    %p136 = scmp.ne.s32.totalorder %s119, %s135
    %p137 = scmp.eq.s32.totalorder %s17, 0
    %p138 = por %p136, %p137
    %s140 = sadd.s32 %s139, 1
    %p143 = scmp.eq.s32.totalorder %s11, 1
    %p144 = scmp.ne.s32.totalorder %s139, %s141
    %p145 = scmp.eq.s32.totalorder %s11, 0
    %p146 = por %p144, %p145
    %p147 = scmp.ne.s32.totalorder %s139, %s141
    %p148 = scmp.eq.s32.totalorder %s16, 1
    %p149 = por %p147, %p148
    %p150 = scmp.ne.s32.totalorder %s141, %s142
    %p151 = scmp.eq.s32.totalorder %s16, 0
    %p152 = por %p150, %p151
    %p153 = scmp.ne.s32.totalorder %s141, %s142
    %p154 = scmp.eq.s32.totalorder %s17, 1
    %p155 = por %p153, %p154
    %p157 = scmp.ne.s32.totalorder %s142, %s156
    %p158 = scmp.eq.s32.totalorder %s17, 0
    %p159 = por %p157, %p158
    %s160 = ssub.s32 %s18, %s30
    %s161 = ssub.s32 %s19, %s26
    %s162 = sor.u32 %s160, %s161
    %p163 = scmp.eq.s32.totalorder %s162, 0
    %s165 = sadd.s32 %s164, 1
    %s166 = scalar_select %p163, %s164, %s165
    %p169 = pneg %p163
    %p170 = scmp.eq.s32.totalorder %s11, 1
    %p171 = por %p169, %p170
    %p172 = scmp.ne.s32.totalorder %s164, %s167
    %p173 = scmp.eq.s32.totalorder %s11, 0
    %p174 = por %p172, %p173
    %p175 = scmp.ne.s32.totalorder %s164, %s167
    %p176 = scmp.eq.s32.totalorder %s16, 1
    %p177 = por %p175, %p176
    %p178 = scmp.ne.s32.totalorder %s167, %s168
    %p179 = scmp.eq.s32.totalorder %s16, 0
    %p180 = por %p178, %p179
    %p181 = scmp.ne.s32.totalorder %s167, %s168
    %p182 = scmp.eq.s32.totalorder %s17, 1
    %p183 = por %p181, %p182
    %p185 = scmp.ne.s32.totalorder %s168, %s184
    %p186 = scmp.eq.s32.totalorder %s17, 0
    %p187 = por %p185, %p186
    %p188 = scmp.le.s32.totalorder 1, %s11
    %p189 = scmp.lt.s32.totalorder %s11, 3
    %p190 = pnand %p188, %p189
    %p191 = pneg %p190
    // Predicated region
    $region9: #{ffno_forward.7} parent=5 // pred_check
      _
    $region10: #{ffno_forward.7} parent=5 // pred_check_branch
      %193 = sbr.rel (%p190) target = $region12
    $region11: #{ffno_forward.7} parent=5 // pred_region
      %s194 = ssub.s32 %s11, 1
      // Predicated region
      $region13: #{ffno_forward.7} parent=11 // pred_check
        %p195 = pneg %p152
      $region14: #{ffno_forward.7} parent=11 // pred_check_branch
        %197 = sbr.rel (%p195) target = $region16
      $region15: #{ffno_forward.7} parent=11 // pred_region
        _
      $region16: #{ffno_forward.7} parent=11 // pred_fallthru
        _
    $region12: #{ffno_forward.7} parent=5 // pred_fallthru
      _
    %p198 = scmp.lt.s32.totalorder %s11, 2
    // Predicated region
    $region17: #{ffno_forward.7} parent=5 // pred_check
      %p199 = pneg %p198
    $region18: #{ffno_forward.7} parent=5 // pred_check_branch
      %201 = sbr.rel (%p199) target = $region20
    $region19: #{ffno_forward.7} parent=5 // pred_region
      // Predicated region
      $region21: #{ffno_forward.7} parent=19 // pred_check
        %p202 = pneg %p45
      $region22: #{ffno_forward.7} parent=19 // pred_check_branch
        %204 = sbr.rel (%p202) target = $region24
      $region23: #{ffno_forward.7} parent=19 // pred_region
        %s205 = smul.u32 2, %s19
        %p206 = scmp.lt.s32.totalorder %s18, 1
        %s207 = scalar_select %p206, %s18, 1
        %p208 = scmp.lt.s32.totalorder %s205, 1
        %s209 = scalar_select %p208, %s205, 1
        %s210 = smul.addr %s207, 8
        %s211 = sadd.s32 %s209, %s210
        %s212 = smul.addr %s211, 8
        %s213 = scalar_lea.vmem %s0, %s212
        %s214 = smul.u32 2, %s19
      $region24: #{ffno_forward.7} parent=19 // pred_fallthru
        _
      // Predicated region
      $region25: #{ffno_forward.7} parent=19 // pred_check
        %p215 = pneg %p73
      $region26: #{ffno_forward.7} parent=19 // pred_check_branch
        %217 = sbr.rel (%p215) target = $region28
      $region27: #{ffno_forward.7} parent=19 // pred_region
        %s218 = smul.u32 2, %s19
        %p219 = scmp.lt.s32.totalorder %s18, 1
        %s220 = scalar_select %p219, %s18, 1
        %p221 = scmp.lt.s32.totalorder %s218, 1
        %s222 = scalar_select %p221, %s218, 1
        %s223 = smul.addr %s220, 8
        %s224 = sadd.s32 %s222, %s223
        %s225 = smul.addr %s224, 8
        %s226 = scalar_lea.vmem %s1, %s225
        %s227 = smul.u32 2, %s19
      $region28: #{ffno_forward.7} parent=19 // pred_fallthru
        _
      // Predicated region
      $region29: #{ffno_forward.7} parent=19 // pred_check
        %p228 = pneg %p99
      $region30: #{ffno_forward.7} parent=19 // pred_check_branch
        %230 = sbr.rel (%p228) target = $region32
      $region31: #{ffno_forward.7} parent=19 // pred_region
        %p231 = scmp.lt.s32.totalorder %s18, 1
        %s232 = scalar_select %p231, %s18, 1
        %s233 = smul.addr %s232, 4
        %s234 = scalar_lea.vmem %s2, %s233
      $region32: #{ffno_forward.7} parent=19 // pred_fallthru
        _
      // Predicated region
      $region33: #{ffno_forward.7} parent=19 // pred_check
        %p235 = pneg %p125
      $region34: #{ffno_forward.7} parent=19 // pred_check_branch
        %237 = sbr.rel (%p235) target = $region36
      $region35: #{ffno_forward.7} parent=19 // pred_region
        %p238 = scmp.lt.s32.totalorder %s18, 1
        %s239 = scalar_select %p238, %s18, 1
        %s240 = smul.addr %s239, 4
        %s241 = scalar_lea.vmem %s3, %s240
      $region36: #{ffno_forward.7} parent=19 // pred_fallthru
        _
    $region20: #{ffno_forward.7} parent=5 // pred_fallthru
      _
    %p242 = scmp.le.s32.totalorder 1, %s11
    %p243 = scmp.lt.s32.totalorder %s11, 3
    %p244 = pnand %p242, %p243
    %p245 = pneg %p244
    // Predicated region
    $region37: #{ffno_forward.7} parent=5 // pred_check
      _
    $region38: #{ffno_forward.7} parent=5 // pred_check_branch
      %247 = sbr.rel (%p244) target = $region40
    $region39: #{ffno_forward.7} parent=5 // pred_region
      %s248 = ssub.s32 %s11, 1
      %s249 = smul.u32 2, %s21
      %p250 = scmp.lt.s32.totalorder %s20, 1
      %s251 = scalar_select %p250, %s20, 1
      %p252 = scmp.lt.s32.totalorder %s249, 1
      %s253 = scalar_select %p252, %s249, 1
      %s254 = smul.addr %s251, 8
      %s255 = sadd.s32 %s253, %s254
      %s256 = smul.addr %s255, 8
      %s257 = scalar_lea.vmem %s0, %s256
      %p258 = pneg %p51
      %p259 = pneg %p48
      %s260 = smul.u32 2, %s21
      %p261 = scmp.lt.s32.totalorder %s20, 1
      %s262 = scalar_select %p261, %s20, 1
      %p263 = scmp.lt.s32.totalorder %s260, 1
      %s264 = scalar_select %p263, %s260, 1
      %s265 = smul.addr %s262, 8
      %s266 = sadd.s32 %s264, %s265
      %s267 = smul.addr %s266, 8
      %s268 = scalar_lea.vmem %s1, %s267
      %p269 = pneg %p79
      %p270 = pneg %p76
      %p271 = scmp.lt.s32.totalorder %s20, 1
      %s272 = scalar_select %p271, %s20, 1
      %s273 = smul.addr %s272, 4
      %s274 = scalar_lea.vmem %s2, %s273
      %p275 = pneg %p105
      %p276 = pneg %p102
      %p277 = scmp.lt.s32.totalorder %s20, 1
      %s278 = scalar_select %p277, %s20, 1
      %s279 = smul.addr %s278, 4
      %s280 = scalar_lea.vmem %s3, %s279
      %p281 = pneg %p131
      %p282 = pneg %p128
      %p283 = pneg %p152
      %p284 = pneg %p149
      %p285 = pneg %p180
      %p286 = pneg %p177
      %s287 = smul.u32 2, %s21
      %p288 = scmp.lt.s32.totalorder %s20, 1
      %s289 = scalar_select %p288, %s20, 1
      %p290 = scmp.lt.s32.totalorder %s287, 1
      %s291 = scalar_select %p290, %s287, 1
      %s292 = smul.addr %s289, 8
      %s293 = sadd.s32 %s291, %s292
      %s294 = smul.addr %s293, 8
      %s295 = scalar_lea.vmem %s5, %s294
      %s296 = smul.u32 2, %s21
      %p297 = scmp.lt.s32.totalorder %s20, 1
      %s298 = scalar_select %p297, %s20, 1
      %p299 = scmp.lt.s32.totalorder %s296, 1
      %s300 = scalar_select %p299, %s296, 1
      %s301 = smul.addr %s298, 8
      %s302 = sadd.s32 %s300, %s301
      %s303 = smul.addr %s302, 8
      %s304 = scalar_lea.vmem %s0, %s303
      %s305 = smul.u32 2, %s21
      %s306 = smul.u32 2, %s21
      %p307 = scmp.lt.s32.totalorder %s20, 1
      %s308 = scalar_select %p307, %s20, 1
      %p309 = scmp.lt.s32.totalorder %s306, 1
      %s310 = scalar_select %p309, %s306, 1
      %s311 = smul.addr %s308, 8
      %s312 = sadd.s32 %s310, %s311
      %s313 = smul.addr %s312, 8
      %s314 = scalar_lea.vmem %s1, %s313
      %s315 = smul.u32 2, %s21
      %p316 = scmp.lt.s32.totalorder %s20, 1
      %s317 = scalar_select %p316, %s20, 1
      %s318 = smul.addr %s317, 4
      %s319 = scalar_lea.vmem %s2, %s318
      %p320 = scmp.lt.s32.totalorder %s20, 1
      %s321 = scalar_select %p320, %s20, 1
      %s322 = smul.addr %s321, 4
      %s323 = scalar_lea.vmem %s3, %s322
      %s324 = smul.u32 2, %s21
      %p325 = scmp.lt.s32.totalorder %s20, 1
      %s326 = scalar_select %p325, %s20, 1
      %p327 = scmp.lt.s32.totalorder %s324, 1
      %s328 = scalar_select %p327, %s324, 1
      %s329 = smul.addr %s326, 8
      %s330 = sadd.s32 %s328, %s329
      %s331 = smul.addr %s330, 8
      %s332 = scalar_lea.vmem %s5, %s331
      %s333 = smul.u32 2, %s21
      %v334 = vld [vmem:[%s319] sm:$0x1]
      %v335 = vld [vmem:[%s319 + $0x1] sm:$0x1]
      %v336 = vld [vmem:[%s319 + $0x2] sm:$0x1]
      %v337 = vld [vmem:[%s319 + $0x3] sm:$0x1]
      %v338 = vld [vmem:[%s323] sm:$0x1]
      %v339 = vld [vmem:[%s323 + $0x1] sm:$0x1]
      %v340 = vld [vmem:[%s323 + $0x2] sm:$0x1]
      %v341 = vld [vmem:[%s323 + $0x3] sm:$0x1]
      %v342 = vld [vmem:[%s304] sm:$0xff]
      %v343 = vld [vmem:[%s304 + $0x8] sm:$0xff]
      %v344 = vld [vmem:[%s304 + $0x10] sm:$0xff]
      %v345 = vld [vmem:[%s304 + $0x18] sm:$0xff]
      %v346 = vld [vmem:[%s304 + $0x20] sm:$0xff]
      %v347 = vld [vmem:[%s304 + $0x28] sm:$0xff]
      %v348 = vld [vmem:[%s304 + $0x30] sm:$0xff]
      %v349 = vld [vmem:[%s304 + $0x38] sm:$0xff]
      %v350 = vld [vmem:[%s314] sm:$0xff]
      %v351 = vld [vmem:[%s314 + $0x8] sm:$0xff]
      %v352 = vld [vmem:[%s314 + $0x10] sm:$0xff]
      %v353 = vld [vmem:[%s314 + $0x18] sm:$0xff]
      %v354 = vld [vmem:[%s314 + $0x20] sm:$0xff]
      %v355 = vld [vmem:[%s314 + $0x28] sm:$0xff]
      %v356 = vld [vmem:[%s314 + $0x30] sm:$0xff]
      %v357 = vld [vmem:[%s314 + $0x38] sm:$0xff]
      %v362 = vlaneseq
      %v363 = vshrl.u32 %v362, 7
      %v364 = vsub.s32 0, %v363
      %v365 = vrot.slane %v334, %v364
      %v366 = vlaneseq
      %v367 = vshrl.u32 %v366, 7
      %v368 = vsub.s32 0, %v367
      %v369 = vrot.slane %v335, %v368
      %v370 = vlaneseq
      %v371 = vshrl.u32 %v370, 7
      %v372 = vsub.s32 0, %v371
      %v373 = vrot.slane %v336, %v372
      %v374 = vlaneseq
      %v375 = vshrl.u32 %v374, 7
      %v376 = vsub.s32 0, %v375
      %v377 = vrot.slane %v337, %v376
      %v382 = vmul.f32 %v365, %v342
      %v383 = vmul.f32 %v365, %v343
      %v384 = vmul.f32 %v369, %v344
      %v385 = vmul.f32 %v369, %v345
      %v386 = vmul.f32 %v373, %v346
      %v387 = vmul.f32 %v373, %v347
      %v388 = vmul.f32 %v377, %v348
      %v389 = vmul.f32 %v377, %v349
      %v394 = vlaneseq
      %v395 = vshrl.u32 %v394, 7
      %v396 = vsub.s32 0, %v395
      %v397 = vrot.slane %v338, %v396
      %v398 = vlaneseq
      %v399 = vshrl.u32 %v398, 7
      %v400 = vsub.s32 0, %v399
      %v401 = vrot.slane %v339, %v400
      %v402 = vlaneseq
      %v403 = vshrl.u32 %v402, 7
      %v404 = vsub.s32 0, %v403
      %v405 = vrot.slane %v340, %v404
      %v406 = vlaneseq
      %v407 = vshrl.u32 %v406, 7
      %v408 = vsub.s32 0, %v407
      %v409 = vrot.slane %v341, %v408
      %v414 = vmul.f32 %v397, %v350
      %v415 = vmul.f32 %v397, %v351
      %v416 = vmul.f32 %v401, %v352
      %v417 = vmul.f32 %v401, %v353
      %v418 = vmul.f32 %v405, %v354
      %v419 = vmul.f32 %v405, %v355
      %v420 = vmul.f32 %v409, %v356
      %v421 = vmul.f32 %v409, %v357
      %v422 = vsub.f32 %v382, %v414
      %v423 = vsub.f32 %v383, %v415
      %v424 = vsub.f32 %v384, %v416
      %v425 = vsub.f32 %v385, %v417
      %v426 = vsub.f32 %v386, %v418
      %v427 = vsub.f32 %v387, %v419
      %v428 = vsub.f32 %v388, %v420
      %v429 = vsub.f32 %v389, %v421
      %v430 = vmul.f32 %v365, %v350
      %v431 = vmul.f32 %v365, %v351
      %v432 = vmul.f32 %v369, %v352
      %v433 = vmul.f32 %v369, %v353
      %v434 = vmul.f32 %v373, %v354
      %v435 = vmul.f32 %v373, %v355
      %v436 = vmul.f32 %v377, %v356
      %v437 = vmul.f32 %v377, %v357
      %v438 = vmul.f32 %v397, %v342
      %v439 = vmul.f32 %v397, %v343
      %v440 = vmul.f32 %v401, %v344
      %v441 = vmul.f32 %v401, %v345
      %v442 = vmul.f32 %v405, %v346
      %v443 = vmul.f32 %v405, %v347
      %v444 = vmul.f32 %v409, %v348
      %v445 = vmul.f32 %v409, %v349
      %v446 = vadd.f32 %v430, %v438
      %v447 = vadd.f32 %v431, %v439
      %v448 = vadd.f32 %v432, %v440
      %v449 = vadd.f32 %v433, %v441
      %v450 = vadd.f32 %v434, %v442
      %v451 = vadd.f32 %v435, %v443
      %v452 = vadd.f32 %v436, %v444
      %v453 = vadd.f32 %v437, %v445
      %462 = vrot.lane.b32.xlu0 %v446, 32
      %v463 = vpop.permute.xlu0 %462
      %464 = vrot.lane.b32.xlu0 %v447, 32
      %v465 = vpop.permute.xlu0 %464
      %466 = vrot.lane.b32.xlu0 %v448, 32
      %v467 = vpop.permute.xlu0 %466
      %468 = vrot.lane.b32.xlu0 %v449, 32
      %v469 = vpop.permute.xlu0 %468
      %470 = vrot.lane.b32.xlu0 %v450, 32
      %v471 = vpop.permute.xlu0 %470
      %472 = vrot.lane.b32.xlu0 %v451, 32
      %v473 = vpop.permute.xlu0 %472
      %474 = vrot.lane.b32.xlu0 %v452, 32
      %v475 = vpop.permute.xlu0 %474
      %476 = vrot.lane.b32.xlu0 %v453, 32
      %v477 = vpop.permute.xlu0 %476
      %vm486 = vcmask 261120
      %v487 = vsel %vm486, %v422, %v463
      %v488 = vsel %vm486, %v423, %v465
      %v489 = vsel %vm486, %v424, %v467
      %v490 = vsel %vm486, %v425, %v469
      %v491 = vsel %vm486, %v426, %v471
      %v492 = vsel %vm486, %v427, %v473
      %v493 = vsel %vm486, %v428, %v475
      %v494 = vsel %vm486, %v429, %v477
      %v495 = vld [vmem:[%s4] sm:$0xff]
      %v496 = vld [vmem:[%s4 + $0x8] sm:$0xff]
      %v497 = vld [vmem:[%s4 + $0x10] sm:$0xff]
      %v498 = vld [vmem:[%s4 + $0x18] sm:$0xff]
      %v499 = vld [vmem:[%s4 + $0x20] sm:$0xff]
      %v500 = vld [vmem:[%s4 + $0x28] sm:$0xff]
      %v501 = vld [vmem:[%s4 + $0x30] sm:$0xff]
      %v502 = vld [vmem:[%s4 + $0x38] sm:$0xff]
      %v503 = vld [vmem:[%s4 + $0x40] sm:$0xff]
      %v504 = vld [vmem:[%s4 + $0x48] sm:$0xff]
      %v505 = vld [vmem:[%s4 + $0x50] sm:$0xff]
      %v506 = vld [vmem:[%s4 + $0x58] sm:$0xff]
      %v507 = vld [vmem:[%s4 + $0x60] sm:$0xff]
      %v508 = vld [vmem:[%s4 + $0x68] sm:$0xff]
      %v509 = vld [vmem:[%s4 + $0x70] sm:$0xff]
      %v510 = vld [vmem:[%s4 + $0x78] sm:$0xff]
      %v511 = vld [vmem:[%s4 + $0x80] sm:$0xff]
      %v512 = vld [vmem:[%s4 + $0x88] sm:$0xff]
      %v513 = vld [vmem:[%s4 + $0x90] sm:$0xff]
      %v514 = vld [vmem:[%s4 + $0x98] sm:$0xff]
      %v515 = vld [vmem:[%s4 + $0xa0] sm:$0xff]
      %v516 = vld [vmem:[%s4 + $0xa8] sm:$0xff]
      %v517 = vld [vmem:[%s4 + $0xb0] sm:$0xff]
      %v518 = vld [vmem:[%s4 + $0xb8] sm:$0xff]
      %v519 = vld [vmem:[%s4 + $0xc0] sm:$0xff]
      %v520 = vld [vmem:[%s4 + $0xc8] sm:$0xff]
      %v521 = vld [vmem:[%s4 + $0xd0] sm:$0xff]
      %v522 = vld [vmem:[%s4 + $0xd8] sm:$0xff]
      %v523 = vld [vmem:[%s4 + $0xe0] sm:$0xff]
      %v524 = vld [vmem:[%s4 + $0xe8] sm:$0xff]
      %v525 = vld [vmem:[%s4 + $0xf0] sm:$0xff]
      %v526 = vld [vmem:[%s4 + $0xf8] sm:$0xff]
      %vm527 = vcmask 523264
      %v529 = vsel %vm527, %v487, 0
      %v532 = vsel %vm527, %v488, 0
      %534 = vmatprep.subr.mxu0 0.0
      %535 = vmatpush1.msra.mxu0 %v495
      %536 = vmatprep.subr.mxu0 0.0
      %537 = vmatpush1.msra.mxu0 %v496
      %538 = vmatprep.subr.mxu0 0.0
      %539 = vmatpush1.msra.mxu0 %v497
      %540 = vmatprep.subr.mxu0 0.0
      %541 = vmatpush1.msra.mxu0 %v498
      %542 = vmatprep.subr.mxu0 0.0
      %543 = vmatpush1.msra.mxu0 %v499
      %544 = vmatprep.subr.mxu0 0.0
      %545 = vmatpush1.msra.mxu0 %v500
      %546 = vmatprep.subr.mxu0 0.0
      %547 = vmatpush1.msra.mxu0 %v501
      %548 = vmatprep.subr.mxu0 0.0
      %549 = vmatpush1.msra.mxu0 %v502
      %550 = vmatprep.subr.mxu0 0.0
      %551 = vmatpush1.msra.mxu0 0.0
      %552 = vmatprep.subr.mxu0 0.0
      %553 = vmatpush1.msra.mxu0 0.0
      %554 = vmatprep.subr.mxu0 0.0
      %555 = vmatpush1.msra.mxu0 0.0
      %556 = vmatprep.subr.mxu0 0.0
      %557 = vmatpush1.msra.mxu0 0.0
      %558 = vmatprep.subr.mxu0 0.0
      %559 = vmatpush1.msra.mxu0 0.0
      %560 = vmatprep.subr.mxu0 0.0
      %561 = vmatpush1.msra.mxu0 0.0
      %562 = vmatprep.subr.mxu0 0.0
      %563 = vmatpush1.msra.mxu0 0.0
      %564 = vmatprep.subr.mxu0 0.0
      %565 = vmatpush1.msra.mxu0 0.0
      %566 = vmatprep.subr.mxu0 0.0
      %567 = vmatpush1.msra.mxu0 0.0
      %568 = vmatprep.subr.mxu0 0.0
      %569 = vmatpush1.msra.mxu0 0.0
      %570 = vmatprep.subr.mxu0 0.0
      %571 = vmatpush1.msra.mxu0 0.0
      %572 = vmatprep.subr.mxu0 0.0
      %573 = vmatpush1.msra.mxu0 0.0
      %574 = vmatprep.subr.mxu0 0.0
      %575 = vmatpush1.msra.mxu0 0.0
      %576 = vmatprep.subr.mxu0 0.0
      %577 = vmatpush1.msra.mxu0 0.0
      %578 = vmatprep.subr.mxu0 0.0
      %579 = vmatpush1.msra.mxu0 0.0
      %580 = vmatprep.subr.mxu0 0.0
      %581 = vmatpush1.msra.mxu0 0.0
      %582 = vmatprep.subr.mxu0 0.0
      %583 = vmatpush1.msra.mxu0 0.0
      %584 = vmatprep.subr.mxu0 0.0
      %585 = vmatpush1.msra.mxu0 0.0
      %586 = vmatprep.subr.mxu0 0.0
      %587 = vmatpush1.msra.mxu0 0.0
      %588 = vmatprep.subr.mxu0 0.0
      %589 = vmatpush1.msra.mxu0 0.0
      %590 = vmatprep.subr.mxu0 0.0
      %591 = vmatpush1.msra.mxu0 0.0
      %592 = vmatprep.subr.mxu0 0.0
      %593 = vmatpush1.msra.mxu0 0.0
      %594 = vmatprep.subr.mxu0 0.0
      %595 = vmatpush1.msra.mxu0 0.0
      %596 = vmatprep.subr.mxu0 0.0
      %597 = vmatpush1.msra.mxu0 0.0
      %598 = vmatprep.mubr.f32.mxu0 0.0
      %599 = vmatmul.mubr.f32.gmra.mrb[0].mxu0 %v529
      %v600 = vpop.f32.mrb[0].mxu0
      %v601 = vadd.f32 0.0, %v600
      %v602 = vpop.f32.mrb[0].mxu0
      %603 = vmatprep.mubr.f32.mxu0 0.0
      %604 = vmatmul.mubr.f32.gmra.mrb[0].mxu0 %v532
      %v605 = vpop.f32.mrb[0].mxu0
      %v606 = vadd.f32 0.0, %v605
      %v607 = vpop.f32.mrb[0].mxu0
      %608 = vdwg.mxu0
      %v610 = vsel %vm527, %v489, 0
      %v613 = vsel %vm527, %v490, 0
      %615 = vmatprep.subr.mxu0 0.0
      %616 = vmatpush1.msra.mxu0 %v503
      %617 = vmatprep.subr.mxu0 0.0
      %618 = vmatpush1.msra.mxu0 %v504
      %619 = vmatprep.subr.mxu0 0.0
      %620 = vmatpush1.msra.mxu0 %v505
      %621 = vmatprep.subr.mxu0 0.0
      %622 = vmatpush1.msra.mxu0 %v506
      %623 = vmatprep.subr.mxu0 0.0
      %624 = vmatpush1.msra.mxu0 %v507
      %625 = vmatprep.subr.mxu0 0.0
      %626 = vmatpush1.msra.mxu0 %v508
      %627 = vmatprep.subr.mxu0 0.0
      %628 = vmatpush1.msra.mxu0 %v509
      %629 = vmatprep.subr.mxu0 0.0
      %630 = vmatpush1.msra.mxu0 %v510
      %631 = vmatprep.subr.mxu0 0.0
      %632 = vmatpush1.msra.mxu0 0.0
      %633 = vmatprep.subr.mxu0 0.0
      %634 = vmatpush1.msra.mxu0 0.0
      %635 = vmatprep.subr.mxu0 0.0
      %636 = vmatpush1.msra.mxu0 0.0
      %637 = vmatprep.subr.mxu0 0.0
      %638 = vmatpush1.msra.mxu0 0.0
      %639 = vmatprep.subr.mxu0 0.0
      %640 = vmatpush1.msra.mxu0 0.0
      %641 = vmatprep.subr.mxu0 0.0
      %642 = vmatpush1.msra.mxu0 0.0
      %643 = vmatprep.subr.mxu0 0.0
      %644 = vmatpush1.msra.mxu0 0.0
      %645 = vmatprep.subr.mxu0 0.0
      %646 = vmatpush1.msra.mxu0 0.0
      %647 = vmatprep.subr.mxu0 0.0
      %648 = vmatpush1.msra.mxu0 0.0
      %649 = vmatprep.subr.mxu0 0.0
      %650 = vmatpush1.msra.mxu0 0.0
      %651 = vmatprep.subr.mxu0 0.0
      %652 = vmatpush1.msra.mxu0 0.0
      %653 = vmatprep.subr.mxu0 0.0
      %654 = vmatpush1.msra.mxu0 0.0
      %655 = vmatprep.subr.mxu0 0.0
      %656 = vmatpush1.msra.mxu0 0.0
      %657 = vmatprep.subr.mxu0 0.0
      %658 = vmatpush1.msra.mxu0 0.0
      %659 = vmatprep.subr.mxu0 0.0
      %660 = vmatpush1.msra.mxu0 0.0
      %661 = vmatprep.subr.mxu0 0.0
      %662 = vmatpush1.msra.mxu0 0.0
      %663 = vmatprep.subr.mxu0 0.0
      %664 = vmatpush1.msra.mxu0 0.0
      %665 = vmatprep.subr.mxu0 0.0
      %666 = vmatpush1.msra.mxu0 0.0
      %667 = vmatprep.subr.mxu0 0.0
      %668 = vmatpush1.msra.mxu0 0.0
      %669 = vmatprep.subr.mxu0 0.0
      %670 = vmatpush1.msra.mxu0 0.0
      %671 = vmatprep.subr.mxu0 0.0
      %672 = vmatpush1.msra.mxu0 0.0
      %673 = vmatprep.subr.mxu0 0.0
      %674 = vmatpush1.msra.mxu0 0.0
      %675 = vmatprep.subr.mxu0 0.0
      %676 = vmatpush1.msra.mxu0 0.0
      %677 = vmatprep.subr.mxu0 0.0
      %678 = vmatpush1.msra.mxu0 0.0
      %679 = vmatprep.mubr.f32.mxu0 0.0
      %680 = vmatmul.mubr.f32.gmra.mrb[0].mxu0 %v610
      %v681 = vpop.f32.mrb[0].mxu0
      %v682 = vadd.f32 0.0, %v681
      %v683 = vpop.f32.mrb[0].mxu0
      %684 = vmatprep.mubr.f32.mxu0 0.0
      %685 = vmatmul.mubr.f32.gmra.mrb[0].mxu0 %v613
      %v686 = vpop.f32.mrb[0].mxu0
      %v687 = vadd.f32 0.0, %v686
      %v688 = vpop.f32.mrb[0].mxu0
      %689 = vdwg.mxu0
      %v691 = vsel %vm527, %v491, 0
      %v694 = vsel %vm527, %v492, 0
      %696 = vmatprep.subr.mxu0 0.0
      %697 = vmatpush1.msra.mxu0 %v511
      %698 = vmatprep.subr.mxu0 0.0
      %699 = vmatpush1.msra.mxu0 %v512
      %700 = vmatprep.subr.mxu0 0.0
      %701 = vmatpush1.msra.mxu0 %v513
      %702 = vmatprep.subr.mxu0 0.0
      %703 = vmatpush1.msra.mxu0 %v514
      %704 = vmatprep.subr.mxu0 0.0
      %705 = vmatpush1.msra.mxu0 %v515
      %706 = vmatprep.subr.mxu0 0.0
      %707 = vmatpush1.msra.mxu0 %v516
      %708 = vmatprep.subr.mxu0 0.0
      %709 = vmatpush1.msra.mxu0 %v517
      %710 = vmatprep.subr.mxu0 0.0
      %711 = vmatpush1.msra.mxu0 %v518
      %712 = vmatprep.subr.mxu0 0.0
      %713 = vmatpush1.msra.mxu0 0.0
      %714 = vmatprep.subr.mxu0 0.0
      %715 = vmatpush1.msra.mxu0 0.0
      %716 = vmatprep.subr.mxu0 0.0
      %717 = vmatpush1.msra.mxu0 0.0
      %718 = vmatprep.subr.mxu0 0.0
      %719 = vmatpush1.msra.mxu0 0.0
      %720 = vmatprep.subr.mxu0 0.0
      %721 = vmatpush1.msra.mxu0 0.0
      %722 = vmatprep.subr.mxu0 0.0
      %723 = vmatpush1.msra.mxu0 0.0
      %724 = vmatprep.subr.mxu0 0.0
      %725 = vmatpush1.msra.mxu0 0.0
      %726 = vmatprep.subr.mxu0 0.0
      %727 = vmatpush1.msra.mxu0 0.0
      %728 = vmatprep.subr.mxu0 0.0
      %729 = vmatpush1.msra.mxu0 0.0
      %730 = vmatprep.subr.mxu0 0.0
      %731 = vmatpush1.msra.mxu0 0.0
      %732 = vmatprep.subr.mxu0 0.0
      %733 = vmatpush1.msra.mxu0 0.0
      %734 = vmatprep.subr.mxu0 0.0
      %735 = vmatpush1.msra.mxu0 0.0
      %736 = vmatprep.subr.mxu0 0.0
      %737 = vmatpush1.msra.mxu0 0.0
      %738 = vmatprep.subr.mxu0 0.0
      %739 = vmatpush1.msra.mxu0 0.0
      %740 = vmatprep.subr.mxu0 0.0
      %741 = vmatpush1.msra.mxu0 0.0
      %742 = vmatprep.subr.mxu0 0.0
      %743 = vmatpush1.msra.mxu0 0.0
      %744 = vmatprep.subr.mxu0 0.0
      %745 = vmatpush1.msra.mxu0 0.0
      %746 = vmatprep.subr.mxu0 0.0
      %747 = vmatpush1.msra.mxu0 0.0
      %748 = vmatprep.subr.mxu0 0.0
      %749 = vmatpush1.msra.mxu0 0.0
      %750 = vmatprep.subr.mxu0 0.0
      %751 = vmatpush1.msra.mxu0 0.0
      %752 = vmatprep.subr.mxu0 0.0
      %753 = vmatpush1.msra.mxu0 0.0
      %754 = vmatprep.subr.mxu0 0.0
      %755 = vmatpush1.msra.mxu0 0.0
      %756 = vmatprep.subr.mxu0 0.0
      %757 = vmatpush1.msra.mxu0 0.0
      %758 = vmatprep.subr.mxu0 0.0
      %759 = vmatpush1.msra.mxu0 0.0
      %760 = vmatprep.mubr.f32.mxu0 0.0
      %761 = vmatmul.mubr.f32.gmra.mrb[0].mxu0 %v691
      %v762 = vpop.f32.mrb[0].mxu0
      %v763 = vadd.f32 0.0, %v762
      %v764 = vpop.f32.mrb[0].mxu0
      %765 = vmatprep.mubr.f32.mxu0 0.0
      %766 = vmatmul.mubr.f32.gmra.mrb[0].mxu0 %v694
      %v767 = vpop.f32.mrb[0].mxu0
      %v768 = vadd.f32 0.0, %v767
      %v769 = vpop.f32.mrb[0].mxu0
      %770 = vdwg.mxu0
      %v772 = vsel %vm527, %v493, 0
      %v775 = vsel %vm527, %v494, 0
      %777 = vmatprep.subr.mxu0 0.0
      %778 = vmatpush1.msra.mxu0 %v519
      %779 = vmatprep.subr.mxu0 0.0
      %780 = vmatpush1.msra.mxu0 %v520
      %781 = vmatprep.subr.mxu0 0.0
      %782 = vmatpush1.msra.mxu0 %v521
      %783 = vmatprep.subr.mxu0 0.0
      %784 = vmatpush1.msra.mxu0 %v522
      %785 = vmatprep.subr.mxu0 0.0
      %786 = vmatpush1.msra.mxu0 %v523
      %787 = vmatprep.subr.mxu0 0.0
      %788 = vmatpush1.msra.mxu0 %v524
      %789 = vmatprep.subr.mxu0 0.0
      %790 = vmatpush1.msra.mxu0 %v525
      %791 = vmatprep.subr.mxu0 0.0
      %792 = vmatpush1.msra.mxu0 %v526
      %793 = vmatprep.subr.mxu0 0.0
      %794 = vmatpush1.msra.mxu0 0.0
      %795 = vmatprep.subr.mxu0 0.0
      %796 = vmatpush1.msra.mxu0 0.0
      %797 = vmatprep.subr.mxu0 0.0
      %798 = vmatpush1.msra.mxu0 0.0
      %799 = vmatprep.subr.mxu0 0.0
      %800 = vmatpush1.msra.mxu0 0.0
      %801 = vmatprep.subr.mxu0 0.0
      %802 = vmatpush1.msra.mxu0 0.0
      %803 = vmatprep.subr.mxu0 0.0
      %804 = vmatpush1.msra.mxu0 0.0
      %805 = vmatprep.subr.mxu0 0.0
      %806 = vmatpush1.msra.mxu0 0.0
      %807 = vmatprep.subr.mxu0 0.0
      %808 = vmatpush1.msra.mxu0 0.0
      %809 = vmatprep.subr.mxu0 0.0
      %810 = vmatpush1.msra.mxu0 0.0
      %811 = vmatprep.subr.mxu0 0.0
      %812 = vmatpush1.msra.mxu0 0.0
      %813 = vmatprep.subr.mxu0 0.0
      %814 = vmatpush1.msra.mxu0 0.0
      %815 = vmatprep.subr.mxu0 0.0
      %816 = vmatpush1.msra.mxu0 0.0
      %817 = vmatprep.subr.mxu0 0.0
      %818 = vmatpush1.msra.mxu0 0.0
      %819 = vmatprep.subr.mxu0 0.0
      %820 = vmatpush1.msra.mxu0 0.0
      %821 = vmatprep.subr.mxu0 0.0
      %822 = vmatpush1.msra.mxu0 0.0
      %823 = vmatprep.subr.mxu0 0.0
      %824 = vmatpush1.msra.mxu0 0.0
      %825 = vmatprep.subr.mxu0 0.0
      %826 = vmatpush1.msra.mxu0 0.0
      %827 = vmatprep.subr.mxu0 0.0
      %828 = vmatpush1.msra.mxu0 0.0
      %829 = vmatprep.subr.mxu0 0.0
      %830 = vmatpush1.msra.mxu0 0.0
      %831 = vmatprep.subr.mxu0 0.0
      %832 = vmatpush1.msra.mxu0 0.0
      %833 = vmatprep.subr.mxu0 0.0
      %834 = vmatpush1.msra.mxu0 0.0
      %835 = vmatprep.subr.mxu0 0.0
      %836 = vmatpush1.msra.mxu0 0.0
      %837 = vmatprep.subr.mxu0 0.0
      %838 = vmatpush1.msra.mxu0 0.0
      %839 = vmatprep.subr.mxu0 0.0
      %840 = vmatpush1.msra.mxu0 0.0
      %841 = vmatprep.mubr.f32.mxu0 0.0
      %842 = vmatmul.mubr.f32.gmra.mrb[0].mxu0 %v772
      %v843 = vpop.f32.mrb[0].mxu0
      %v844 = vadd.f32 0.0, %v843
      %v845 = vpop.f32.mrb[0].mxu0
      %846 = vmatprep.mubr.f32.mxu0 0.0
      %847 = vmatmul.mubr.f32.gmra.mrb[0].mxu0 %v775
      %v848 = vpop.f32.mrb[0].mxu0
      %v849 = vadd.f32 0.0, %v848
      %v850 = vpop.f32.mrb[0].mxu0
      %851 = vdwg.mxu0
      %852 = vst.msk [vmem:[%s332] sm:$0xff] %vm527, %v601
      %853 = vst.msk [vmem:[%s332 + $0x8] sm:$0xff] %vm527, %v606
      %854 = vst.msk [vmem:[%s332 + $0x10] sm:$0xff] %vm527, %v682
      %855 = vst.msk [vmem:[%s332 + $0x18] sm:$0xff] %vm527, %v687
      %856 = vst.msk [vmem:[%s332 + $0x20] sm:$0xff] %vm527, %v763
      %857 = vst.msk [vmem:[%s332 + $0x28] sm:$0xff] %vm527, %v768
      %858 = vst.msk [vmem:[%s332 + $0x30] sm:$0xff] %vm527, %v844
      %859 = vst.msk [vmem:[%s332 + $0x38] sm:$0xff] %vm527, %v849
      %s860 = smul.u32 2, %s21
      %p861 = scmp.lt.s32.totalorder %s20, 1
      %s862 = scalar_select %p861, %s20, 1
      %p863 = scmp.lt.s32.totalorder %s860, 1
      %s864 = scalar_select %p863, %s860, 1
      %s865 = smul.addr %s862, 8
      %s866 = sadd.s32 %s864, %s865
      %s867 = smul.addr %s866, 8
      %s868 = scalar_lea.vmem %s5, %s867
      // Predicated region
      $region41: #{ffno_forward.7} parent=39 // pred_check
        %p869 = pneg %p177
      $region42: #{ffno_forward.7} parent=39 // pred_check_branch
        %871 = sbr.rel (%p869) target = $region44
      $region43: #{ffno_forward.7} parent=39 // pred_region
        %s872 = smul.u32 2, %s21
      $region44: #{ffno_forward.7} parent=39 // pred_fallthru
        _
    $region40: #{ffno_forward.7} parent=5 // pred_fallthru
      _
    %p873 = scmp.le.s32.totalorder 2, %s11
    // Predicated region
    $region45: #{ffno_forward.7} parent=5 // pred_check
      %p874 = pneg %p873
    $region46: #{ffno_forward.7} parent=5 // pred_check_branch
      %876 = sbr.rel (%p874) target = $region48
    $region47: #{ffno_forward.7} parent=5 // pred_region
      %s877 = ssub.s32 %s11, 2
      // Predicated region
      $region49: #{ffno_forward.7} parent=47 // pred_check
        %p878 = pneg %p183
      $region50: #{ffno_forward.7} parent=47 // pred_check_branch
        %880 = sbr.rel (%p878) target = $region52
      $region51: #{ffno_forward.7} parent=47 // pred_region
        %s881 = smul.u32 2, %s23
        %p882 = scmp.lt.s32.totalorder %s22, 1
        %s883 = scalar_select %p882, %s22, 1
        %p884 = scmp.lt.s32.totalorder %s881, 1
        %s885 = scalar_select %p884, %s881, 1
        %s886 = smul.addr %s883, 8
        %s887 = sadd.s32 %s885, %s886
        %s888 = smul.addr %s887, 8
        %s889 = scalar_lea.vmem %s5, %s888
      $region52: #{ffno_forward.7} parent=47 // pred_fallthru
        _
    $region48: #{ffno_forward.7} parent=5 // pred_fallthru
      _
  $region6: #{ffno_forward.7} parent=0 // loop_footer
    %s15 = sadd.s32 1, %s11
  $region7: #{ffno_forward.7} parent=0 // loop_footer_branch
    %10 = sbr.rel target = $region3
  $region8: #{ffno_forward.7} parent=0 // loop_exit
    _

// kernel: ffno_forward.8
$region0: #{ffno_forward.8}
  #allocation0 [shape = 'u32[]', space=smem, size = 0x4, offset = 0x4, fixed_abs, tag = 'smem constant byte address 0x4 - core index']
  #allocation1 [shape = 'u32[144,128]{1,0:T(1,128)}', space=vmem, size = 0x12000, scoped, tag = 'internal scratch']
  %s0 = inlined_call_operand.vmem [shape: f32[2,32,256], index: 0, kind: input, shape index: {}]
  %s1 = inlined_call_operand.vmem [shape: f32[2,32,256], index: 1, kind: input, shape index: {}]
  %s2 = inlined_call_operand.vmem [shape: f32[2,32,1], index: 2, kind: input, shape index: {}]
  %s3 = inlined_call_operand.vmem [shape: bf16[64,32], index: 3, kind: input, shape index: {}]
  %s4 = inlined_call_operand.vmem [shape: f32[64,1], index: 4, kind: input, shape index: {}]
  %s5 = inlined_call_operand.vmem [shape: bf16[32,64], index: 5, kind: input, shape index: {}]
  %s6 = inlined_call_operand.vmem [shape: f32[32,1], index: 6, kind: input, shape index: {}]
  %s7 = inlined_call_operand.vmem [shape: f32[2,32,256], index: 7, kind: output, shape index: {}]
  %s8 = sld [smem:[#allocation0]]
  $region61: #{ffno_forward.8} parent=0
    _
  %s10 = ssub.s32 1, %s8
  %s11 = scalar_select 0, %s10, %s8
  loop: start=0, step=1, limit=4
  $region2: #{ffno_forward.8} parent=0 // loop_pre_header
    _
  $region3: #{ffno_forward.8} parent=0 // loop_header
    %s13 = sphi 0, %s17
    %p14 = scmp.ge.s32.totalorder %s13, 4
    %s20 = sphi 0, %s32
    %s21 = sphi 0, %s28
    %s22 = sphi 0, %s20
    %s23 = sphi 0, %s21
    %s24 = sphi 0, %s22
    %s25 = sphi 0, %s23
    %s37 = sphi 0, %s39
    %s40 = sphi 0, %s37
    %s41 = sphi 0, %s40
    %s57 = sphi 0, %s41
    %s65 = sphi 0, %s67
    %s68 = sphi 0, %s65
    %s69 = sphi 0, %s68
    %s85 = sphi 0, %s69
    %s91 = sphi 0, %s93
    %s94 = sphi 0, %s91
    %s95 = sphi 0, %s94
    %s111 = sphi 0, %s95
    %s115 = sphi 0, %s115
    %s117 = sphi 0, %s115
    %s118 = sphi 0, %s117
    %s132 = sphi 0, %s118
    %s136 = sphi 0, %s136
    %s138 = sphi 0, %s136
    %s139 = sphi 0, %s138
    %s153 = sphi 0, %s139
    %s157 = sphi 0, %s157
    %s159 = sphi 0, %s157
    %s160 = sphi 0, %s159
    %s174 = sphi 0, %s160
    %s178 = sphi 0, %s178
    %s180 = sphi 0, %s178
    %s181 = sphi 0, %s180
    %s195 = sphi 0, %s181
    %s203 = sphi 0, %s205
    %s206 = sphi 0, %s203
    %s207 = sphi 0, %s206
    %s223 = sphi 0, %s207
  $region4: #{ffno_forward.8} parent=0 // loop_header_branch
    %16 = sbr.rel (%p14) target = $region8
  $region5: #{ffno_forward.8} parent=0 // loop_body
    %s18 = ssub.s32 %s13, 1
    %s19 = ssub.s32 %s13, 2
    %s26 = sadd.s32 1, %s21
    %p27 = scmp.ge.s32.totalorder %s26, 1
    %s28 = scalar_select %p27, 0, %s26
    %s29 = sadd.s32 1, %s20
    %s30 = scalar_select %p27, %s29, %s20
    %p31 = scmp.ge.s32.totalorder %s30, 2
    %s32 = scalar_select %p31, 0, %s30
    %s33 = ssub.s32 %s20, %s32
    %s34 = ssub.s32 %s21, %s28
    %s35 = sor.u32 %s33, %s34
    %p36 = scmp.eq.s32.totalorder %s35, 0
    %s38 = sadd.s32 %s37, 1
    %s39 = scalar_select %p36, %s37, %s38
    %p42 = pneg %p36
    %p43 = scmp.eq.s32.totalorder %s13, 1
    %p44 = por %p42, %p43
    %p45 = scmp.ne.s32.totalorder %s37, %s40
    %p46 = scmp.eq.s32.totalorder %s13, 0
    %p47 = por %p45, %p46
    %p48 = scmp.ne.s32.totalorder %s37, %s40
    %p49 = scmp.eq.s32.totalorder %s18, 1
    %p50 = por %p48, %p49
    %p51 = scmp.ne.s32.totalorder %s40, %s41
    %p52 = scmp.eq.s32.totalorder %s18, 0
    %p53 = por %p51, %p52
    %p54 = scmp.ne.s32.totalorder %s40, %s41
    %p55 = scmp.eq.s32.totalorder %s19, 1
    %p56 = por %p54, %p55
    %p58 = scmp.ne.s32.totalorder %s41, %s57
    %p59 = scmp.eq.s32.totalorder %s19, 0
    %p60 = por %p58, %p59
    %s61 = ssub.s32 %s20, %s32
    %s62 = ssub.s32 %s21, %s28
    %s63 = sor.u32 %s61, %s62
    %p64 = scmp.eq.s32.totalorder %s63, 0
    %s66 = sadd.s32 %s65, 1
    %s67 = scalar_select %p64, %s65, %s66
    %p70 = pneg %p64
    %p71 = scmp.eq.s32.totalorder %s13, 1
    %p72 = por %p70, %p71
    %p73 = scmp.ne.s32.totalorder %s65, %s68
    %p74 = scmp.eq.s32.totalorder %s13, 0
    %p75 = por %p73, %p74
    %p76 = scmp.ne.s32.totalorder %s65, %s68
    %p77 = scmp.eq.s32.totalorder %s18, 1
    %p78 = por %p76, %p77
    %p79 = scmp.ne.s32.totalorder %s68, %s69
    %p80 = scmp.eq.s32.totalorder %s18, 0
    %p81 = por %p79, %p80
    %p82 = scmp.ne.s32.totalorder %s68, %s69
    %p83 = scmp.eq.s32.totalorder %s19, 1
    %p84 = por %p82, %p83
    %p86 = scmp.ne.s32.totalorder %s69, %s85
    %p87 = scmp.eq.s32.totalorder %s19, 0
    %p88 = por %p86, %p87
    %s89 = ssub.s32 %s20, %s32
    %p90 = scmp.eq.s32.totalorder %s89, 0
    %s92 = sadd.s32 %s91, 1
    %s93 = scalar_select %p90, %s91, %s92
    %p96 = pneg %p90
    %p97 = scmp.eq.s32.totalorder %s13, 1
    %p98 = por %p96, %p97
    %p99 = scmp.ne.s32.totalorder %s91, %s94
    %p100 = scmp.eq.s32.totalorder %s13, 0
    %p101 = por %p99, %p100
    %p102 = scmp.ne.s32.totalorder %s91, %s94
    %p103 = scmp.eq.s32.totalorder %s18, 1
    %p104 = por %p102, %p103
    %p105 = scmp.ne.s32.totalorder %s94, %s95
    %p106 = scmp.eq.s32.totalorder %s18, 0
    %p107 = por %p105, %p106
    %p108 = scmp.ne.s32.totalorder %s94, %s95
    %p109 = scmp.eq.s32.totalorder %s19, 1
    %p110 = por %p108, %p109
    %p112 = scmp.ne.s32.totalorder %s95, %s111
    %p113 = scmp.eq.s32.totalorder %s19, 0
    %p114 = por %p112, %p113
    %s116 = sadd.s32 %s115, 1
    %p119 = scmp.eq.s32.totalorder %s13, 1
    %p120 = scmp.ne.s32.totalorder %s115, %s117
    %p121 = scmp.eq.s32.totalorder %s13, 0
    %p122 = por %p120, %p121
    %p123 = scmp.ne.s32.totalorder %s115, %s117
    %p124 = scmp.eq.s32.totalorder %s18, 1
    %p125 = por %p123, %p124
    %p126 = scmp.ne.s32.totalorder %s117, %s118
    %p127 = scmp.eq.s32.totalorder %s18, 0
    %p128 = por %p126, %p127
    %p129 = scmp.ne.s32.totalorder %s117, %s118
    %p130 = scmp.eq.s32.totalorder %s19, 1
    %p131 = por %p129, %p130
    %p133 = scmp.ne.s32.totalorder %s118, %s132
    %p134 = scmp.eq.s32.totalorder %s19, 0
    %p135 = por %p133, %p134
    %s137 = sadd.s32 %s136, 1
    %p140 = scmp.eq.s32.totalorder %s13, 1
    %p141 = scmp.ne.s32.totalorder %s136, %s138
    %p142 = scmp.eq.s32.totalorder %s13, 0
    %p143 = por %p141, %p142
    %p144 = scmp.ne.s32.totalorder %s136, %s138
    %p145 = scmp.eq.s32.totalorder %s18, 1
    %p146 = por %p144, %p145
    %p147 = scmp.ne.s32.totalorder %s138, %s139
    %p148 = scmp.eq.s32.totalorder %s18, 0
    %p149 = por %p147, %p148
    %p150 = scmp.ne.s32.totalorder %s138, %s139
    %p151 = scmp.eq.s32.totalorder %s19, 1
    %p152 = por %p150, %p151
    %p154 = scmp.ne.s32.totalorder %s139, %s153
    %p155 = scmp.eq.s32.totalorder %s19, 0
    %p156 = por %p154, %p155
    %s158 = sadd.s32 %s157, 1
    %p161 = scmp.eq.s32.totalorder %s13, 1
    %p162 = scmp.ne.s32.totalorder %s157, %s159
    %p163 = scmp.eq.s32.totalorder %s13, 0
    %p164 = por %p162, %p163
    %p165 = scmp.ne.s32.totalorder %s157, %s159
    %p166 = scmp.eq.s32.totalorder %s18, 1
    %p167 = por %p165, %p166
    %p168 = scmp.ne.s32.totalorder %s159, %s160
    %p169 = scmp.eq.s32.totalorder %s18, 0
    %p170 = por %p168, %p169
    %p171 = scmp.ne.s32.totalorder %s159, %s160
    %p172 = scmp.eq.s32.totalorder %s19, 1
    %p173 = por %p171, %p172
    %p175 = scmp.ne.s32.totalorder %s160, %s174
    %p176 = scmp.eq.s32.totalorder %s19, 0
    %p177 = por %p175, %p176
    %s179 = sadd.s32 %s178, 1
    %p182 = scmp.eq.s32.totalorder %s13, 1
    %p183 = scmp.ne.s32.totalorder %s178, %s180
    %p184 = scmp.eq.s32.totalorder %s13, 0
    %p185 = por %p183, %p184
    %p186 = scmp.ne.s32.totalorder %s178, %s180
    %p187 = scmp.eq.s32.totalorder %s18, 1
    %p188 = por %p186, %p187
    %p189 = scmp.ne.s32.totalorder %s180, %s181
    %p190 = scmp.eq.s32.totalorder %s18, 0
    %p191 = por %p189, %p190
    %p192 = scmp.ne.s32.totalorder %s180, %s181
    %p193 = scmp.eq.s32.totalorder %s19, 1
    %p194 = por %p192, %p193
    %p196 = scmp.ne.s32.totalorder %s181, %s195
    %p197 = scmp.eq.s32.totalorder %s19, 0
    %p198 = por %p196, %p197
    %s199 = ssub.s32 %s20, %s32
    %s200 = ssub.s32 %s21, %s28
    %s201 = sor.u32 %s199, %s200
    %p202 = scmp.eq.s32.totalorder %s201, 0
    %s204 = sadd.s32 %s203, 1
    %s205 = scalar_select %p202, %s203, %s204
    %p208 = pneg %p202
    %p209 = scmp.eq.s32.totalorder %s13, 1
    %p210 = por %p208, %p209
    %p211 = scmp.ne.s32.totalorder %s203, %s206
    %p212 = scmp.eq.s32.totalorder %s13, 0
    %p213 = por %p211, %p212
    %p214 = scmp.ne.s32.totalorder %s203, %s206
    %p215 = scmp.eq.s32.totalorder %s18, 1
    %p216 = por %p214, %p215
    %p217 = scmp.ne.s32.totalorder %s206, %s207
    %p218 = scmp.eq.s32.totalorder %s18, 0
    %p219 = por %p217, %p218
    %p220 = scmp.ne.s32.totalorder %s206, %s207
    %p221 = scmp.eq.s32.totalorder %s19, 1
    %p222 = por %p220, %p221
    %p224 = scmp.ne.s32.totalorder %s207, %s223
    %p225 = scmp.eq.s32.totalorder %s19, 0
    %p226 = por %p224, %p225
    %p227 = scmp.le.s32.totalorder 1, %s13
    %p228 = scmp.lt.s32.totalorder %s13, 3
    %p229 = pnand %p227, %p228
    %p230 = pneg %p229
    // Predicated region
    $region9: #{ffno_forward.8} parent=5 // pred_check
      _
    $region10: #{ffno_forward.8} parent=5 // pred_check_branch
      %232 = sbr.rel (%p229) target = $region12
    $region11: #{ffno_forward.8} parent=5 // pred_region
      %s233 = ssub.s32 %s13, 1
      // Predicated region
      $region13: #{ffno_forward.8} parent=11 // pred_check
        %p234 = pneg %p128
      $region14: #{ffno_forward.8} parent=11 // pred_check_branch
        %236 = sbr.rel (%p234) target = $region16
      $region15: #{ffno_forward.8} parent=11 // pred_region
        _
      $region16: #{ffno_forward.8} parent=11 // pred_fallthru
        _
      // Predicated region
      $region17: #{ffno_forward.8} parent=11 // pred_check
        %p237 = pneg %p149
      $region18: #{ffno_forward.8} parent=11 // pred_check_branch
        %239 = sbr.rel (%p237) target = $region20
      $region19: #{ffno_forward.8} parent=11 // pred_region
        _
      $region20: #{ffno_forward.8} parent=11 // pred_fallthru
        _
      // Predicated region
      $region21: #{ffno_forward.8} parent=11 // pred_check
        %p240 = pneg %p170
      $region22: #{ffno_forward.8} parent=11 // pred_check_branch
        %242 = sbr.rel (%p240) target = $region24
      $region23: #{ffno_forward.8} parent=11 // pred_region
        _
      $region24: #{ffno_forward.8} parent=11 // pred_fallthru
        _
      // Predicated region
      $region25: #{ffno_forward.8} parent=11 // pred_check
        %p243 = pneg %p191
      $region26: #{ffno_forward.8} parent=11 // pred_check_branch
        %245 = sbr.rel (%p243) target = $region28
      $region27: #{ffno_forward.8} parent=11 // pred_region
        _
      $region28: #{ffno_forward.8} parent=11 // pred_fallthru
        _
    $region12: #{ffno_forward.8} parent=5 // pred_fallthru
      _
    %p246 = scmp.lt.s32.totalorder %s13, 2
    // Predicated region
    $region29: #{ffno_forward.8} parent=5 // pred_check
      %p247 = pneg %p246
    $region30: #{ffno_forward.8} parent=5 // pred_check_branch
      %249 = sbr.rel (%p247) target = $region32
    $region31: #{ffno_forward.8} parent=5 // pred_region
      // Predicated region
      $region33: #{ffno_forward.8} parent=31 // pred_check
        %p250 = pneg %p47
      $region34: #{ffno_forward.8} parent=31 // pred_check_branch
        %252 = sbr.rel (%p250) target = $region36
      $region35: #{ffno_forward.8} parent=31 // pred_region
        %s253 = smul.u32 2, %s21
        %p254 = scmp.lt.s32.totalorder %s20, 1
        %s255 = scalar_select %p254, %s20, 1
        %p256 = scmp.lt.s32.totalorder %s253, 1
        %s257 = scalar_select %p256, %s253, 1
        %s258 = smul.addr %s255, 8
        %s259 = sadd.s32 %s257, %s258
        %s260 = smul.addr %s259, 8
        %s261 = scalar_lea.vmem %s0, %s260
        %s262 = smul.u32 2, %s21
      $region36: #{ffno_forward.8} parent=31 // pred_fallthru
        _
      // Predicated region
      $region37: #{ffno_forward.8} parent=31 // pred_check
        %p263 = pneg %p75
      $region38: #{ffno_forward.8} parent=31 // pred_check_branch
        %265 = sbr.rel (%p263) target = $region40
      $region39: #{ffno_forward.8} parent=31 // pred_region
        %s266 = smul.u32 2, %s21
        %p267 = scmp.lt.s32.totalorder %s20, 1
        %s268 = scalar_select %p267, %s20, 1
        %p269 = scmp.lt.s32.totalorder %s266, 1
        %s270 = scalar_select %p269, %s266, 1
        %s271 = smul.addr %s268, 8
        %s272 = sadd.s32 %s270, %s271
        %s273 = smul.addr %s272, 8
        %s274 = scalar_lea.vmem %s1, %s273
        %s275 = smul.u32 2, %s21
      $region40: #{ffno_forward.8} parent=31 // pred_fallthru
        _
      // Predicated region
      $region41: #{ffno_forward.8} parent=31 // pred_check
        %p276 = pneg %p101
      $region42: #{ffno_forward.8} parent=31 // pred_check_branch
        %278 = sbr.rel (%p276) target = $region44
      $region43: #{ffno_forward.8} parent=31 // pred_region
        %p279 = scmp.lt.s32.totalorder %s20, 1
        %s280 = scalar_select %p279, %s20, 1
        %s281 = smul.addr %s280, 4
        %s282 = smul.addr %s281, 8
        %s283 = scalar_lea.vmem %s2, %s282
      $region44: #{ffno_forward.8} parent=31 // pred_fallthru
        _
    $region32: #{ffno_forward.8} parent=5 // pred_fallthru
      _
    %p284 = scmp.le.s32.totalorder 1, %s13
    %p285 = scmp.lt.s32.totalorder %s13, 3
    %p286 = pnand %p284, %p285
    %p287 = pneg %p286
    // Predicated region
    $region45: #{ffno_forward.8} parent=5 // pred_check
      _
    $region46: #{ffno_forward.8} parent=5 // pred_check_branch
      %289 = sbr.rel (%p286) target = $region48
    $region47: #{ffno_forward.8} parent=5 // pred_region
      %s290 = ssub.s32 %s13, 1
      %s291 = smul.u32 2, %s23
      %p292 = scmp.lt.s32.totalorder %s22, 1
      %s293 = scalar_select %p292, %s22, 1
      %p294 = scmp.lt.s32.totalorder %s291, 1
      %s295 = scalar_select %p294, %s291, 1
      %s296 = smul.addr %s293, 8
      %s297 = sadd.s32 %s295, %s296
      %s298 = smul.addr %s297, 8
      %s299 = scalar_lea.vmem %s0, %s298
      %p300 = pneg %p53
      %p301 = pneg %p50
      %s302 = smul.u32 2, %s23
      %p303 = scmp.lt.s32.totalorder %s22, 1
      %s304 = scalar_select %p303, %s22, 1
      %p305 = scmp.lt.s32.totalorder %s302, 1
      %s306 = scalar_select %p305, %s302, 1
      %s307 = smul.addr %s304, 8
      %s308 = sadd.s32 %s306, %s307
      %s309 = smul.addr %s308, 8
      %s310 = scalar_lea.vmem %s1, %s309
      %p311 = pneg %p81
      %p312 = pneg %p78
      %p313 = scmp.lt.s32.totalorder %s22, 1
      %s314 = scalar_select %p313, %s22, 1
      %s315 = smul.addr %s314, 4
      %s316 = smul.addr %s315, 8
      %s317 = scalar_lea.vmem %s2, %s316
      %p318 = pneg %p107
      %p319 = pneg %p104
      %p320 = pneg %p128
      %p321 = pneg %p125
      %p322 = pneg %p149
      %p323 = pneg %p146
      %p324 = pneg %p170
      %p325 = pneg %p167
      %p326 = pneg %p191
      %p327 = pneg %p188
      %p328 = pneg %p219
      %p329 = pneg %p216
      %s330 = smul.u32 2, %s23
      %p331 = scmp.lt.s32.totalorder %s22, 1
      %s332 = scalar_select %p331, %s22, 1
      %p333 = scmp.lt.s32.totalorder %s330, 1
      %s334 = scalar_select %p333, %s330, 1
      %s335 = smul.addr %s332, 8
      %s336 = sadd.s32 %s334, %s335
      %s337 = smul.addr %s336, 8
      %s338 = scalar_lea.vmem %s7, %s337
      %s339 = smul.u32 2, %s23
      %p340 = scmp.lt.s32.totalorder %s22, 1
      %s341 = scalar_select %p340, %s22, 1
      %p342 = scmp.lt.s32.totalorder %s339, 1
      %s343 = scalar_select %p342, %s339, 1
      %s344 = smul.addr %s341, 8
      %s345 = sadd.s32 %s343, %s344
      %s346 = smul.addr %s345, 8
      %s347 = scalar_lea.vmem %s0, %s346
      %s348 = smul.u32 2, %s23
      %s349 = smul.u32 2, %s23
      %p350 = scmp.lt.s32.totalorder %s22, 1
      %s351 = scalar_select %p350, %s22, 1
      %p352 = scmp.lt.s32.totalorder %s349, 1
      %s353 = scalar_select %p352, %s349, 1
      %s354 = smul.addr %s351, 8
      %s355 = sadd.s32 %s353, %s354
      %s356 = smul.addr %s355, 8
      %s357 = scalar_lea.vmem %s1, %s356
      %s358 = smul.u32 2, %s23
      %p359 = scmp.lt.s32.totalorder %s22, 1
      %s360 = scalar_select %p359, %s22, 1
      %s361 = smul.addr %s360, 4
      %s362 = smul.addr %s361, 8
      %s363 = scalar_lea.vmem %s2, %s362
      %s364 = smul.u32 2, %s23
      %p365 = scmp.lt.s32.totalorder %s22, 1
      %s366 = scalar_select %p365, %s22, 1
      %p367 = scmp.lt.s32.totalorder %s364, 1
      %s368 = scalar_select %p367, %s364, 1
      %s369 = smul.addr %s366, 8
      %s370 = sadd.s32 %s368, %s369
      %s371 = smul.addr %s370, 8
      %s372 = scalar_lea.vmem %s7, %s371
      %s373 = smul.u32 2, %s23
      %v375 = vld [vmem:[%s3] sm:$0xf]
      %v376 = vld [vmem:[%s3 + $0x4] sm:$0xf]
      %v377 = vld [vmem:[%s3 + $0x8] sm:$0xf]
      %v378 = vld [vmem:[%s3 + $0xc] sm:$0xf]
      %v379 = vld [vmem:[%s3 + $0x10] sm:$0xf]
      %v380 = vld [vmem:[%s3 + $0x14] sm:$0xf]
      %v381 = vld [vmem:[%s3 + $0x18] sm:$0xf]
      %v382 = vld [vmem:[%s3 + $0x1c] sm:$0xf]
      %v383 = vld [vmem:[%s347] sm:$0xff]
      %v384 = vld [vmem:[%s347 + $0x8] sm:$0xff]
      %v385 = vld [vmem:[%s347 + $0x10] sm:$0xff]
      %v386 = vld [vmem:[%s347 + $0x18] sm:$0xff]
      %v387 = vld [vmem:[%s347 + $0x20] sm:$0xff]
      %v388 = vld [vmem:[%s347 + $0x28] sm:$0xff]
      %v389 = vld [vmem:[%s347 + $0x30] sm:$0xff]
      %v390 = vld [vmem:[%s347 + $0x38] sm:$0xff]
      %v391 = vpack.c.bf16 %v385, %v383
      %v392 = vpack.c.bf16 %v386, %v384
      %v393 = vpack.c.bf16 %v389, %v387
      %v394 = vpack.c.bf16 %v390, %v388
      %v395 = vld [vmem:[%s4] sm:$0xff]
      %v396 = vld [vmem:[%s4 + $0x8] sm:$0xff]
      %v397 = vld [vmem:[%s4 + $0x10] sm:$0xff]
      %v398 = vld [vmem:[%s4 + $0x18] sm:$0xff]
      %v399 = vld [vmem:[%s4 + $0x20] sm:$0xff]
      %v400 = vld [vmem:[%s4 + $0x28] sm:$0xff]
      %v401 = vld [vmem:[%s4 + $0x30] sm:$0xff]
      %v402 = vld [vmem:[%s4 + $0x38] sm:$0xff]
      %404 = vset.pattern.permute.xlu0 0
      %405 = vperm.xlu0 %404, %v395
      %v406 = vpop.permute.xlu0 %405
      %409 = vset.pattern.permute.xlu0 0
      %410 = vperm.xlu0 %409, %v396
      %v411 = vpop.permute.xlu0 %410
      %414 = vset.pattern.permute.xlu0 0
      %415 = vperm.xlu0 %414, %v397
      %v416 = vpop.permute.xlu0 %415
      %419 = vset.pattern.permute.xlu0 0
      %420 = vperm.xlu0 %419, %v398
      %v421 = vpop.permute.xlu0 %420
      %424 = vset.pattern.permute.xlu0 0
      %425 = vperm.xlu0 %424, %v399
      %v426 = vpop.permute.xlu0 %425
      %429 = vset.pattern.permute.xlu0 0
      %430 = vperm.xlu0 %429, %v400
      %v431 = vpop.permute.xlu0 %430
      %434 = vset.pattern.permute.xlu0 0
      %435 = vperm.xlu0 %434, %v401
      %v436 = vpop.permute.xlu0 %435
      %439 = vset.pattern.permute.xlu0 0
      %440 = vperm.xlu0 %439, %v402
      %v441 = vpop.permute.xlu0 %440
      %v451 = vunpack.c.l.b16 %v375
      %v452 = vunpack.c.l.b16 %v376
      %v453 = vunpack.c.l.b16 %v377
      %v454 = vunpack.c.l.b16 %v378
      %v455 = vunpack.c.l.b16 %v379
      %v456 = vunpack.c.l.b16 %v380
      %v457 = vunpack.c.l.b16 %v381
      %v458 = vunpack.c.l.b16 %v382
      %v459 = vpack.c.b16 %v452, %v451
      %v460 = vpack.c.b16 %v454, %v453
      %v461 = vpack.c.b16 %v456, %v455
      %v462 = vpack.c.b16 %v458, %v457
      %vm463 = vcmask 261120
      %v465 = vsel %vm463, %v459, 0
      %v468 = vsel %vm463, %v460, 0
      %v471 = vsel %vm463, %v461, 0
      %v474 = vsel %vm463, %v462, 0
      %476 = vmatprep.subr.bf16.mxu0 %v392
      %477 = vmatpush1.bf16.msra.mxu0 %v391
      %478 = vmatprep.subr.bf16.mxu0 %v394
      %479 = vmatpush1.bf16.msra.mxu0 %v393
      %480 = vmatprep.subr.bf16.mxu0 0
      %481 = vmatpush1.bf16.msra.mxu0 0
      %482 = vmatprep.subr.bf16.mxu0 0
      %483 = vmatpush1.bf16.msra.mxu0 0
      %484 = vmatprep.subr.bf16.mxu0 0
      %485 = vmatpush1.bf16.msra.mxu0 0
      %486 = vmatprep.subr.bf16.mxu0 0
      %487 = vmatpush1.bf16.msra.mxu0 0
      %488 = vmatprep.subr.bf16.mxu0 0
      %489 = vmatpush1.bf16.msra.mxu0 0
      %490 = vmatprep.subr.bf16.mxu0 0
      %491 = vmatpush1.bf16.msra.mxu0 0
      %492 = vmatprep.subr.bf16.mxu0 0
      %493 = vmatpush1.bf16.msra.mxu0 0
      %494 = vmatprep.subr.bf16.mxu0 0
      %495 = vmatpush1.bf16.msra.mxu0 0
      %496 = vmatprep.subr.bf16.mxu0 0
      %497 = vmatpush1.bf16.msra.mxu0 0
      %498 = vmatprep.subr.bf16.mxu0 0
      %499 = vmatpush1.bf16.msra.mxu0 0
      %500 = vmatprep.subr.bf16.mxu0 0
      %501 = vmatpush1.bf16.msra.mxu0 0
      %502 = vmatprep.subr.bf16.mxu0 0
      %503 = vmatpush1.bf16.msra.mxu0 0
      %504 = vmatprep.subr.bf16.mxu0 0
      %505 = vmatpush1.bf16.msra.mxu0 0
      %506 = vmatprep.subr.bf16.mxu0 0
      %507 = vmatpush1.bf16.msra.mxu0 0
      %508 = vmatprep.mubr.bf16.mxu0 0
      %509 = vmatmul.mubr.bf16.gmra.mrb[0].mxu0 %v465
      %v510 = vpop.f32.mrb[0].mxu0
      %v511 = vadd.f32 %v406, %v510
      %v512 = vpop.f32.mrb[0].mxu0
      %v513 = vadd.f32 %v406, %v512
      %v514 = vpop.f32.mrb[0].mxu0
      %v515 = vadd.f32 %v411, %v514
      %v516 = vpop.f32.mrb[0].mxu0
      %v517 = vadd.f32 %v411, %v516
      %518 = vmatprep.mubr.bf16.mxu0 0
      %519 = vmatmul.mubr.bf16.gmra.mrb[0].mxu0 %v468
      %v520 = vpop.f32.mrb[0].mxu0
      %v521 = vadd.f32 %v416, %v520
      %v522 = vpop.f32.mrb[0].mxu0
      %v523 = vadd.f32 %v416, %v522
      %v524 = vpop.f32.mrb[0].mxu0
      %v525 = vadd.f32 %v421, %v524
      %v526 = vpop.f32.mrb[0].mxu0
      %v527 = vadd.f32 %v421, %v526
      %528 = vmatprep.mubr.bf16.mxu0 0
      %529 = vmatmul.mubr.bf16.gmra.mrb[0].mxu0 %v471
      %v530 = vpop.f32.mrb[0].mxu0
      %v531 = vadd.f32 %v426, %v530
      %v532 = vpop.f32.mrb[0].mxu0
      %v533 = vadd.f32 %v426, %v532
      %v534 = vpop.f32.mrb[0].mxu0
      %v535 = vadd.f32 %v431, %v534
      %v536 = vpop.f32.mrb[0].mxu0
      %v537 = vadd.f32 %v431, %v536
      %538 = vmatprep.mubr.bf16.mxu0 0
      %539 = vmatmul.mubr.bf16.gmra.mrb[0].mxu0 %v474
      %v540 = vpop.f32.mrb[0].mxu0
      %v541 = vadd.f32 %v436, %v540
      %v542 = vpop.f32.mrb[0].mxu0
      %v543 = vadd.f32 %v436, %v542
      %v544 = vpop.f32.mrb[0].mxu0
      %v545 = vadd.f32 %v441, %v544
      %v546 = vpop.f32.mrb[0].mxu0
      %v547 = vadd.f32 %v441, %v546
      %548 = vdwg.mxu0
      %v549 = vmax.f32 %v511, 0.0
      %v550 = vmax.f32 %v513, 0.0
      %v551 = vmax.f32 %v515, 0.0
      %v552 = vmax.f32 %v517, 0.0
      %v553 = vmax.f32 %v521, 0.0
      %v554 = vmax.f32 %v523, 0.0
      %v555 = vmax.f32 %v525, 0.0
      %v556 = vmax.f32 %v527, 0.0
      %v557 = vmax.f32 %v531, 0.0
      %v558 = vmax.f32 %v533, 0.0
      %v559 = vmax.f32 %v535, 0.0
      %v560 = vmax.f32 %v537, 0.0
      %v561 = vmax.f32 %v541, 0.0
      %v562 = vmax.f32 %v543, 0.0
      %v563 = vmax.f32 %v545, 0.0
      %v564 = vmax.f32 %v547, 0.0
      %v565 = vld [vmem:[%s5] sm:$0xf]
      %v566 = vld [vmem:[%s5 + $0x4] sm:$0xf]
      %v567 = vld [vmem:[%s5 + $0x8] sm:$0xf]
      %v568 = vld [vmem:[%s5 + $0xc] sm:$0xf]
      %v569 = vpack.c.bf16 %v551, %v549
      %v570 = vpack.c.bf16 %v552, %v550
      %v571 = vpack.c.bf16 %v555, %v553
      %v572 = vpack.c.bf16 %v556, %v554
      %v573 = vpack.c.bf16 %v559, %v557
      %v574 = vpack.c.bf16 %v560, %v558
      %v575 = vpack.c.bf16 %v563, %v561
      %v576 = vpack.c.bf16 %v564, %v562
      %v577 = vld [vmem:[%s6] sm:$0xff]
      %v578 = vld [vmem:[%s6 + $0x8] sm:$0xff]
      %v579 = vld [vmem:[%s6 + $0x10] sm:$0xff]
      %v580 = vld [vmem:[%s6 + $0x18] sm:$0xff]
      %582 = vset.pattern.permute.xlu0 0
      %583 = vperm.xlu0 %582, %v577
      %v584 = vpop.permute.xlu0 %583
      %587 = vset.pattern.permute.xlu0 0
      %588 = vperm.xlu0 %587, %v578
      %v589 = vpop.permute.xlu0 %588
      %592 = vset.pattern.permute.xlu0 0
      %593 = vperm.xlu0 %592, %v579
      %v594 = vpop.permute.xlu0 %593
      %597 = vset.pattern.permute.xlu0 0
      %598 = vperm.xlu0 %597, %v580
      %v599 = vpop.permute.xlu0 %598
      %v605 = vunpack.c.l.b16 %v565
      %v606 = vunpack.c.l.b16 %v566
      %v607 = vunpack.c.l.b16 %v567
      %v608 = vunpack.c.l.b16 %v568
      %v609 = vpack.c.b16 %v606, %v605
      %v610 = vpack.c.b16 %v608, %v607
      %vm611 = vcmask 523264
      %v613 = vsel %vm611, %v609, 0
      %v616 = vsel %vm611, %v610, 0
      %618 = vmatprep.subr.bf16.mxu0 %v570
      %619 = vmatpush1.bf16.msra.mxu0 %v569
      %620 = vmatprep.subr.bf16.mxu0 %v572
      %621 = vmatpush1.bf16.msra.mxu0 %v571
      %622 = vmatprep.subr.bf16.mxu0 %v574
      %623 = vmatpush1.bf16.msra.mxu0 %v573
      %624 = vmatprep.subr.bf16.mxu0 %v576
      %625 = vmatpush1.bf16.msra.mxu0 %v575
      %626 = vmatprep.subr.bf16.mxu0 0
      %627 = vmatpush1.bf16.msra.mxu0 0
      %628 = vmatprep.subr.bf16.mxu0 0
      %629 = vmatpush1.bf16.msra.mxu0 0
      %630 = vmatprep.subr.bf16.mxu0 0
      %631 = vmatpush1.bf16.msra.mxu0 0
      %632 = vmatprep.subr.bf16.mxu0 0
      %633 = vmatpush1.bf16.msra.mxu0 0
      %634 = vmatprep.subr.bf16.mxu0 0
      %635 = vmatpush1.bf16.msra.mxu0 0
      %636 = vmatprep.subr.bf16.mxu0 0
      %637 = vmatpush1.bf16.msra.mxu0 0
      %638 = vmatprep.subr.bf16.mxu0 0
      %639 = vmatpush1.bf16.msra.mxu0 0
      %640 = vmatprep.subr.bf16.mxu0 0
      %641 = vmatpush1.bf16.msra.mxu0 0
      %642 = vmatprep.subr.bf16.mxu0 0
      %643 = vmatpush1.bf16.msra.mxu0 0
      %644 = vmatprep.subr.bf16.mxu0 0
      %645 = vmatpush1.bf16.msra.mxu0 0
      %646 = vmatprep.subr.bf16.mxu0 0
      %647 = vmatpush1.bf16.msra.mxu0 0
      %648 = vmatprep.subr.bf16.mxu0 0
      %649 = vmatpush1.bf16.msra.mxu0 0
      %650 = vmatprep.mubr.bf16.mxu0 0
      %651 = vmatmul.mubr.bf16.gmra.mrb[0].mxu0 %v613
      %v652 = vpop.f32.mrb[0].mxu0
      %v653 = vadd.f32 %v584, %v652
      %v654 = vpop.f32.mrb[0].mxu0
      %v655 = vadd.f32 %v584, %v654
      %v656 = vpop.f32.mrb[0].mxu0
      %v657 = vadd.f32 %v589, %v656
      %v658 = vpop.f32.mrb[0].mxu0
      %v659 = vadd.f32 %v589, %v658
      %660 = vmatprep.mubr.bf16.mxu0 0
      %661 = vmatmul.mubr.bf16.gmra.mrb[0].mxu0 %v616
      %v662 = vpop.f32.mrb[0].mxu0
      %v663 = vadd.f32 %v594, %v662
      %v664 = vpop.f32.mrb[0].mxu0
      %v665 = vadd.f32 %v594, %v664
      %v666 = vpop.f32.mrb[0].mxu0
      %v667 = vadd.f32 %v599, %v666
      %v668 = vpop.f32.mrb[0].mxu0
      %v669 = vadd.f32 %v599, %v668
      %670 = vdwg.mxu0
      %v671 = vld [vmem:[%s363] sm:$0xff]
      %v672 = vld [vmem:[%s363 + $0x8] sm:$0xff]
      %v673 = vld [vmem:[%s363 + $0x10] sm:$0xff]
      %v674 = vld [vmem:[%s363 + $0x18] sm:$0xff]
      %676 = vset.pattern.permute.xlu0 0
      %677 = vperm.xlu0 %676, %v671
      %v678 = vpop.permute.xlu0 %677
      %681 = vset.pattern.permute.xlu0 0
      %682 = vperm.xlu0 %681, %v672
      %v683 = vpop.permute.xlu0 %682
      %686 = vset.pattern.permute.xlu0 0
      %687 = vperm.xlu0 %686, %v673
      %v688 = vpop.permute.xlu0 %687
      %691 = vset.pattern.permute.xlu0 0
      %692 = vperm.xlu0 %691, %v674
      %v693 = vpop.permute.xlu0 %692
      %v695 = vmul.f32 %v653, %v678
      %v696 = vmul.f32 %v655, %v678
      %v697 = vmul.f32 %v657, %v683
      %v698 = vmul.f32 %v659, %v683
      %v699 = vmul.f32 %v663, %v688
      %v700 = vmul.f32 %v665, %v688
      %v701 = vmul.f32 %v667, %v693
      %v702 = vmul.f32 %v669, %v693
      %v703 = vld [vmem:[%s357] sm:$0xff]
      %v704 = vld [vmem:[%s357 + $0x8] sm:$0xff]
      %v705 = vld [vmem:[%s357 + $0x10] sm:$0xff]
      %v706 = vld [vmem:[%s357 + $0x18] sm:$0xff]
      %v707 = vld [vmem:[%s357 + $0x20] sm:$0xff]
      %v708 = vld [vmem:[%s357 + $0x28] sm:$0xff]
      %v709 = vld [vmem:[%s357 + $0x30] sm:$0xff]
      %v710 = vld [vmem:[%s357 + $0x38] sm:$0xff]
      %v711 = vadd.f32 %v703, %v695
      %v712 = vadd.f32 %v704, %v696
      %v713 = vadd.f32 %v705, %v697
      %v714 = vadd.f32 %v706, %v698
      %v715 = vadd.f32 %v707, %v699
      %v716 = vadd.f32 %v708, %v700
      %v717 = vadd.f32 %v709, %v701
      %v718 = vadd.f32 %v710, %v702
      %719 = vst [vmem:[%s372] sm:$0xff] %v711
      %720 = vst [vmem:[%s372 + $0x8] sm:$0xff] %v712
      %721 = vst [vmem:[%s372 + $0x10] sm:$0xff] %v713
      %722 = vst [vmem:[%s372 + $0x18] sm:$0xff] %v714
      %723 = vst [vmem:[%s372 + $0x20] sm:$0xff] %v715
      %724 = vst [vmem:[%s372 + $0x28] sm:$0xff] %v716
      %725 = vst [vmem:[%s372 + $0x30] sm:$0xff] %v717
      %726 = vst [vmem:[%s372 + $0x38] sm:$0xff] %v718
      %s727 = smul.u32 2, %s23
      %p728 = scmp.lt.s32.totalorder %s22, 1
      %s729 = scalar_select %p728, %s22, 1
      %p730 = scmp.lt.s32.totalorder %s727, 1
      %s731 = scalar_select %p730, %s727, 1
      %s732 = smul.addr %s729, 8
      %s733 = sadd.s32 %s731, %s732
      %s734 = smul.addr %s733, 8
      %s735 = scalar_lea.vmem %s7, %s734
      // Predicated region
      $region49: #{ffno_forward.8} parent=47 // pred_check
        %p736 = pneg %p216
      $region50: #{ffno_forward.8} parent=47 // pred_check_branch
        %738 = sbr.rel (%p736) target = $region52
      $region51: #{ffno_forward.8} parent=47 // pred_region
        %s739 = smul.u32 2, %s23
      $region52: #{ffno_forward.8} parent=47 // pred_fallthru
        _
    $region48: #{ffno_forward.8} parent=5 // pred_fallthru
      _
    %p740 = scmp.le.s32.totalorder 2, %s13
    // Predicated region
    $region53: #{ffno_forward.8} parent=5 // pred_check
      %p741 = pneg %p740
    $region54: #{ffno_forward.8} parent=5 // pred_check_branch
      %743 = sbr.rel (%p741) target = $region56
    $region55: #{ffno_forward.8} parent=5 // pred_region
      %s744 = ssub.s32 %s13, 2
      // Predicated region
      $region57: #{ffno_forward.8} parent=55 // pred_check
        %p745 = pneg %p222
      $region58: #{ffno_forward.8} parent=55 // pred_check_branch
        %747 = sbr.rel (%p745) target = $region60
      $region59: #{ffno_forward.8} parent=55 // pred_region
        %s748 = smul.u32 2, %s25
        %p749 = scmp.lt.s32.totalorder %s24, 1
        %s750 = scalar_select %p749, %s24, 1
        %p751 = scmp.lt.s32.totalorder %s748, 1
        %s752 = scalar_select %p751, %s748, 1
        %s753 = smul.addr %s750, 8
        %s754 = sadd.s32 %s752, %s753
        %s755 = smul.addr %s754, 8
        %s756 = scalar_lea.vmem %s7, %s755
      $region60: #{ffno_forward.8} parent=55 // pred_fallthru
        _
    $region56: #{ffno_forward.8} parent=5 // pred_fallthru
      _
  $region6: #{ffno_forward.8} parent=0 // loop_footer
    %s17 = sadd.s32 1, %s13
  $region7: #{ffno_forward.8} parent=0 // loop_footer_branch
    %12 = sbr.rel target = $region3
  $region8: #{ffno_forward.8} parent=0 // loop_exit
    _

// kernel: ffno_forward.11
$region0: #{ffno_forward.11}
  #allocation0 [shape = 'u32[]', space=smem, size = 0x4, offset = 0x4, fixed_abs, tag = 'smem constant byte address 0x4 - core index']
  #allocation1 [shape = 'u32[144,128]{1,0:T(1,128)}', space=vmem, size = 0x12000, scoped, tag = 'internal scratch']
  %s0 = inlined_call_operand.vmem [shape: f32[2,32,256], index: 0, kind: input, shape index: {}]
  %s1 = inlined_call_operand.vmem [shape: f32[2,32,1], index: 1, kind: input, shape index: {}]
  %s2 = inlined_call_operand.vmem [shape: bf16[64,32], index: 2, kind: input, shape index: {}]
  %s3 = inlined_call_operand.vmem [shape: f32[64,1], index: 3, kind: input, shape index: {}]
  %s4 = inlined_call_operand.vmem [shape: bf16[32,64], index: 4, kind: input, shape index: {}]
  %s5 = inlined_call_operand.vmem [shape: f32[32,1], index: 5, kind: input, shape index: {}]
  %s6 = inlined_call_operand.vmem [shape: f32[128,32], index: 6, kind: input, shape index: {}]
  %s7 = inlined_call_operand.vmem [shape: f32[128,1], index: 7, kind: input, shape index: {}]
  %s8 = inlined_call_operand.vmem [shape: f32[4,128], index: 8, kind: input, shape index: {}]
  %s9 = inlined_call_operand.vmem [shape: f32[4,1], index: 9, kind: input, shape index: {}]
  %s10 = inlined_call_operand.vmem [shape: f32[2,4,256], index: 10, kind: output, shape index: {}]
  %s11 = sld [smem:[#allocation0]]
  $region73: #{ffno_forward.11} parent=0
    _
  %s13 = ssub.s32 1, %s11
  %s14 = scalar_select 0, %s13, %s11
  loop: start=0, step=1, limit=4
  $region2: #{ffno_forward.11} parent=0 // loop_pre_header
    _
  $region3: #{ffno_forward.11} parent=0 // loop_header
    %s16 = sphi 0, %s20
    %p17 = scmp.ge.s32.totalorder %s16, 4
    %s23 = sphi 0, %s35
    %s24 = sphi 0, %s31
    %s25 = sphi 0, %s23
    %s26 = sphi 0, %s24
    %s27 = sphi 0, %s25
    %s28 = sphi 0, %s26
    %s40 = sphi 0, %s42
    %s43 = sphi 0, %s40
    %s44 = sphi 0, %s43
    %s60 = sphi 0, %s44
    %s66 = sphi 0, %s68
    %s69 = sphi 0, %s66
    %s70 = sphi 0, %s69
    %s86 = sphi 0, %s70
    %s90 = sphi 0, %s90
    %s92 = sphi 0, %s90
    %s93 = sphi 0, %s92
    %s107 = sphi 0, %s93
    %s111 = sphi 0, %s111
    %s113 = sphi 0, %s111
    %s114 = sphi 0, %s113
    %s128 = sphi 0, %s114
    %s132 = sphi 0, %s132
    %s134 = sphi 0, %s132
    %s135 = sphi 0, %s134
    %s149 = sphi 0, %s135
    %s153 = sphi 0, %s153
    %s155 = sphi 0, %s153
    %s156 = sphi 0, %s155
    %s170 = sphi 0, %s156
    %s174 = sphi 0, %s174
    %s176 = sphi 0, %s174
    %s177 = sphi 0, %s176
    %s191 = sphi 0, %s177
    %s195 = sphi 0, %s195
    %s197 = sphi 0, %s195
    %s198 = sphi 0, %s197
    %s212 = sphi 0, %s198
    %s216 = sphi 0, %s216
    %s218 = sphi 0, %s216
    %s219 = sphi 0, %s218
    %s233 = sphi 0, %s219
    %s237 = sphi 0, %s237
    %s239 = sphi 0, %s237
    %s240 = sphi 0, %s239
    %s254 = sphi 0, %s240
    %s262 = sphi 0, %s264
    %s265 = sphi 0, %s262
    %s266 = sphi 0, %s265
    %s282 = sphi 0, %s266
  $region4: #{ffno_forward.11} parent=0 // loop_header_branch
    %19 = sbr.rel (%p17) target = $region8
  $region5: #{ffno_forward.11} parent=0 // loop_body
    %s21 = ssub.s32 %s16, 1
    %s22 = ssub.s32 %s16, 2
    %s29 = sadd.s32 1, %s24
    %p30 = scmp.ge.s32.totalorder %s29, 1
    %s31 = scalar_select %p30, 0, %s29
    %s32 = sadd.s32 1, %s23
    %s33 = scalar_select %p30, %s32, %s23
    %p34 = scmp.ge.s32.totalorder %s33, 2
    %s35 = scalar_select %p34, 0, %s33
    %s36 = ssub.s32 %s23, %s35
    %s37 = ssub.s32 %s24, %s31
    %s38 = sor.u32 %s36, %s37
    %p39 = scmp.eq.s32.totalorder %s38, 0
    %s41 = sadd.s32 %s40, 1
    %s42 = scalar_select %p39, %s40, %s41
    %p45 = pneg %p39
    %p46 = scmp.eq.s32.totalorder %s16, 1
    %p47 = por %p45, %p46
    %p48 = scmp.ne.s32.totalorder %s40, %s43
    %p49 = scmp.eq.s32.totalorder %s16, 0
    %p50 = por %p48, %p49
    %p51 = scmp.ne.s32.totalorder %s40, %s43
    %p52 = scmp.eq.s32.totalorder %s21, 1
    %p53 = por %p51, %p52
    %p54 = scmp.ne.s32.totalorder %s43, %s44
    %p55 = scmp.eq.s32.totalorder %s21, 0
    %p56 = por %p54, %p55
    %p57 = scmp.ne.s32.totalorder %s43, %s44
    %p58 = scmp.eq.s32.totalorder %s22, 1
    %p59 = por %p57, %p58
    %p61 = scmp.ne.s32.totalorder %s44, %s60
    %p62 = scmp.eq.s32.totalorder %s22, 0
    %p63 = por %p61, %p62
    %s64 = ssub.s32 %s23, %s35
    %p65 = scmp.eq.s32.totalorder %s64, 0
    %s67 = sadd.s32 %s66, 1
    %s68 = scalar_select %p65, %s66, %s67
    %p71 = pneg %p65
    %p72 = scmp.eq.s32.totalorder %s16, 1
    %p73 = por %p71, %p72
    %p74 = scmp.ne.s32.totalorder %s66, %s69
    %p75 = scmp.eq.s32.totalorder %s16, 0
    %p76 = por %p74, %p75
    %p77 = scmp.ne.s32.totalorder %s66, %s69
    %p78 = scmp.eq.s32.totalorder %s21, 1
    %p79 = por %p77, %p78
    %p80 = scmp.ne.s32.totalorder %s69, %s70
    %p81 = scmp.eq.s32.totalorder %s21, 0
    %p82 = por %p80, %p81
    %p83 = scmp.ne.s32.totalorder %s69, %s70
    %p84 = scmp.eq.s32.totalorder %s22, 1
    %p85 = por %p83, %p84
    %p87 = scmp.ne.s32.totalorder %s70, %s86
    %p88 = scmp.eq.s32.totalorder %s22, 0
    %p89 = por %p87, %p88
    %s91 = sadd.s32 %s90, 1
    %p94 = scmp.eq.s32.totalorder %s16, 1
    %p95 = scmp.ne.s32.totalorder %s90, %s92
    %p96 = scmp.eq.s32.totalorder %s16, 0
    %p97 = por %p95, %p96
    %p98 = scmp.ne.s32.totalorder %s90, %s92
    %p99 = scmp.eq.s32.totalorder %s21, 1
    %p100 = por %p98, %p99
    %p101 = scmp.ne.s32.totalorder %s92, %s93
    %p102 = scmp.eq.s32.totalorder %s21, 0
    %p103 = por %p101, %p102
    %p104 = scmp.ne.s32.totalorder %s92, %s93
    %p105 = scmp.eq.s32.totalorder %s22, 1
    %p106 = por %p104, %p105
    %p108 = scmp.ne.s32.totalorder %s93, %s107
    %p109 = scmp.eq.s32.totalorder %s22, 0
    %p110 = por %p108, %p109
    %s112 = sadd.s32 %s111, 1
    %p115 = scmp.eq.s32.totalorder %s16, 1
    %p116 = scmp.ne.s32.totalorder %s111, %s113
    %p117 = scmp.eq.s32.totalorder %s16, 0
    %p118 = por %p116, %p117
    %p119 = scmp.ne.s32.totalorder %s111, %s113
    %p120 = scmp.eq.s32.totalorder %s21, 1
    %p121 = por %p119, %p120
    %p122 = scmp.ne.s32.totalorder %s113, %s114
    %p123 = scmp.eq.s32.totalorder %s21, 0
    %p124 = por %p122, %p123
    %p125 = scmp.ne.s32.totalorder %s113, %s114
    %p126 = scmp.eq.s32.totalorder %s22, 1
    %p127 = por %p125, %p126
    %p129 = scmp.ne.s32.totalorder %s114, %s128
    %p130 = scmp.eq.s32.totalorder %s22, 0
    %p131 = por %p129, %p130
    %s133 = sadd.s32 %s132, 1
    %p136 = scmp.eq.s32.totalorder %s16, 1
    %p137 = scmp.ne.s32.totalorder %s132, %s134
    %p138 = scmp.eq.s32.totalorder %s16, 0
    %p139 = por %p137, %p138
    %p140 = scmp.ne.s32.totalorder %s132, %s134
    %p141 = scmp.eq.s32.totalorder %s21, 1
    %p142 = por %p140, %p141
    %p143 = scmp.ne.s32.totalorder %s134, %s135
    %p144 = scmp.eq.s32.totalorder %s21, 0
    %p145 = por %p143, %p144
    %p146 = scmp.ne.s32.totalorder %s134, %s135
    %p147 = scmp.eq.s32.totalorder %s22, 1
    %p148 = por %p146, %p147
    %p150 = scmp.ne.s32.totalorder %s135, %s149
    %p151 = scmp.eq.s32.totalorder %s22, 0
    %p152 = por %p150, %p151
    %s154 = sadd.s32 %s153, 1
    %p157 = scmp.eq.s32.totalorder %s16, 1
    %p158 = scmp.ne.s32.totalorder %s153, %s155
    %p159 = scmp.eq.s32.totalorder %s16, 0
    %p160 = por %p158, %p159
    %p161 = scmp.ne.s32.totalorder %s153, %s155
    %p162 = scmp.eq.s32.totalorder %s21, 1
    %p163 = por %p161, %p162
    %p164 = scmp.ne.s32.totalorder %s155, %s156
    %p165 = scmp.eq.s32.totalorder %s21, 0
    %p166 = por %p164, %p165
    %p167 = scmp.ne.s32.totalorder %s155, %s156
    %p168 = scmp.eq.s32.totalorder %s22, 1
    %p169 = por %p167, %p168
    %p171 = scmp.ne.s32.totalorder %s156, %s170
    %p172 = scmp.eq.s32.totalorder %s22, 0
    %p173 = por %p171, %p172
    %s175 = sadd.s32 %s174, 1
    %p178 = scmp.eq.s32.totalorder %s16, 1
    %p179 = scmp.ne.s32.totalorder %s174, %s176
    %p180 = scmp.eq.s32.totalorder %s16, 0
    %p181 = por %p179, %p180
    %p182 = scmp.ne.s32.totalorder %s174, %s176
    %p183 = scmp.eq.s32.totalorder %s21, 1
    %p184 = por %p182, %p183
    %p185 = scmp.ne.s32.totalorder %s176, %s177
    %p186 = scmp.eq.s32.totalorder %s21, 0
    %p187 = por %p185, %p186
    %p188 = scmp.ne.s32.totalorder %s176, %s177
    %p189 = scmp.eq.s32.totalorder %s22, 1
    %p190 = por %p188, %p189
    %p192 = scmp.ne.s32.totalorder %s177, %s191
    %p193 = scmp.eq.s32.totalorder %s22, 0
    %p194 = por %p192, %p193
    %s196 = sadd.s32 %s195, 1
    %p199 = scmp.eq.s32.totalorder %s16, 1
    %p200 = scmp.ne.s32.totalorder %s195, %s197
    %p201 = scmp.eq.s32.totalorder %s16, 0
    %p202 = por %p200, %p201
    %p203 = scmp.ne.s32.totalorder %s195, %s197
    %p204 = scmp.eq.s32.totalorder %s21, 1
    %p205 = por %p203, %p204
    %p206 = scmp.ne.s32.totalorder %s197, %s198
    %p207 = scmp.eq.s32.totalorder %s21, 0
    %p208 = por %p206, %p207
    %p209 = scmp.ne.s32.totalorder %s197, %s198
    %p210 = scmp.eq.s32.totalorder %s22, 1
    %p211 = por %p209, %p210
    %p213 = scmp.ne.s32.totalorder %s198, %s212
    %p214 = scmp.eq.s32.totalorder %s22, 0
    %p215 = por %p213, %p214
    %s217 = sadd.s32 %s216, 1
    %p220 = scmp.eq.s32.totalorder %s16, 1
    %p221 = scmp.ne.s32.totalorder %s216, %s218
    %p222 = scmp.eq.s32.totalorder %s16, 0
    %p223 = por %p221, %p222
    %p224 = scmp.ne.s32.totalorder %s216, %s218
    %p225 = scmp.eq.s32.totalorder %s21, 1
    %p226 = por %p224, %p225
    %p227 = scmp.ne.s32.totalorder %s218, %s219
    %p228 = scmp.eq.s32.totalorder %s21, 0
    %p229 = por %p227, %p228
    %p230 = scmp.ne.s32.totalorder %s218, %s219
    %p231 = scmp.eq.s32.totalorder %s22, 1
    %p232 = por %p230, %p231
    %p234 = scmp.ne.s32.totalorder %s219, %s233
    %p235 = scmp.eq.s32.totalorder %s22, 0
    %p236 = por %p234, %p235
    %s238 = sadd.s32 %s237, 1
    %p241 = scmp.eq.s32.totalorder %s16, 1
    %p242 = scmp.ne.s32.totalorder %s237, %s239
    %p243 = scmp.eq.s32.totalorder %s16, 0
    %p244 = por %p242, %p243
    %p245 = scmp.ne.s32.totalorder %s237, %s239
    %p246 = scmp.eq.s32.totalorder %s21, 1
    %p247 = por %p245, %p246
    %p248 = scmp.ne.s32.totalorder %s239, %s240
    %p249 = scmp.eq.s32.totalorder %s21, 0
    %p250 = por %p248, %p249
    %p251 = scmp.ne.s32.totalorder %s239, %s240
    %p252 = scmp.eq.s32.totalorder %s22, 1
    %p253 = por %p251, %p252
    %p255 = scmp.ne.s32.totalorder %s240, %s254
    %p256 = scmp.eq.s32.totalorder %s22, 0
    %p257 = por %p255, %p256
    %s258 = ssub.s32 %s23, %s35
    %s259 = ssub.s32 %s24, %s31
    %s260 = sor.u32 %s258, %s259
    %p261 = scmp.eq.s32.totalorder %s260, 0
    %s263 = sadd.s32 %s262, 1
    %s264 = scalar_select %p261, %s262, %s263
    %p267 = pneg %p261
    %p268 = scmp.eq.s32.totalorder %s16, 1
    %p269 = por %p267, %p268
    %p270 = scmp.ne.s32.totalorder %s262, %s265
    %p271 = scmp.eq.s32.totalorder %s16, 0
    %p272 = por %p270, %p271
    %p273 = scmp.ne.s32.totalorder %s262, %s265
    %p274 = scmp.eq.s32.totalorder %s21, 1
    %p275 = por %p273, %p274
    %p276 = scmp.ne.s32.totalorder %s265, %s266
    %p277 = scmp.eq.s32.totalorder %s21, 0
    %p278 = por %p276, %p277
    %p279 = scmp.ne.s32.totalorder %s265, %s266
    %p280 = scmp.eq.s32.totalorder %s22, 1
    %p281 = por %p279, %p280
    %p283 = scmp.ne.s32.totalorder %s266, %s282
    %p284 = scmp.eq.s32.totalorder %s22, 0
    %p285 = por %p283, %p284
    %p286 = scmp.le.s32.totalorder 1, %s16
    %p287 = scmp.lt.s32.totalorder %s16, 3
    %p288 = pnand %p286, %p287
    %p289 = pneg %p288
    // Predicated region
    $region9: #{ffno_forward.11} parent=5 // pred_check
      _
    $region10: #{ffno_forward.11} parent=5 // pred_check_branch
      %291 = sbr.rel (%p288) target = $region12
    $region11: #{ffno_forward.11} parent=5 // pred_region
      %s292 = ssub.s32 %s16, 1
      // Predicated region
      $region13: #{ffno_forward.11} parent=11 // pred_check
        %p293 = pneg %p103
      $region14: #{ffno_forward.11} parent=11 // pred_check_branch
        %295 = sbr.rel (%p293) target = $region16
      $region15: #{ffno_forward.11} parent=11 // pred_region
        _
      $region16: #{ffno_forward.11} parent=11 // pred_fallthru
        _
      // Predicated region
      $region17: #{ffno_forward.11} parent=11 // pred_check
        %p296 = pneg %p124
      $region18: #{ffno_forward.11} parent=11 // pred_check_branch
        %298 = sbr.rel (%p296) target = $region20
      $region19: #{ffno_forward.11} parent=11 // pred_region
        _
      $region20: #{ffno_forward.11} parent=11 // pred_fallthru
        _
      // Predicated region
      $region21: #{ffno_forward.11} parent=11 // pred_check
        %p299 = pneg %p145
      $region22: #{ffno_forward.11} parent=11 // pred_check_branch
        %301 = sbr.rel (%p299) target = $region24
      $region23: #{ffno_forward.11} parent=11 // pred_region
        _
      $region24: #{ffno_forward.11} parent=11 // pred_fallthru
        _
      // Predicated region
      $region25: #{ffno_forward.11} parent=11 // pred_check
        %p302 = pneg %p166
      $region26: #{ffno_forward.11} parent=11 // pred_check_branch
        %304 = sbr.rel (%p302) target = $region28
      $region27: #{ffno_forward.11} parent=11 // pred_region
        _
      $region28: #{ffno_forward.11} parent=11 // pred_fallthru
        _
      // Predicated region
      $region29: #{ffno_forward.11} parent=11 // pred_check
        %p305 = pneg %p187
      $region30: #{ffno_forward.11} parent=11 // pred_check_branch
        %307 = sbr.rel (%p305) target = $region32
      $region31: #{ffno_forward.11} parent=11 // pred_region
        _
      $region32: #{ffno_forward.11} parent=11 // pred_fallthru
        _
      // Predicated region
      $region33: #{ffno_forward.11} parent=11 // pred_check
        %p308 = pneg %p208
      $region34: #{ffno_forward.11} parent=11 // pred_check_branch
        %310 = sbr.rel (%p308) target = $region36
      $region35: #{ffno_forward.11} parent=11 // pred_region
        _
      $region36: #{ffno_forward.11} parent=11 // pred_fallthru
        _
      // Predicated region
      $region37: #{ffno_forward.11} parent=11 // pred_check
        %p311 = pneg %p229
      $region38: #{ffno_forward.11} parent=11 // pred_check_branch
        %313 = sbr.rel (%p311) target = $region40
      $region39: #{ffno_forward.11} parent=11 // pred_region
        _
      $region40: #{ffno_forward.11} parent=11 // pred_fallthru
        _
      // Predicated region
      $region41: #{ffno_forward.11} parent=11 // pred_check
        %p314 = pneg %p250
      $region42: #{ffno_forward.11} parent=11 // pred_check_branch
        %316 = sbr.rel (%p314) target = $region44
      $region43: #{ffno_forward.11} parent=11 // pred_region
        _
      $region44: #{ffno_forward.11} parent=11 // pred_fallthru
        _
    $region12: #{ffno_forward.11} parent=5 // pred_fallthru
      _
    %p317 = scmp.lt.s32.totalorder %s16, 2
    // Predicated region
    $region45: #{ffno_forward.11} parent=5 // pred_check
      %p318 = pneg %p317
    $region46: #{ffno_forward.11} parent=5 // pred_check_branch
      %320 = sbr.rel (%p318) target = $region48
    $region47: #{ffno_forward.11} parent=5 // pred_region
      // Predicated region
      $region49: #{ffno_forward.11} parent=47 // pred_check
        %p321 = pneg %p50
      $region50: #{ffno_forward.11} parent=47 // pred_check_branch
        %323 = sbr.rel (%p321) target = $region52
      $region51: #{ffno_forward.11} parent=47 // pred_region
        %s324 = smul.u32 2, %s24
        %p325 = scmp.lt.s32.totalorder %s23, 1
        %s326 = scalar_select %p325, %s23, 1
        %p327 = scmp.lt.s32.totalorder %s324, 1
        %s328 = scalar_select %p327, %s324, 1
        %s329 = smul.addr %s326, 8
        %s330 = sadd.s32 %s328, %s329
        %s331 = smul.addr %s330, 8
        %s332 = scalar_lea.vmem %s0, %s331
        %s333 = smul.u32 2, %s24
      $region52: #{ffno_forward.11} parent=47 // pred_fallthru
        _
      // Predicated region
      $region53: #{ffno_forward.11} parent=47 // pred_check
        %p334 = pneg %p76
      $region54: #{ffno_forward.11} parent=47 // pred_check_branch
        %336 = sbr.rel (%p334) target = $region56
      $region55: #{ffno_forward.11} parent=47 // pred_region
        %p337 = scmp.lt.s32.totalorder %s23, 1
        %s338 = scalar_select %p337, %s23, 1
        %s339 = smul.addr %s338, 4
        %s340 = smul.addr %s339, 8
        %s341 = scalar_lea.vmem %s1, %s340
      $region56: #{ffno_forward.11} parent=47 // pred_fallthru
        _
    $region48: #{ffno_forward.11} parent=5 // pred_fallthru
      _
    %p342 = scmp.le.s32.totalorder 1, %s16
    %p343 = scmp.lt.s32.totalorder %s16, 3
    %p344 = pnand %p342, %p343
    %p345 = pneg %p344
    // Predicated region
    $region57: #{ffno_forward.11} parent=5 // pred_check
      _
    $region58: #{ffno_forward.11} parent=5 // pred_check_branch
      %347 = sbr.rel (%p344) target = $region60
    $region59: #{ffno_forward.11} parent=5 // pred_region
      %s348 = ssub.s32 %s16, 1
      %s349 = smul.u32 2, %s26
      %p350 = scmp.lt.s32.totalorder %s25, 1
      %s351 = scalar_select %p350, %s25, 1
      %p352 = scmp.lt.s32.totalorder %s349, 1
      %s353 = scalar_select %p352, %s349, 1
      %s354 = smul.addr %s351, 8
      %s355 = sadd.s32 %s353, %s354
      %s356 = smul.addr %s355, 8
      %s357 = scalar_lea.vmem %s0, %s356
      %p358 = pneg %p56
      %p359 = pneg %p53
      %p360 = scmp.lt.s32.totalorder %s25, 1
      %s361 = scalar_select %p360, %s25, 1
      %s362 = smul.addr %s361, 4
      %s363 = smul.addr %s362, 8
      %s364 = scalar_lea.vmem %s1, %s363
      %p365 = pneg %p82
      %p366 = pneg %p79
      %p367 = pneg %p103
      %p368 = pneg %p100
      %p369 = pneg %p124
      %p370 = pneg %p121
      %p371 = pneg %p145
      %p372 = pneg %p142
      %p373 = pneg %p166
      %p374 = pneg %p163
      %p375 = pneg %p187
      %p376 = pneg %p184
      %p377 = pneg %p208
      %p378 = pneg %p205
      %p379 = pneg %p229
      %p380 = pneg %p226
      %p381 = pneg %p250
      %p382 = pneg %p247
      %p383 = pneg %p278
      %p384 = pneg %p275
      %s385 = smul.u32 2, %s26
      %p386 = scmp.lt.s32.totalorder %s25, 1
      %s387 = scalar_select %p386, %s25, 1
      %p388 = scmp.lt.s32.totalorder %s385, 1
      %s389 = scalar_select %p388, %s385, 1
      %s390 = smul.addr %s387, 2
      %s391 = sadd.s32 %s389, %s390
      %s392 = smul.addr %s391, 4
      %s393 = scalar_lea.vmem %s10, %s392
      %s394 = smul.u32 2, %s26
      %p395 = scmp.lt.s32.totalorder %s25, 1
      %s396 = scalar_select %p395, %s25, 1
      %p397 = scmp.lt.s32.totalorder %s394, 1
      %s398 = scalar_select %p397, %s394, 1
      %s399 = smul.addr %s396, 8
      %s400 = sadd.s32 %s398, %s399
      %s401 = smul.addr %s400, 8
      %s402 = scalar_lea.vmem %s0, %s401
      %s403 = smul.u32 2, %s26
      %p404 = scmp.lt.s32.totalorder %s25, 1
      %s405 = scalar_select %p404, %s25, 1
      %s406 = smul.addr %s405, 4
      %s407 = smul.addr %s406, 8
      %s408 = scalar_lea.vmem %s1, %s407
      %s409 = smul.u32 2, %s26
      %p410 = scmp.lt.s32.totalorder %s25, 1
      %s411 = scalar_select %p410, %s25, 1
      %p412 = scmp.lt.s32.totalorder %s409, 1
      %s413 = scalar_select %p412, %s409, 1
      %s414 = smul.addr %s411, 2
      %s415 = sadd.s32 %s413, %s414
      %s416 = smul.addr %s415, 4
      %s417 = scalar_lea.vmem %s10, %s416
      %s418 = smul.u32 2, %s26
      %v420 = vld [vmem:[%s2] sm:$0xf]
      %v421 = vld [vmem:[%s2 + $0x4] sm:$0xf]
      %v422 = vld [vmem:[%s2 + $0x8] sm:$0xf]
      %v423 = vld [vmem:[%s2 + $0xc] sm:$0xf]
      %v424 = vld [vmem:[%s2 + $0x10] sm:$0xf]
      %v425 = vld [vmem:[%s2 + $0x14] sm:$0xf]
      %v426 = vld [vmem:[%s2 + $0x18] sm:$0xf]
      %v427 = vld [vmem:[%s2 + $0x1c] sm:$0xf]
      %v428 = vld [vmem:[%s402] sm:$0xff]
      %v429 = vld [vmem:[%s402 + $0x8] sm:$0xff]
      %v430 = vld [vmem:[%s402 + $0x10] sm:$0xff]
      %v431 = vld [vmem:[%s402 + $0x18] sm:$0xff]
      %v432 = vld [vmem:[%s402 + $0x20] sm:$0xff]
      %v433 = vld [vmem:[%s402 + $0x28] sm:$0xff]
      %v434 = vld [vmem:[%s402 + $0x30] sm:$0xff]
      %v435 = vld [vmem:[%s402 + $0x38] sm:$0xff]
      %v436 = vpack.c.bf16 %v430, %v428
      %v437 = vpack.c.bf16 %v431, %v429
      %v438 = vpack.c.bf16 %v434, %v432
      %v439 = vpack.c.bf16 %v435, %v433
      %v440 = vld [vmem:[%s3] sm:$0xff]
      %v441 = vld [vmem:[%s3 + $0x8] sm:$0xff]
      %v442 = vld [vmem:[%s3 + $0x10] sm:$0xff]
      %v443 = vld [vmem:[%s3 + $0x18] sm:$0xff]
      %v444 = vld [vmem:[%s3 + $0x20] sm:$0xff]
      %v445 = vld [vmem:[%s3 + $0x28] sm:$0xff]
      %v446 = vld [vmem:[%s3 + $0x30] sm:$0xff]
      %v447 = vld [vmem:[%s3 + $0x38] sm:$0xff]
      %449 = vset.pattern.permute.xlu0 0
      %450 = vperm.xlu0 %449, %v440
      %v451 = vpop.permute.xlu0 %450
      %454 = vset.pattern.permute.xlu0 0
      %455 = vperm.xlu0 %454, %v441
      %v456 = vpop.permute.xlu0 %455
      %459 = vset.pattern.permute.xlu0 0
      %460 = vperm.xlu0 %459, %v442
      %v461 = vpop.permute.xlu0 %460
      %464 = vset.pattern.permute.xlu0 0
      %465 = vperm.xlu0 %464, %v443
      %v466 = vpop.permute.xlu0 %465
      %469 = vset.pattern.permute.xlu0 0
      %470 = vperm.xlu0 %469, %v444
      %v471 = vpop.permute.xlu0 %470
      %474 = vset.pattern.permute.xlu0 0
      %475 = vperm.xlu0 %474, %v445
      %v476 = vpop.permute.xlu0 %475
      %479 = vset.pattern.permute.xlu0 0
      %480 = vperm.xlu0 %479, %v446
      %v481 = vpop.permute.xlu0 %480
      %484 = vset.pattern.permute.xlu0 0
      %485 = vperm.xlu0 %484, %v447
      %v486 = vpop.permute.xlu0 %485
      %v496 = vunpack.c.l.b16 %v420
      %v497 = vunpack.c.l.b16 %v421
      %v498 = vunpack.c.l.b16 %v422
      %v499 = vunpack.c.l.b16 %v423
      %v500 = vunpack.c.l.b16 %v424
      %v501 = vunpack.c.l.b16 %v425
      %v502 = vunpack.c.l.b16 %v426
      %v503 = vunpack.c.l.b16 %v427
      %v504 = vpack.c.b16 %v497, %v496
      %v505 = vpack.c.b16 %v499, %v498
      %v506 = vpack.c.b16 %v501, %v500
      %v507 = vpack.c.b16 %v503, %v502
      %vm508 = vcmask 261120
      %v510 = vsel %vm508, %v504, 0
      %v513 = vsel %vm508, %v505, 0
      %v516 = vsel %vm508, %v506, 0
      %v519 = vsel %vm508, %v507, 0
      %521 = vmatprep.subr.bf16.mxu0 %v437
      %522 = vmatpush1.bf16.msra.mxu0 %v436
      %523 = vmatprep.subr.bf16.mxu0 %v439
      %524 = vmatpush1.bf16.msra.mxu0 %v438
      %525 = vmatprep.subr.bf16.mxu0 0
      %526 = vmatpush1.bf16.msra.mxu0 0
      %527 = vmatprep.subr.bf16.mxu0 0
      %528 = vmatpush1.bf16.msra.mxu0 0
      %529 = vmatprep.subr.bf16.mxu0 0
      %530 = vmatpush1.bf16.msra.mxu0 0
      %531 = vmatprep.subr.bf16.mxu0 0
      %532 = vmatpush1.bf16.msra.mxu0 0
      %533 = vmatprep.subr.bf16.mxu0 0
      %534 = vmatpush1.bf16.msra.mxu0 0
      %535 = vmatprep.subr.bf16.mxu0 0
      %536 = vmatpush1.bf16.msra.mxu0 0
      %537 = vmatprep.subr.bf16.mxu0 0
      %538 = vmatpush1.bf16.msra.mxu0 0
      %539 = vmatprep.subr.bf16.mxu0 0
      %540 = vmatpush1.bf16.msra.mxu0 0
      %541 = vmatprep.subr.bf16.mxu0 0
      %542 = vmatpush1.bf16.msra.mxu0 0
      %543 = vmatprep.subr.bf16.mxu0 0
      %544 = vmatpush1.bf16.msra.mxu0 0
      %545 = vmatprep.subr.bf16.mxu0 0
      %546 = vmatpush1.bf16.msra.mxu0 0
      %547 = vmatprep.subr.bf16.mxu0 0
      %548 = vmatpush1.bf16.msra.mxu0 0
      %549 = vmatprep.subr.bf16.mxu0 0
      %550 = vmatpush1.bf16.msra.mxu0 0
      %551 = vmatprep.subr.bf16.mxu0 0
      %552 = vmatpush1.bf16.msra.mxu0 0
      %553 = vmatprep.mubr.bf16.mxu0 0
      %554 = vmatmul.mubr.bf16.gmra.mrb[0].mxu0 %v510
      %v555 = vpop.f32.mrb[0].mxu0
      %v556 = vadd.f32 %v451, %v555
      %v557 = vpop.f32.mrb[0].mxu0
      %v558 = vadd.f32 %v451, %v557
      %v559 = vpop.f32.mrb[0].mxu0
      %v560 = vadd.f32 %v456, %v559
      %v561 = vpop.f32.mrb[0].mxu0
      %v562 = vadd.f32 %v456, %v561
      %563 = vmatprep.mubr.bf16.mxu0 0
      %564 = vmatmul.mubr.bf16.gmra.mrb[0].mxu0 %v513
      %v565 = vpop.f32.mrb[0].mxu0
      %v566 = vadd.f32 %v461, %v565
      %v567 = vpop.f32.mrb[0].mxu0
      %v568 = vadd.f32 %v461, %v567
      %v569 = vpop.f32.mrb[0].mxu0
      %v570 = vadd.f32 %v466, %v569
      %v571 = vpop.f32.mrb[0].mxu0
      %v572 = vadd.f32 %v466, %v571
      %573 = vmatprep.mubr.bf16.mxu0 0
      %574 = vmatmul.mubr.bf16.gmra.mrb[0].mxu0 %v516
      %v575 = vpop.f32.mrb[0].mxu0
      %v576 = vadd.f32 %v471, %v575
      %v577 = vpop.f32.mrb[0].mxu0
      %v578 = vadd.f32 %v471, %v577
      %v579 = vpop.f32.mrb[0].mxu0
      %v580 = vadd.f32 %v476, %v579
      %v581 = vpop.f32.mrb[0].mxu0
      %v582 = vadd.f32 %v476, %v581
      %583 = vmatprep.mubr.bf16.mxu0 0
      %584 = vmatmul.mubr.bf16.gmra.mrb[0].mxu0 %v519
      %v585 = vpop.f32.mrb[0].mxu0
      %v586 = vadd.f32 %v481, %v585
      %v587 = vpop.f32.mrb[0].mxu0
      %v588 = vadd.f32 %v481, %v587
      %v589 = vpop.f32.mrb[0].mxu0
      %v590 = vadd.f32 %v486, %v589
      %v591 = vpop.f32.mrb[0].mxu0
      %v592 = vadd.f32 %v486, %v591
      %593 = vdwg.mxu0
      %v594 = vmax.f32 %v556, 0.0
      %v595 = vmax.f32 %v558, 0.0
      %v596 = vmax.f32 %v560, 0.0
      %v597 = vmax.f32 %v562, 0.0
      %v598 = vmax.f32 %v566, 0.0
      %v599 = vmax.f32 %v568, 0.0
      %v600 = vmax.f32 %v570, 0.0
      %v601 = vmax.f32 %v572, 0.0
      %v602 = vmax.f32 %v576, 0.0
      %v603 = vmax.f32 %v578, 0.0
      %v604 = vmax.f32 %v580, 0.0
      %v605 = vmax.f32 %v582, 0.0
      %v606 = vmax.f32 %v586, 0.0
      %v607 = vmax.f32 %v588, 0.0
      %v608 = vmax.f32 %v590, 0.0
      %v609 = vmax.f32 %v592, 0.0
      %v610 = vld [vmem:[%s4] sm:$0xf]
      %v611 = vld [vmem:[%s4 + $0x4] sm:$0xf]
      %v612 = vld [vmem:[%s4 + $0x8] sm:$0xf]
      %v613 = vld [vmem:[%s4 + $0xc] sm:$0xf]
      %v614 = vpack.c.bf16 %v596, %v594
      %v615 = vpack.c.bf16 %v597, %v595
      %v616 = vpack.c.bf16 %v600, %v598
      %v617 = vpack.c.bf16 %v601, %v599
      %v618 = vpack.c.bf16 %v604, %v602
      %v619 = vpack.c.bf16 %v605, %v603
      %v620 = vpack.c.bf16 %v608, %v606
      %v621 = vpack.c.bf16 %v609, %v607
      %v622 = vld [vmem:[%s5] sm:$0xff]
      %v623 = vld [vmem:[%s5 + $0x8] sm:$0xff]
      %v624 = vld [vmem:[%s5 + $0x10] sm:$0xff]
      %v625 = vld [vmem:[%s5 + $0x18] sm:$0xff]
      %627 = vset.pattern.permute.xlu0 0
      %628 = vperm.xlu0 %627, %v622
      %v629 = vpop.permute.xlu0 %628
      %632 = vset.pattern.permute.xlu0 0
      %633 = vperm.xlu0 %632, %v623
      %v634 = vpop.permute.xlu0 %633
      %637 = vset.pattern.permute.xlu0 0
      %638 = vperm.xlu0 %637, %v624
      %v639 = vpop.permute.xlu0 %638
      %642 = vset.pattern.permute.xlu0 0
      %643 = vperm.xlu0 %642, %v625
      %v644 = vpop.permute.xlu0 %643
      %v650 = vunpack.c.l.b16 %v610
      %v651 = vunpack.c.l.b16 %v611
      %v652 = vunpack.c.l.b16 %v612
      %v653 = vunpack.c.l.b16 %v613
      %v654 = vpack.c.b16 %v651, %v650
      %v655 = vpack.c.b16 %v653, %v652
      %vm656 = vcmask 523264
      %v658 = vsel %vm656, %v654, 0
      %v661 = vsel %vm656, %v655, 0
      %663 = vmatprep.subr.bf16.mxu0 %v615
      %664 = vmatpush1.bf16.msra.mxu0 %v614
      %665 = vmatprep.subr.bf16.mxu0 %v617
      %666 = vmatpush1.bf16.msra.mxu0 %v616
      %667 = vmatprep.subr.bf16.mxu0 %v619
      %668 = vmatpush1.bf16.msra.mxu0 %v618
      %669 = vmatprep.subr.bf16.mxu0 %v621
      %670 = vmatpush1.bf16.msra.mxu0 %v620
      %671 = vmatprep.subr.bf16.mxu0 0
      %672 = vmatpush1.bf16.msra.mxu0 0
      %673 = vmatprep.subr.bf16.mxu0 0
      %674 = vmatpush1.bf16.msra.mxu0 0
      %675 = vmatprep.subr.bf16.mxu0 0
      %676 = vmatpush1.bf16.msra.mxu0 0
      %677 = vmatprep.subr.bf16.mxu0 0
      %678 = vmatpush1.bf16.msra.mxu0 0
      %679 = vmatprep.subr.bf16.mxu0 0
      %680 = vmatpush1.bf16.msra.mxu0 0
      %681 = vmatprep.subr.bf16.mxu0 0
      %682 = vmatpush1.bf16.msra.mxu0 0
      %683 = vmatprep.subr.bf16.mxu0 0
      %684 = vmatpush1.bf16.msra.mxu0 0
      %685 = vmatprep.subr.bf16.mxu0 0
      %686 = vmatpush1.bf16.msra.mxu0 0
      %687 = vmatprep.subr.bf16.mxu0 0
      %688 = vmatpush1.bf16.msra.mxu0 0
      %689 = vmatprep.subr.bf16.mxu0 0
      %690 = vmatpush1.bf16.msra.mxu0 0
      %691 = vmatprep.subr.bf16.mxu0 0
      %692 = vmatpush1.bf16.msra.mxu0 0
      %693 = vmatprep.subr.bf16.mxu0 0
      %694 = vmatpush1.bf16.msra.mxu0 0
      %695 = vmatprep.mubr.bf16.mxu0 0
      %696 = vmatmul.mubr.bf16.gmra.mrb[0].mxu0 %v658
      %v697 = vpop.f32.mrb[0].mxu0
      %v698 = vadd.f32 %v629, %v697
      %v699 = vpop.f32.mrb[0].mxu0
      %v700 = vadd.f32 %v629, %v699
      %v701 = vpop.f32.mrb[0].mxu0
      %v702 = vadd.f32 %v634, %v701
      %v703 = vpop.f32.mrb[0].mxu0
      %v704 = vadd.f32 %v634, %v703
      %705 = vmatprep.mubr.bf16.mxu0 0
      %706 = vmatmul.mubr.bf16.gmra.mrb[0].mxu0 %v661
      %v707 = vpop.f32.mrb[0].mxu0
      %v708 = vadd.f32 %v639, %v707
      %v709 = vpop.f32.mrb[0].mxu0
      %v710 = vadd.f32 %v639, %v709
      %v711 = vpop.f32.mrb[0].mxu0
      %v712 = vadd.f32 %v644, %v711
      %v713 = vpop.f32.mrb[0].mxu0
      %v714 = vadd.f32 %v644, %v713
      %715 = vdwg.mxu0
      %v716 = vld [vmem:[%s408] sm:$0xff]
      %v717 = vld [vmem:[%s408 + $0x8] sm:$0xff]
      %v718 = vld [vmem:[%s408 + $0x10] sm:$0xff]
      %v719 = vld [vmem:[%s408 + $0x18] sm:$0xff]
      %721 = vset.pattern.permute.xlu0 0
      %722 = vperm.xlu0 %721, %v716
      %v723 = vpop.permute.xlu0 %722
      %726 = vset.pattern.permute.xlu0 0
      %727 = vperm.xlu0 %726, %v717
      %v728 = vpop.permute.xlu0 %727
      %731 = vset.pattern.permute.xlu0 0
      %732 = vperm.xlu0 %731, %v718
      %v733 = vpop.permute.xlu0 %732
      %736 = vset.pattern.permute.xlu0 0
      %737 = vperm.xlu0 %736, %v719
      %v738 = vpop.permute.xlu0 %737
      %v740 = vmul.f32 %v698, %v723
      %v741 = vmul.f32 %v700, %v723
      %v742 = vmul.f32 %v702, %v728
      %v743 = vmul.f32 %v704, %v728
      %v744 = vmul.f32 %v708, %v733
      %v745 = vmul.f32 %v710, %v733
      %v746 = vmul.f32 %v712, %v738
      %v747 = vmul.f32 %v714, %v738
      %v748 = vld [vmem:[%s6] sm:$0xff]
      %v749 = vld [vmem:[%s6 + $0x8] sm:$0xff]
      %v750 = vld [vmem:[%s6 + $0x10] sm:$0xff]
      %v751 = vld [vmem:[%s6 + $0x18] sm:$0xff]
      %v752 = vld [vmem:[%s6 + $0x20] sm:$0xff]
      %v753 = vld [vmem:[%s6 + $0x28] sm:$0xff]
      %v754 = vld [vmem:[%s6 + $0x30] sm:$0xff]
      %v755 = vld [vmem:[%s6 + $0x38] sm:$0xff]
      %v756 = vld [vmem:[%s6 + $0x40] sm:$0xff]
      %v757 = vld [vmem:[%s6 + $0x48] sm:$0xff]
      %v758 = vld [vmem:[%s6 + $0x50] sm:$0xff]
      %v759 = vld [vmem:[%s6 + $0x58] sm:$0xff]
      %v760 = vld [vmem:[%s6 + $0x60] sm:$0xff]
      %v761 = vld [vmem:[%s6 + $0x68] sm:$0xff]
      %v762 = vld [vmem:[%s6 + $0x70] sm:$0xff]
      %v763 = vld [vmem:[%s6 + $0x78] sm:$0xff]
      %v764 = vld [vmem:[%s7] sm:$0xff]
      %v765 = vld [vmem:[%s7 + $0x8] sm:$0xff]
      %v766 = vld [vmem:[%s7 + $0x10] sm:$0xff]
      %v767 = vld [vmem:[%s7 + $0x18] sm:$0xff]
      %v768 = vld [vmem:[%s7 + $0x20] sm:$0xff]
      %v769 = vld [vmem:[%s7 + $0x28] sm:$0xff]
      %v770 = vld [vmem:[%s7 + $0x30] sm:$0xff]
      %v771 = vld [vmem:[%s7 + $0x38] sm:$0xff]
      %v772 = vld [vmem:[%s7 + $0x40] sm:$0xff]
      %v773 = vld [vmem:[%s7 + $0x48] sm:$0xff]
      %v774 = vld [vmem:[%s7 + $0x50] sm:$0xff]
      %v775 = vld [vmem:[%s7 + $0x58] sm:$0xff]
      %v776 = vld [vmem:[%s7 + $0x60] sm:$0xff]
      %v777 = vld [vmem:[%s7 + $0x68] sm:$0xff]
      %v778 = vld [vmem:[%s7 + $0x70] sm:$0xff]
      %v779 = vld [vmem:[%s7 + $0x78] sm:$0xff]
      %781 = vset.pattern.permute.xlu0 0
      %782 = vperm.xlu0 %781, %v764
      %v783 = vpop.permute.xlu0 %782
      %786 = vset.pattern.permute.xlu0 0
      %787 = vperm.xlu0 %786, %v765
      %v788 = vpop.permute.xlu0 %787
      %791 = vset.pattern.permute.xlu0 0
      %792 = vperm.xlu0 %791, %v766
      %v793 = vpop.permute.xlu0 %792
      %796 = vset.pattern.permute.xlu0 0
      %797 = vperm.xlu0 %796, %v767
      %v798 = vpop.permute.xlu0 %797
      %801 = vset.pattern.permute.xlu0 0
      %802 = vperm.xlu0 %801, %v768
      %v803 = vpop.permute.xlu0 %802
      %806 = vset.pattern.permute.xlu0 0
      %807 = vperm.xlu0 %806, %v769
      %v808 = vpop.permute.xlu0 %807
      %811 = vset.pattern.permute.xlu0 0
      %812 = vperm.xlu0 %811, %v770
      %v813 = vpop.permute.xlu0 %812
      %816 = vset.pattern.permute.xlu0 0
      %817 = vperm.xlu0 %816, %v771
      %v818 = vpop.permute.xlu0 %817
      %821 = vset.pattern.permute.xlu0 0
      %822 = vperm.xlu0 %821, %v772
      %v823 = vpop.permute.xlu0 %822
      %826 = vset.pattern.permute.xlu0 0
      %827 = vperm.xlu0 %826, %v773
      %v828 = vpop.permute.xlu0 %827
      %831 = vset.pattern.permute.xlu0 0
      %832 = vperm.xlu0 %831, %v774
      %v833 = vpop.permute.xlu0 %832
      %836 = vset.pattern.permute.xlu0 0
      %837 = vperm.xlu0 %836, %v775
      %v838 = vpop.permute.xlu0 %837
      %841 = vset.pattern.permute.xlu0 0
      %842 = vperm.xlu0 %841, %v776
      %v843 = vpop.permute.xlu0 %842
      %846 = vset.pattern.permute.xlu0 0
      %847 = vperm.xlu0 %846, %v777
      %v848 = vpop.permute.xlu0 %847
      %851 = vset.pattern.permute.xlu0 0
      %852 = vperm.xlu0 %851, %v778
      %v853 = vpop.permute.xlu0 %852
      %856 = vset.pattern.permute.xlu0 0
      %857 = vperm.xlu0 %856, %v779
      %v858 = vpop.permute.xlu0 %857
      %v861 = vsel %vm508, %v748, 0
      %v864 = vsel %vm508, %v749, 0
      %v867 = vsel %vm508, %v750, 0
      %v870 = vsel %vm508, %v751, 0
      %v873 = vsel %vm508, %v752, 0
      %v876 = vsel %vm508, %v753, 0
      %v879 = vsel %vm508, %v754, 0
      %v882 = vsel %vm508, %v755, 0
      %v885 = vsel %vm508, %v756, 0
      %v888 = vsel %vm508, %v757, 0
      %v891 = vsel %vm508, %v758, 0
      %v894 = vsel %vm508, %v759, 0
      %v897 = vsel %vm508, %v760, 0
      %v900 = vsel %vm508, %v761, 0
      %v903 = vsel %vm508, %v762, 0
      %v906 = vsel %vm508, %v763, 0
      %908 = vmatprep.subr.mxu0 %v741
      %909 = vmatpush1.msra.mxu0 %v740
      %910 = vmatprep.subr.mxu0 %v743
      %911 = vmatpush1.msra.mxu0 %v742
      %912 = vmatprep.subr.mxu0 %v745
      %913 = vmatpush1.msra.mxu0 %v744
      %914 = vmatprep.subr.mxu0 %v747
      %915 = vmatpush1.msra.mxu0 %v746
      %916 = vmatprep.subr.mxu0 0.0
      %917 = vmatpush1.msra.mxu0 0.0
      %918 = vmatprep.subr.mxu0 0.0
      %919 = vmatpush1.msra.mxu0 0.0
      %920 = vmatprep.subr.mxu0 0.0
      %921 = vmatpush1.msra.mxu0 0.0
      %922 = vmatprep.subr.mxu0 0.0
      %923 = vmatpush1.msra.mxu0 0.0
      %924 = vmatprep.subr.mxu0 0.0
      %925 = vmatpush1.msra.mxu0 0.0
      %926 = vmatprep.subr.mxu0 0.0
      %927 = vmatpush1.msra.mxu0 0.0
      %928 = vmatprep.subr.mxu0 0.0
      %929 = vmatpush1.msra.mxu0 0.0
      %930 = vmatprep.subr.mxu0 0.0
      %931 = vmatpush1.msra.mxu0 0.0
      %932 = vmatprep.subr.mxu0 0.0
      %933 = vmatpush1.msra.mxu0 0.0
      %934 = vmatprep.subr.mxu0 0.0
      %935 = vmatpush1.msra.mxu0 0.0
      %936 = vmatprep.subr.mxu0 0.0
      %937 = vmatpush1.msra.mxu0 0.0
      %938 = vmatprep.subr.mxu0 0.0
      %939 = vmatpush1.msra.mxu0 0.0
      %940 = vmatprep.subr.mxu0 0.0
      %941 = vmatpush1.msra.mxu0 0.0
      %942 = vmatprep.subr.mxu0 0.0
      %943 = vmatpush1.msra.mxu0 0.0
      %944 = vmatprep.subr.mxu0 0.0
      %945 = vmatpush1.msra.mxu0 0.0
      %946 = vmatprep.subr.mxu0 0.0
      %947 = vmatpush1.msra.mxu0 0.0
      %948 = vmatprep.subr.mxu0 0.0
      %949 = vmatpush1.msra.mxu0 0.0
      %950 = vmatprep.subr.mxu0 0.0
      %951 = vmatpush1.msra.mxu0 0.0
      %952 = vmatprep.subr.mxu0 0.0
      %953 = vmatpush1.msra.mxu0 0.0
      %954 = vmatprep.subr.mxu0 0.0
      %955 = vmatpush1.msra.mxu0 0.0
      %956 = vmatprep.subr.mxu0 0.0
      %957 = vmatpush1.msra.mxu0 0.0
      %958 = vmatprep.subr.mxu0 0.0
      %959 = vmatpush1.msra.mxu0 0.0
      %960 = vmatprep.subr.mxu0 0.0
      %961 = vmatpush1.msra.mxu0 0.0
      %962 = vmatprep.subr.mxu0 0.0
      %963 = vmatpush1.msra.mxu0 0.0
      %964 = vmatprep.subr.mxu0 0.0
      %965 = vmatpush1.msra.mxu0 0.0
      %966 = vmatprep.subr.mxu0 0.0
      %967 = vmatpush1.msra.mxu0 0.0
      %968 = vmatprep.subr.mxu0 0.0
      %969 = vmatpush1.msra.mxu0 0.0
      %970 = vmatprep.subr.mxu0 0.0
      %971 = vmatpush1.msra.mxu0 0.0
      %972 = vmatprep.mubr.f32.mxu0 0.0
      %973 = vmatmul.mubr.f32.gmra.mrb[0].mxu0 %v861
      %v974 = vpop.f32.mrb[0].mxu0
      %v975 = vadd.f32 %v783, %v974
      %v976 = vpop.f32.mrb[0].mxu0
      %v977 = vadd.f32 %v783, %v976
      %978 = vmatprep.mubr.f32.mxu0 0.0
      %979 = vmatmul.mubr.f32.gmra.mrb[0].mxu0 %v864
      %v980 = vpop.f32.mrb[0].mxu0
      %v981 = vadd.f32 %v788, %v980
      %v982 = vpop.f32.mrb[0].mxu0
      %v983 = vadd.f32 %v788, %v982
      %984 = vmatprep.mubr.f32.mxu0 0.0
      %985 = vmatmul.mubr.f32.gmra.mrb[0].mxu0 %v867
      %v986 = vpop.f32.mrb[0].mxu0
      %v987 = vadd.f32 %v793, %v986
      %v988 = vpop.f32.mrb[0].mxu0
      %v989 = vadd.f32 %v793, %v988
      %990 = vmatprep.mubr.f32.mxu0 0.0
      %991 = vmatmul.mubr.f32.gmra.mrb[0].mxu0 %v870
      %v992 = vpop.f32.mrb[0].mxu0
      %v993 = vadd.f32 %v798, %v992
      %v994 = vpop.f32.mrb[0].mxu0
      %v995 = vadd.f32 %v798, %v994
      %996 = vmatprep.mubr.f32.mxu0 0.0
      %997 = vmatmul.mubr.f32.gmra.mrb[0].mxu0 %v873
      %v998 = vpop.f32.mrb[0].mxu0
      %v999 = vadd.f32 %v803, %v998
      %v1000 = vpop.f32.mrb[0].mxu0
      %v1001 = vadd.f32 %v803, %v1000
      %1002 = vmatprep.mubr.f32.mxu0 0.0
      %1003 = vmatmul.mubr.f32.gmra.mrb[0].mxu0 %v876
      %v1004 = vpop.f32.mrb[0].mxu0
      %v1005 = vadd.f32 %v808, %v1004
      %v1006 = vpop.f32.mrb[0].mxu0
      %v1007 = vadd.f32 %v808, %v1006
      %1008 = vmatprep.mubr.f32.mxu0 0.0
      %1009 = vmatmul.mubr.f32.gmra.mrb[0].mxu0 %v879
      %v1010 = vpop.f32.mrb[0].mxu0
      %v1011 = vadd.f32 %v813, %v1010
      %v1012 = vpop.f32.mrb[0].mxu0
      %v1013 = vadd.f32 %v813, %v1012
      %1014 = vmatprep.mubr.f32.mxu0 0.0
      %1015 = vmatmul.mubr.f32.gmra.mrb[0].mxu0 %v882
      %v1016 = vpop.f32.mrb[0].mxu0
      %v1017 = vadd.f32 %v818, %v1016
      %v1018 = vpop.f32.mrb[0].mxu0
      %v1019 = vadd.f32 %v818, %v1018
      %1020 = vmatprep.mubr.f32.mxu0 0.0
      %1021 = vmatmul.mubr.f32.gmra.mrb[0].mxu0 %v885
      %v1022 = vpop.f32.mrb[0].mxu0
      %v1023 = vadd.f32 %v823, %v1022
      %v1024 = vpop.f32.mrb[0].mxu0
      %v1025 = vadd.f32 %v823, %v1024
      %1026 = vmatprep.mubr.f32.mxu0 0.0
      %1027 = vmatmul.mubr.f32.gmra.mrb[0].mxu0 %v888
      %v1028 = vpop.f32.mrb[0].mxu0
      %v1029 = vadd.f32 %v828, %v1028
      %v1030 = vpop.f32.mrb[0].mxu0
      %v1031 = vadd.f32 %v828, %v1030
      %1032 = vmatprep.mubr.f32.mxu0 0.0
      %1033 = vmatmul.mubr.f32.gmra.mrb[0].mxu0 %v891
      %v1034 = vpop.f32.mrb[0].mxu0
      %v1035 = vadd.f32 %v833, %v1034
      %v1036 = vpop.f32.mrb[0].mxu0
      %v1037 = vadd.f32 %v833, %v1036
      %1038 = vmatprep.mubr.f32.mxu0 0.0
      %1039 = vmatmul.mubr.f32.gmra.mrb[0].mxu0 %v894
      %v1040 = vpop.f32.mrb[0].mxu0
      %v1041 = vadd.f32 %v838, %v1040
      %v1042 = vpop.f32.mrb[0].mxu0
      %v1043 = vadd.f32 %v838, %v1042
      %1044 = vmatprep.mubr.f32.mxu0 0.0
      %1045 = vmatmul.mubr.f32.gmra.mrb[0].mxu0 %v897
      %v1046 = vpop.f32.mrb[0].mxu0
      %v1047 = vadd.f32 %v843, %v1046
      %v1048 = vpop.f32.mrb[0].mxu0
      %v1049 = vadd.f32 %v843, %v1048
      %1050 = vmatprep.mubr.f32.mxu0 0.0
      %1051 = vmatmul.mubr.f32.gmra.mrb[0].mxu0 %v900
      %v1052 = vpop.f32.mrb[0].mxu0
      %v1053 = vadd.f32 %v848, %v1052
      %v1054 = vpop.f32.mrb[0].mxu0
      %v1055 = vadd.f32 %v848, %v1054
      %1056 = vmatprep.mubr.f32.mxu0 0.0
      %1057 = vmatmul.mubr.f32.gmra.mrb[0].mxu0 %v903
      %v1058 = vpop.f32.mrb[0].mxu0
      %v1059 = vadd.f32 %v853, %v1058
      %v1060 = vpop.f32.mrb[0].mxu0
      %v1061 = vadd.f32 %v853, %v1060
      %1062 = vmatprep.mubr.f32.mxu0 0.0
      %1063 = vmatmul.mubr.f32.gmra.mrb[0].mxu0 %v906
      %v1064 = vpop.f32.mrb[0].mxu0
      %v1065 = vadd.f32 %v858, %v1064
      %v1066 = vpop.f32.mrb[0].mxu0
      %v1067 = vadd.f32 %v858, %v1066
      %1068 = vdwg.mxu0
      %v1069 = vld [vmem:[%s8] sm:$0xf]
      %v1070 = vld [vmem:[%s9] sm:$0xf]
      %1072 = vset.pattern.permute.xlu0 0
      %1073 = vperm.xlu0 %1072, %v1070
      %v1074 = vpop.permute.xlu0 %1073
      %1076 = vmatprep.subr.mxu0 %v977
      %1077 = vmatpush1.msra.mxu0 %v975
      %1078 = vmatprep.subr.mxu0 %v983
      %1079 = vmatpush1.msra.mxu0 %v981
      %1080 = vmatprep.subr.mxu0 %v989
      %1081 = vmatpush1.msra.mxu0 %v987
      %1082 = vmatprep.subr.mxu0 %v995
      %1083 = vmatpush1.msra.mxu0 %v993
      %1084 = vmatprep.subr.mxu0 %v1001
      %1085 = vmatpush1.msra.mxu0 %v999
      %1086 = vmatprep.subr.mxu0 %v1007
      %1087 = vmatpush1.msra.mxu0 %v1005
      %1088 = vmatprep.subr.mxu0 %v1013
      %1089 = vmatpush1.msra.mxu0 %v1011
      %1090 = vmatprep.subr.mxu0 %v1019
      %1091 = vmatpush1.msra.mxu0 %v1017
      %1092 = vmatprep.subr.mxu0 %v1025
      %1093 = vmatpush1.msra.mxu0 %v1023
      %1094 = vmatprep.subr.mxu0 %v1031
      %1095 = vmatpush1.msra.mxu0 %v1029
      %1096 = vmatprep.subr.mxu0 %v1037
      %1097 = vmatpush1.msra.mxu0 %v1035
      %1098 = vmatprep.subr.mxu0 %v1043
      %1099 = vmatpush1.msra.mxu0 %v1041
      %1100 = vmatprep.subr.mxu0 %v1049
      %1101 = vmatpush1.msra.mxu0 %v1047
      %1102 = vmatprep.subr.mxu0 %v1055
      %1103 = vmatpush1.msra.mxu0 %v1053
      %1104 = vmatprep.subr.mxu0 %v1061
      %1105 = vmatpush1.msra.mxu0 %v1059
      %1106 = vmatprep.subr.mxu0 %v1067
      %1107 = vmatpush1.msra.mxu0 %v1065
      %1108 = vmatprep.subr.mxu0 0.0
      %1109 = vmatpush1.msra.mxu0 0.0
      %1110 = vmatprep.subr.mxu0 0.0
      %1111 = vmatpush1.msra.mxu0 0.0
      %1112 = vmatprep.subr.mxu0 0.0
      %1113 = vmatpush1.msra.mxu0 0.0
      %1114 = vmatprep.subr.mxu0 0.0
      %1115 = vmatpush1.msra.mxu0 0.0
      %1116 = vmatprep.subr.mxu0 0.0
      %1117 = vmatpush1.msra.mxu0 0.0
      %1118 = vmatprep.subr.mxu0 0.0
      %1119 = vmatpush1.msra.mxu0 0.0
      %1120 = vmatprep.subr.mxu0 0.0
      %1121 = vmatpush1.msra.mxu0 0.0
      %1122 = vmatprep.subr.mxu0 0.0
      %1123 = vmatpush1.msra.mxu0 0.0
      %1124 = vmatprep.subr.mxu0 0.0
      %1125 = vmatpush1.msra.mxu0 0.0
      %1126 = vmatprep.subr.mxu0 0.0
      %1127 = vmatpush1.msra.mxu0 0.0
      %1128 = vmatprep.subr.mxu0 0.0
      %1129 = vmatpush1.msra.mxu0 0.0
      %1130 = vmatprep.subr.mxu0 0.0
      %1131 = vmatpush1.msra.mxu0 0.0
      %1132 = vmatprep.subr.mxu0 0.0
      %1133 = vmatpush1.msra.mxu0 0.0
      %1134 = vmatprep.subr.mxu0 0.0
      %1135 = vmatpush1.msra.mxu0 0.0
      %1136 = vmatprep.subr.mxu0 0.0
      %1137 = vmatpush1.msra.mxu0 0.0
      %1138 = vmatprep.subr.mxu0 0.0
      %1139 = vmatpush1.msra.mxu0 0.0
      %1140 = vmatprep.mubr.f32.mxu0 0.0
      %1141 = vmatmul.mubr.f32.gmra.mrb[0].mxu0 %v1069
      %v1142 = vpop.f32.mrb[0].mxu0
      %v1143 = vadd.f32 %v1074, %v1142
      %v1144 = vpop.f32.mrb[0].mxu0
      %v1145 = vadd.f32 %v1074, %v1144
      %1146 = vdwg.mxu0
      %v1149 = vcombine.low %v1143, %v1145
      %1151 = vst [vmem:[%s417] sm:$0xff] %v1149
      %s1152 = smul.u32 2, %s26
      %p1153 = scmp.lt.s32.totalorder %s25, 1
      %s1154 = scalar_select %p1153, %s25, 1
      %p1155 = scmp.lt.s32.totalorder %s1152, 1
      %s1156 = scalar_select %p1155, %s1152, 1
      %s1157 = smul.addr %s1154, 2
      %s1158 = sadd.s32 %s1156, %s1157
      %s1159 = smul.addr %s1158, 4
      %s1160 = scalar_lea.vmem %s10, %s1159
      // Predicated region
      $region61: #{ffno_forward.11} parent=59 // pred_check
        %p1161 = pneg %p275
      $region62: #{ffno_forward.11} parent=59 // pred_check_branch
        %1163 = sbr.rel (%p1161) target = $region64
      $region63: #{ffno_forward.11} parent=59 // pred_region
        %s1164 = smul.u32 2, %s26
      $region64: #{ffno_forward.11} parent=59 // pred_fallthru
        _
    $region60: #{ffno_forward.11} parent=5 // pred_fallthru
      _
    %p1165 = scmp.le.s32.totalorder 2, %s16
    // Predicated region
    $region65: #{ffno_forward.11} parent=5 // pred_check
      %p1166 = pneg %p1165
    $region66: #{ffno_forward.11} parent=5 // pred_check_branch
      %1168 = sbr.rel (%p1166) target = $region68
    $region67: #{ffno_forward.11} parent=5 // pred_region
      %s1169 = ssub.s32 %s16, 2
      // Predicated region
      $region69: #{ffno_forward.11} parent=67 // pred_check
        %p1170 = pneg %p281
      $region70: #{ffno_forward.11} parent=67 // pred_check_branch
        %1172 = sbr.rel (%p1170) target = $region72
      $region71: #{ffno_forward.11} parent=67 // pred_region
        %s1173 = smul.u32 2, %s28
        %p1174 = scmp.lt.s32.totalorder %s27, 1
        %s1175 = scalar_select %p1174, %s27, 1
        %p1176 = scmp.lt.s32.totalorder %s1173, 1
        %s1177 = scalar_select %p1176, %s1173, 1
        %s1178 = smul.addr %s1175, 2
        %s1179 = sadd.s32 %s1177, %s1178
        %s1180 = smul.addr %s1179, 4
        %s1181 = scalar_lea.vmem %s10, %s1180
      $region72: #{ffno_forward.11} parent=67 // pred_fallthru
        _
    $region68: #{ffno_forward.11} parent=5 // pred_fallthru
      _
  $region6: #{ffno_forward.11} parent=0 // loop_footer
    %s20 = sadd.s32 1, %s16
  $region7: #{ffno_forward.11} parent=0 // loop_footer_branch
    %15 = sbr.rel target = $region3
  $region8: #{ffno_forward.11} parent=0 // loop_exit
    _

</llo_original>
